<compile_context>
chip_gen: v6e
topology: v6e:2x2x1
jax: 0.10.0
libtpu: 0.0.40
codegen_flags: <defaults>
</compile_context>

<pallas_src>
import functools

import jax
import jax.numpy as jnp
import numpy as np
from jax.experimental import pallas as pl
from jax.experimental.pallas import tpu as pltpu


def _critic_kernel(q_range, num_channels, x_ref, w1_ref, b1_ref, w2_ref,
                   b2_ref, w3_ref, b3_ref, out_ref):
    """One grid step = one batch tile [TB, D]; all channel weights resident."""
    # Attention mask is already folded into W1, so the raw input tile is the
    # only per-step stream; cast once to bf16 for the MXU.
    x = x_ref[...].astype(w1_ref.dtype)                    # [TB, D] bf16
    inv_q = 1.0 / q_range
    outs = []
    for c in range(num_channels):                          # Python-unrolled (R small)
        # Layer 1: [TB, D] @ [D, H], bf16 operands, f32 accumulation.
        h = jnp.dot(x, w1_ref[c], preferred_element_type=jnp.float32) + b1_ref[c]
        h = jnp.maximum(h, 0.0)
        # Layer 2: [TB, H] @ [H, H].
        h = jnp.dot(h.astype(w2_ref.dtype), w2_ref[c],
                    preferred_element_type=jnp.float32) + b2_ref[c]
        h = jnp.maximum(h, 0.0)
        # Output column (N=1): VPU multiply + lane reduction instead of an MXU
        # matmul — no weight push / MRF drain for a single column.
        v = jnp.sum(h * w3_ref[c], axis=-1, keepdims=True) + b3_ref[c]   # [TB, 1]
        outs.append(q_range * jnp.tanh(v * inv_q))          # Q_range-bounded output
    out_ref[...] = jnp.concatenate(outs, axis=-1)            # [TB, R], lane-major store


def prepare_params(params):
    """One-time param prep: bf16-cast the big static weights, reshape biases.

    W1 stays f32 here: the (trainable) attention mask is folded into it per
    call in the wrapper (cheap: R*D*H elements), then cast to bf16.
    W3 stays f32 and is reshaped to a [R, 1, H] lane-major row for the VPU path.
    """
    R, D, H = params["w1"].shape
    return {
        "attn_logit": params["attn_logit"],
        "w1": params["w1"],                                   # [R, D, H] f32
        "b1": params["b1"].reshape(R, 1, H),
        "w2": params["w2"].astype(jnp.bfloat16),              # [R, H, H] bf16 (cast once)
        "b2": params["b2"].reshape(R, 1, H),
        "w3": params["w3"].reshape(R, 1, H),                  # [R, H, 1] -> [R, 1, H] view
        "b3": params["b3"].reshape(R, 1, 1),
    }


def state_mask_critic_forward(obs, action, prepared, factor_list, q_range,
                              block_b=256):
    """Pallas-backed forward: returns values of shape [B, reward_channels]."""
    # ---- glue: concat, softmax + repeat_interleave, mask->W1 fold ----
    x = jnp.concatenate([obs, action], axis=-1)                        # [B, D]
    B, D = x.shape
    R, Dw, H = prepared["w1"].shape
    assert Dw == D
    assert int(np.sum(factor_list)) == D, "factor_list must sum to obs_dim+action_dim"

    attn = jax.nn.softmax(prepared["attn_logit"], axis=-1)              # [R, T]
    attn = jnp.repeat(attn, np.asarray(factor_list), axis=-1,
                      total_repeat_length=D)                            # [R, D]
    # (x * attn[r]) @ W1[r]  ==  x @ (attn[r][:, None] * W1[r]); fold in f32,
    # then cast to bf16 once.  Removes the attn DMA + per-channel VPU multiply.
    w1m = (attn[:, :, None] * prepared["w1"]).astype(jnp.bfloat16)      # [R, D, H]

    # ---- batch tiling: weights resident, grid over B ("parallel") ----
    tb = min(B, block_b)
    nb = pl.cdiv(B, tb)
    bp = nb * tb
    if bp != B:
        x = jnp.pad(x, ((0, bp - B), (0, 0)))

    out = pl.pallas_call(
        functools.partial(_critic_kernel, q_range, R),
        out_shape=jax.ShapeDtypeStruct((bp, R), jnp.float32),
        grid=(nb,),
        in_specs=[
            pl.BlockSpec((tb, D), lambda b: (b, 0)),           # x: tiled over batch
            pl.BlockSpec((R, D, H), lambda b: (0, 0, 0)),      # W1 (mask-folded, bf16), resident
            pl.BlockSpec((R, 1, H), lambda b: (0, 0, 0)),      # b1, resident
            pl.BlockSpec((R, H, H), lambda b: (0, 0, 0)),      # W2 (bf16), resident
            pl.BlockSpec((R, 1, H), lambda b: (0, 0, 0)),      # b2, resident
            pl.BlockSpec((R, 1, H), lambda b: (0, 0, 0)),      # w3 row (f32, VPU path)
            pl.BlockSpec((R, 1, 1), lambda b: (0, 0, 0)),      # b3
        ],
        out_specs=pl.BlockSpec((tb, R), lambda b: (b, 0)),     # [B, R] directly, no transpose
        compiler_params=pltpu.CompilerParams(
            # B-tiles are independent -> v7x's two TensorCores split them;
            # no-op on single-TC v5e/v6e.
            dimension_semantics=("parallel",),
            # Resident weights (~2.1 MiB) + double-buffered batch tiles stay
            # far below this on every chip (v7x scoped default is 32 MiB).
            vmem_limit_bytes=32 * 1024 * 1024,
        ),
    )(x, w1m, prepared["b1"], prepared["w2"], prepared["b2"],
      prepared["w3"], prepared["b3"])

    return out[:B] if bp != B else out                                   # [B, R]


def reference_forward(obs, action, params, factor_list, q_range):
    """Pure-JAX f32 reference of the same forward pass (for correctness check)."""
    x = jnp.concatenate([obs, action], axis=-1)
    attn = jax.nn.softmax(params["attn_logit"], axis=-1)
    attn = jnp.repeat(attn, np.asarray(factor_list), axis=-1,
                      total_repeat_length=x.shape[-1])
    feat = x[:, None, :] * attn[None, :, :]                              # [B, R, D]
    h = jnp.maximum(jnp.einsum("brd,rdh->brh", feat, params["w1"]) + params["b1"][None], 0.0)
    h = jnp.maximum(jnp.einsum("brh,rhk->brk", h, params["w2"]) + params["b2"][None], 0.0)
    v = jnp.einsum("brh,rho->bro", h, params["w3"]) + params["b3"][None]
    return (q_range * jnp.tanh(v / q_range))[..., 0]                     # [B, R]


if __name__ == "__main__":
    # Synthetic (deterministic) configuration consistent with __init__.
    obs_dim, action_dim = 16, 8          # obs includes the skill (12 + skill_dim 4)
    skill_channels = 2
    ext_r_dim = 1
    reward_channels = skill_channels + 1 + ext_r_dim   # use_sac + separate_sac_reward
    obs_partition = [6, 6]
    skill_partition = [2, 2]
    action_partition = [8]
    factor_list = obs_partition + skill_partition + action_partition    # sums to 24 = D
    num_tokens = len(factor_list)
    hidden = 512
    q_range = 100.0
    D = obs_dim + action_dim
    B = 2

    key = jax.random.PRNGKey(0)
    ks = jax.random.split(key, 8)
    params = {
        # weighted=True -> attn_logit ~ randn([reward_channels, num_tokens])
        "attn_logit": jax.random.normal(ks[0], (reward_channels, num_tokens), jnp.float32),
        "w1": jax.random.normal(ks[1], (reward_channels, D, hidden), jnp.float32) / np.sqrt(D),
        "b1": jnp.zeros((reward_channels, hidden), jnp.float32),
        "w2": jax.random.normal(ks[2], (reward_channels, hidden, hidden), jnp.float32) / np.sqrt(hidden),
        "b2": jnp.zeros((reward_channels, hidden), jnp.float32),
        "w3": jax.random.normal(ks[3], (reward_channels, hidden, 1), jnp.float32) / np.sqrt(hidden),
        "b3": jnp.zeros((reward_channels, 1), jnp.float32),
    }

    obs = jax.random.normal(ks[4], (B, obs_dim), jnp.float32)
    action = jax.random.normal(ks[5], (B, action_dim), jnp.float32)

    prepared = prepare_params(params)        # bf16 cast of W2 done ONCE here

    values = state_mask_critic_forward(obs, action, prepared, factor_list, q_range)
    values = jax.block_until_ready(values)

    ref = reference_forward(obs, action, params, factor_list, q_range)
    assert values.shape == (B, reward_channels)
    # bf16 weight streaming (f32 accumulation) vs f32 reference -> relaxed tolerance.
    np.testing.assert_allclose(np.asarray(values), np.asarray(ref), rtol=2e-2, atol=2e-2)
    print("KERNEL_OK")
</pallas_src>

<mosaic_0001>
module attributes {stable_mosaic.version = 11 : i64} {
  func.func @_critic_kernel(%arg0: i32, %arg1: memref<2x24xf32, #tpu.memory_space<vmem>>, %arg2: memref<4x24x512xbf16, #tpu.memory_space<vmem>>, %arg3: memref<4x1x512xf32, #tpu.memory_space<vmem>>, %arg4: memref<4x512x512xbf16, #tpu.memory_space<vmem>>, %arg5: memref<4x1x512xf32, #tpu.memory_space<vmem>>, %arg6: memref<4x1x512xf32, #tpu.memory_space<vmem>>, %arg7: memref<4x1x1xf32, #tpu.memory_space<vmem>>, %arg8: memref<2x4xf32, #tpu.memory_space<vmem>>) attributes {dimension_semantics = [#tpu.dimension_semantics<parallel>], iteration_bounds = array<i64: 1>, scalar_prefetch = 0 : i64, scratch_operands = 0 : i64, tpu.core_type = #tpu.core_type<tc>, window_params = [{transform_indices = @transform_0, window_bounds = array<i64: 2, 24>}, {pipeline_mode = #tpu.pipeline_mode<synchronous>, transform_indices = @transform_1, window_bounds = array<i64: 4, 24, 512>}, {pipeline_mode = #tpu.pipeline_mode<synchronous>, transform_indices = @transform_2, window_bounds = array<i64: 4, 1, 512>}, {pipeline_mode = #tpu.pipeline_mode<synchronous>, transform_indices = @transform_3, window_bounds = array<i64: 4, 512, 512>}, {pipeline_mode = #tpu.pipeline_mode<synchronous>, transform_indices = @transform_4, window_bounds = array<i64: 4, 1, 512>}, {pipeline_mode = #tpu.pipeline_mode<synchronous>, transform_indices = @transform_5, window_bounds = array<i64: 4, 1, 512>}, {pipeline_mode = #tpu.pipeline_mode<synchronous>, transform_indices = @transform_6, window_bounds = array<i64: 4, 1, 1>}, {transform_indices = @transform_7, window_bounds = array<i64: 2, 4>}]} {
    %c0 = arith.constant 0 : index
    %c0_0 = arith.constant 0 : index
    %0 = vector.load %arg1[%c0, %c0_0] : memref<2x24xf32, #tpu.memory_space<vmem>>, vector<2x24xf32>
    %1 = arith.truncf %0 : vector<2x24xf32> to vector<2x24xbf16>
    %c0_1 = arith.constant 0 : index
    %c0_2 = arith.constant 0 : index
    %c0_3 = arith.constant 0 : index
    %2 = vector.load %arg2[%c0_1, %c0_2, %c0_3] : memref<4x24x512xbf16, #tpu.memory_space<vmem>>, vector<1x24x512xbf16>
    %3 = vector.shape_cast %2 : vector<1x24x512xbf16> to vector<24x512xbf16>
    %cst = arith.constant dense<0.000000e+00> : vector<2x512xf32>
    %4 = tpu.matmul %1, %3, %cst {dimension_numbers = #tpu.dot_dimension_numbers<[1], [0], [0], [1], [0, 0, 1, 1], [], []>} : vector<2x24xbf16>, vector<24x512xbf16>, vector<2x512xf32> -> vector<2x512xf32>
    %c0_4 = arith.constant 0 : index
    %c0_5 = arith.constant 0 : index
    %c0_6 = arith.constant 0 : index
    %5 = vector.load %arg3[%c0_4, %c0_5, %c0_6] : memref<4x1x512xf32, #tpu.memory_space<vmem>>, vector<1x1x512xf32>
    %6 = vector.shape_cast %5 : vector<1x1x512xf32> to vector<1x512xf32>
    %7 = vector.broadcast %6 : vector<1x512xf32> to vector<2x512xf32>
    %8 = arith.addf %4, %7 : vector<2x512xf32>
    %cst_7 = arith.constant 0.000000e+00 : f32
    %9 = vector.broadcast %cst_7 : f32 to vector<2x512xf32>
    %10 = arith.maximumf %8, %9 : vector<2x512xf32>
    %11 = arith.truncf %10 : vector<2x512xf32> to vector<2x512xbf16>
    %c0_8 = arith.constant 0 : index
    %c0_9 = arith.constant 0 : index
    %c0_10 = arith.constant 0 : index
    %12 = vector.load %arg4[%c0_8, %c0_9, %c0_10] : memref<4x512x512xbf16, #tpu.memory_space<vmem>>, vector<1x512x512xbf16>
    %13 = vector.shape_cast %12 : vector<1x512x512xbf16> to vector<512x512xbf16>
    %cst_11 = arith.constant dense<0.000000e+00> : vector<2x512xf32>
    %14 = tpu.matmul %11, %13, %cst_11 {dimension_numbers = #tpu.dot_dimension_numbers<[1], [0], [0], [1], [0, 0, 1, 1], [], []>} : vector<2x512xbf16>, vector<512x512xbf16>, vector<2x512xf32> -> vector<2x512xf32>
    %c0_12 = arith.constant 0 : index
    %c0_13 = arith.constant 0 : index
    %c0_14 = arith.constant 0 : index
    %15 = vector.load %arg5[%c0_12, %c0_13, %c0_14] : memref<4x1x512xf32, #tpu.memory_space<vmem>>, vector<1x1x512xf32>
    %16 = vector.shape_cast %15 : vector<1x1x512xf32> to vector<1x512xf32>
    %17 = vector.broadcast %16 : vector<1x512xf32> to vector<2x512xf32>
    %18 = arith.addf %14, %17 : vector<2x512xf32>
    %cst_15 = arith.constant 0.000000e+00 : f32
    %19 = vector.broadcast %cst_15 : f32 to vector<2x512xf32>
    %20 = arith.maximumf %18, %19 : vector<2x512xf32>
    %c0_16 = arith.constant 0 : index
    %c0_17 = arith.constant 0 : index
    %c0_18 = arith.constant 0 : index
    %21 = vector.load %arg6[%c0_16, %c0_17, %c0_18] : memref<4x1x512xf32, #tpu.memory_space<vmem>>, vector<1x1x512xf32>
    %22 = vector.shape_cast %21 : vector<1x1x512xf32> to vector<1x512xf32>
    %23 = vector.broadcast %22 : vector<1x512xf32> to vector<2x512xf32>
    %24 = arith.mulf %20, %23 : vector<2x512xf32>
    %cst_19 = arith.constant dense<0.000000e+00> : vector<2xf32>
    %25 = vector.multi_reduction <add>, %24, %cst_19 [1] : vector<2x512xf32> to vector<2xf32>
    %26 = vector.shape_cast %25 : vector<2xf32> to vector<2x1xf32>
    %c0_20 = arith.constant 0 : index
    %c0_21 = arith.constant 0 : index
    %c0_22 = arith.constant 0 : index
    %27 = vector.load %arg7[%c0_20, %c0_21, %c0_22] : memref<4x1x1xf32, #tpu.memory_space<vmem>>, vector<1x1x1xf32>
    %28 = vector.shape_cast %27 : vector<1x1x1xf32> to vector<1x1xf32>
    %29 = vector.broadcast %28 : vector<1x1xf32> to vector<2x1xf32>
    %30 = arith.addf %26, %29 : vector<2x1xf32>
    %cst_23 = arith.constant 0.00999999977 : f32
    %31 = vector.broadcast %cst_23 : f32 to vector<2x1xf32>
    %32 = arith.mulf %30, %31 : vector<2x1xf32>
    %33 = math.tanh %32 : vector<2x1xf32>
    %cst_24 = arith.constant 1.000000e+02 : f32
    %34 = vector.broadcast %cst_24 : f32 to vector<2x1xf32>
    %35 = arith.mulf %34, %33 : vector<2x1xf32>
    %c1 = arith.constant 1 : index
    %c0_25 = arith.constant 0 : index
    %c0_26 = arith.constant 0 : index
    %36 = vector.load %arg2[%c1, %c0_25, %c0_26] : memref<4x24x512xbf16, #tpu.memory_space<vmem>>, vector<1x24x512xbf16>
    %37 = vector.shape_cast %36 : vector<1x24x512xbf16> to vector<24x512xbf16>
    %cst_27 = arith.constant dense<0.000000e+00> : vector<2x512xf32>
    %38 = tpu.matmul %1, %37, %cst_27 {dimension_numbers = #tpu.dot_dimension_numbers<[1], [0], [0], [1], [0, 0, 1, 1], [], []>} : vector<2x24xbf16>, vector<24x512xbf16>, vector<2x512xf32> -> vector<2x512xf32>
    %c1_28 = arith.constant 1 : index
    %c0_29 = arith.constant 0 : index
    %c0_30 = arith.constant 0 : index
    %39 = vector.load %arg3[%c1_28, %c0_29, %c0_30] : memref<4x1x512xf32, #tpu.memory_space<vmem>>, vector<1x1x512xf32>
    %40 = vector.shape_cast %39 : vector<1x1x512xf32> to vector<1x512xf32>
    %41 = vector.broadcast %40 : vector<1x512xf32> to vector<2x512xf32>
    %42 = arith.addf %38, %41 : vector<2x512xf32>
    %cst_31 = arith.constant 0.000000e+00 : f32
    %43 = vector.broadcast %cst_31 : f32 to vector<2x512xf32>
    %44 = arith.maximumf %42, %43 : vector<2x512xf32>
    %45 = arith.truncf %44 : vector<2x512xf32> to vector<2x512xbf16>
    %c1_32 = arith.constant 1 : index
    %c0_33 = arith.constant 0 : index
    %c0_34 = arith.constant 0 : index
    %46 = vector.load %arg4[%c1_32, %c0_33, %c0_34] : memref<4x512x512xbf16, #tpu.memory_space<vmem>>, vector<1x512x512xbf16>
    %47 = vector.shape_cast %46 : vector<1x512x512xbf16> to vector<512x512xbf16>
    %cst_35 = arith.constant dense<0.000000e+00> : vector<2x512xf32>
    %48 = tpu.matmul %45, %47, %cst_35 {dimension_numbers = #tpu.dot_dimension_numbers<[1], [0], [0], [1], [0, 0, 1, 1], [], []>} : vector<2x512xbf16>, vector<512x512xbf16>, vector<2x512xf32> -> vector<2x512xf32>
    %c1_36 = arith.constant 1 : index
    %c0_37 = arith.constant 0 : index
    %c0_38 = arith.constant 0 : index
    %49 = vector.load %arg5[%c1_36, %c0_37, %c0_38] : memref<4x1x512xf32, #tpu.memory_space<vmem>>, vector<1x1x512xf32>
    %50 = vector.shape_cast %49 : vector<1x1x512xf32> to vector<1x512xf32>
    %51 = vector.broadcast %50 : vector<1x512xf32> to vector<2x512xf32>
    %52 = arith.addf %48, %51 : vector<2x512xf32>
    %cst_39 = arith.constant 0.000000e+00 : f32
    %53 = vector.broadcast %cst_39 : f32 to vector<2x512xf32>
    %54 = arith.maximumf %52, %53 : vector<2x512xf32>
    %c1_40 = arith.constant 1 : index
    %c0_41 = arith.constant 0 : index
    %c0_42 = arith.constant 0 : index
    %55 = vector.load %arg6[%c1_40, %c0_41, %c0_42] : memref<4x1x512xf32, #tpu.memory_space<vmem>>, vector<1x1x512xf32>
    %56 = vector.shape_cast %55 : vector<1x1x512xf32> to vector<1x512xf32>
    %57 = vector.broadcast %56 : vector<1x512xf32> to vector<2x512xf32>
    %58 = arith.mulf %54, %57 : vector<2x512xf32>
    %cst_43 = arith.constant dense<0.000000e+00> : vector<2xf32>
    %59 = vector.multi_reduction <add>, %58, %cst_43 [1] : vector<2x512xf32> to vector<2xf32>
    %60 = vector.shape_cast %59 : vector<2xf32> to vector<2x1xf32>
    %c1_44 = arith.constant 1 : index
    %c0_45 = arith.constant 0 : index
    %c0_46 = arith.constant 0 : index
    %61 = vector.load %arg7[%c1_44, %c0_45, %c0_46] : memref<4x1x1xf32, #tpu.memory_space<vmem>>, vector<1x1x1xf32>
    %62 = vector.shape_cast %61 : vector<1x1x1xf32> to vector<1x1xf32>
    %63 = vector.broadcast %62 : vector<1x1xf32> to vector<2x1xf32>
    %64 = arith.addf %60, %63 : vector<2x1xf32>
    %cst_47 = arith.constant 0.00999999977 : f32
    %65 = vector.broadcast %cst_47 : f32 to vector<2x1xf32>
    %66 = arith.mulf %64, %65 : vector<2x1xf32>
    %67 = math.tanh %66 : vector<2x1xf32>
    %cst_48 = arith.constant 1.000000e+02 : f32
    %68 = vector.broadcast %cst_48 : f32 to vector<2x1xf32>
    %69 = arith.mulf %68, %67 : vector<2x1xf32>
    %c2 = arith.constant 2 : index
    %c0_49 = arith.constant 0 : index
    %c0_50 = arith.constant 0 : index
    %70 = vector.load %arg2[%c2, %c0_49, %c0_50] : memref<4x24x512xbf16, #tpu.memory_space<vmem>>, vector<1x24x512xbf16>
    %71 = vector.shape_cast %70 : vector<1x24x512xbf16> to vector<24x512xbf16>
    %cst_51 = arith.constant dense<0.000000e+00> : vector<2x512xf32>
    %72 = tpu.matmul %1, %71, %cst_51 {dimension_numbers = #tpu.dot_dimension_numbers<[1], [0], [0], [1], [0, 0, 1, 1], [], []>} : vector<2x24xbf16>, vector<24x512xbf16>, vector<2x512xf32> -> vector<2x512xf32>
    %c2_52 = arith.constant 2 : index
    %c0_53 = arith.constant 0 : index
    %c0_54 = arith.constant 0 : index
    %73 = vector.load %arg3[%c2_52, %c0_53, %c0_54] : memref<4x1x512xf32, #tpu.memory_space<vmem>>, vector<1x1x512xf32>
    %74 = vector.shape_cast %73 : vector<1x1x512xf32> to vector<1x512xf32>
    %75 = vector.broadcast %74 : vector<1x512xf32> to vector<2x512xf32>
    %76 = arith.addf %72, %75 : vector<2x512xf32>
    %cst_55 = arith.constant 0.000000e+00 : f32
    %77 = vector.broadcast %cst_55 : f32 to vector<2x512xf32>
    %78 = arith.maximumf %76, %77 : vector<2x512xf32>
    %79 = arith.truncf %78 : vector<2x512xf32> to vector<2x512xbf16>
    %c2_56 = arith.constant 2 : index
    %c0_57 = arith.constant 0 : index
    %c0_58 = arith.constant 0 : index
    %80 = vector.load %arg4[%c2_56, %c0_57, %c0_58] : memref<4x512x512xbf16, #tpu.memory_space<vmem>>, vector<1x512x512xbf16>
    %81 = vector.shape_cast %80 : vector<1x512x512xbf16> to vector<512x512xbf16>
    %cst_59 = arith.constant dense<0.000000e+00> : vector<2x512xf32>
    %82 = tpu.matmul %79, %81, %cst_59 {dimension_numbers = #tpu.dot_dimension_numbers<[1], [0], [0], [1], [0, 0, 1, 1], [], []>} : vector<2x512xbf16>, vector<512x512xbf16>, vector<2x512xf32> -> vector<2x512xf32>
    %c2_60 = arith.constant 2 : index
    %c0_61 = arith.constant 0 : index
    %c0_62 = arith.constant 0 : index
    %83 = vector.load %arg5[%c2_60, %c0_61, %c0_62] : memref<4x1x512xf32, #tpu.memory_space<vmem>>, vector<1x1x512xf32>
    %84 = vector.shape_cast %83 : vector<1x1x512xf32> to vector<1x512xf32>
    %85 = vector.broadcast %84 : vector<1x512xf32> to vector<2x512xf32>
    %86 = arith.addf %82, %85 : vector<2x512xf32>
    %cst_63 = arith.constant 0.000000e+00 : f32
    %87 = vector.broadcast %cst_63 : f32 to vector<2x512xf32>
    %88 = arith.maximumf %86, %87 : vector<2x512xf32>
    %c2_64 = arith.constant 2 : index
    %c0_65 = arith.constant 0 : index
    %c0_66 = arith.constant 0 : index
    %89 = vector.load %arg6[%c2_64, %c0_65, %c0_66] : memref<4x1x512xf32, #tpu.memory_space<vmem>>, vector<1x1x512xf32>
    %90 = vector.shape_cast %89 : vector<1x1x512xf32> to vector<1x512xf32>
    %91 = vector.broadcast %90 : vector<1x512xf32> to vector<2x512xf32>
    %92 = arith.mulf %88, %91 : vector<2x512xf32>
    %cst_67 = arith.constant dense<0.000000e+00> : vector<2xf32>
    %93 = vector.multi_reduction <add>, %92, %cst_67 [1] : vector<2x512xf32> to vector<2xf32>
    %94 = vector.shape_cast %93 : vector<2xf32> to vector<2x1xf32>
    %c2_68 = arith.constant 2 : index
    %c0_69 = arith.constant 0 : index
    %c0_70 = arith.constant 0 : index
    %95 = vector.load %arg7[%c2_68, %c0_69, %c0_70] : memref<4x1x1xf32, #tpu.memory_space<vmem>>, vector<1x1x1xf32>
    %96 = vector.shape_cast %95 : vector<1x1x1xf32> to vector<1x1xf32>
    %97 = vector.broadcast %96 : vector<1x1xf32> to vector<2x1xf32>
    %98 = arith.addf %94, %97 : vector<2x1xf32>
    %cst_71 = arith.constant 0.00999999977 : f32
    %99 = vector.broadcast %cst_71 : f32 to vector<2x1xf32>
    %100 = arith.mulf %98, %99 : vector<2x1xf32>
    %101 = math.tanh %100 : vector<2x1xf32>
    %cst_72 = arith.constant 1.000000e+02 : f32
    %102 = vector.broadcast %cst_72 : f32 to vector<2x1xf32>
    %103 = arith.mulf %102, %101 : vector<2x1xf32>
    %c3 = arith.constant 3 : index
    %c0_73 = arith.constant 0 : index
    %c0_74 = arith.constant 0 : index
    %104 = vector.load %arg2[%c3, %c0_73, %c0_74] : memref<4x24x512xbf16, #tpu.memory_space<vmem>>, vector<1x24x512xbf16>
    %105 = vector.shape_cast %104 : vector<1x24x512xbf16> to vector<24x512xbf16>
    %cst_75 = arith.constant dense<0.000000e+00> : vector<2x512xf32>
    %106 = tpu.matmul %1, %105, %cst_75 {dimension_numbers = #tpu.dot_dimension_numbers<[1], [0], [0], [1], [0, 0, 1, 1], [], []>} : vector<2x24xbf16>, vector<24x512xbf16>, vector<2x512xf32> -> vector<2x512xf32>
    %c3_76 = arith.constant 3 : index
    %c0_77 = arith.constant 0 : index
    %c0_78 = arith.constant 0 : index
    %107 = vector.load %arg3[%c3_76, %c0_77, %c0_78] : memref<4x1x512xf32, #tpu.memory_space<vmem>>, vector<1x1x512xf32>
    %108 = vector.shape_cast %107 : vector<1x1x512xf32> to vector<1x512xf32>
    %109 = vector.broadcast %108 : vector<1x512xf32> to vector<2x512xf32>
    %110 = arith.addf %106, %109 : vector<2x512xf32>
    %cst_79 = arith.constant 0.000000e+00 : f32
    %111 = vector.broadcast %cst_79 : f32 to vector<2x512xf32>
    %112 = arith.maximumf %110, %111 : vector<2x512xf32>
    %113 = arith.truncf %112 : vector<2x512xf32> to vector<2x512xbf16>
    %c3_80 = arith.constant 3 : index
    %c0_81 = arith.constant 0 : index
    %c0_82 = arith.constant 0 : index
    %114 = vector.load %arg4[%c3_80, %c0_81, %c0_82] : memref<4x512x512xbf16, #tpu.memory_space<vmem>>, vector<1x512x512xbf16>
    %115 = vector.shape_cast %114 : vector<1x512x512xbf16> to vector<512x512xbf16>
    %cst_83 = arith.constant dense<0.000000e+00> : vector<2x512xf32>
    %116 = tpu.matmul %113, %115, %cst_83 {dimension_numbers = #tpu.dot_dimension_numbers<[1], [0], [0], [1], [0, 0, 1, 1], [], []>} : vector<2x512xbf16>, vector<512x512xbf16>, vector<2x512xf32> -> vector<2x512xf32>
    %c3_84 = arith.constant 3 : index
    %c0_85 = arith.constant 0 : index
    %c0_86 = arith.constant 0 : index
    %117 = vector.load %arg5[%c3_84, %c0_85, %c0_86] : memref<4x1x512xf32, #tpu.memory_space<vmem>>, vector<1x1x512xf32>
    %118 = vector.shape_cast %117 : vector<1x1x512xf32> to vector<1x512xf32>
    %119 = vector.broadcast %118 : vector<1x512xf32> to vector<2x512xf32>
    %120 = arith.addf %116, %119 : vector<2x512xf32>
    %cst_87 = arith.constant 0.000000e+00 : f32
    %121 = vector.broadcast %cst_87 : f32 to vector<2x512xf32>
    %122 = arith.maximumf %120, %121 : vector<2x512xf32>
    %c3_88 = arith.constant 3 : index
    %c0_89 = arith.constant 0 : index
    %c0_90 = arith.constant 0 : index
    %123 = vector.load %arg6[%c3_88, %c0_89, %c0_90] : memref<4x1x512xf32, #tpu.memory_space<vmem>>, vector<1x1x512xf32>
    %124 = vector.shape_cast %123 : vector<1x1x512xf32> to vector<1x512xf32>
    %125 = vector.broadcast %124 : vector<1x512xf32> to vector<2x512xf32>
    %126 = arith.mulf %122, %125 : vector<2x512xf32>
    %cst_91 = arith.constant dense<0.000000e+00> : vector<2xf32>
    %127 = vector.multi_reduction <add>, %126, %cst_91 [1] : vector<2x512xf32> to vector<2xf32>
    %128 = vector.shape_cast %127 : vector<2xf32> to vector<2x1xf32>
    %c3_92 = arith.constant 3 : index
    %c0_93 = arith.constant 0 : index
    %c0_94 = arith.constant 0 : index
    %129 = vector.load %arg7[%c3_92, %c0_93, %c0_94] : memref<4x1x1xf32, #tpu.memory_space<vmem>>, vector<1x1x1xf32>
    %130 = vector.shape_cast %129 : vector<1x1x1xf32> to vector<1x1xf32>
    %131 = vector.broadcast %130 : vector<1x1xf32> to vector<2x1xf32>
    %132 = arith.addf %128, %131 : vector<2x1xf32>
    %cst_95 = arith.constant 0.00999999977 : f32
    %133 = vector.broadcast %cst_95 : f32 to vector<2x1xf32>
    %134 = arith.mulf %132, %133 : vector<2x1xf32>
    %135 = math.tanh %134 : vector<2x1xf32>
    %cst_96 = arith.constant 1.000000e+02 : f32
    %136 = vector.broadcast %cst_96 : f32 to vector<2x1xf32>
    %137 = arith.mulf %136, %135 : vector<2x1xf32>
    %138 = tpu.concatenate %35, %69, %103, %137 in 1 : vector<2x1xf32>, vector<2x1xf32>, vector<2x1xf32>, vector<2x1xf32> -> vector<2x4xf32>
    %c0_97 = arith.constant 0 : index
    %c0_98 = arith.constant 0 : index
    %139 = vector.load %arg8[%c0_97, %c0_98] : memref<2x4xf32, #tpu.memory_space<vmem>>, vector<2x4xf32>
    tpu.vector_store %arg8[%c0_97, %c0_98], %138 {strides = array<i32>} : memref<2x4xf32, #tpu.memory_space<vmem>>, vector<2x4xf32>,
    return
  }
  func.func @transform_0(%arg0: i32) -> (i32, i32) {
    %c0_i32 = arith.constant 0 : i32
    %c0_i32_0 = arith.constant 0 : i32
    return %arg0, %c0_i32 : i32, i32
  }
  func.func @transform_1(%arg0: i32) -> (i32, i32, i32) {
    %c0_i32 = arith.constant 0 : i32
    %c0_i32_0 = arith.constant 0 : i32
    %c0_i32_1 = arith.constant 0 : i32
    %c0_i32_2 = arith.constant 0 : i32
    return %c0_i32, %c0_i32_0, %c0_i32_1 : i32, i32, i32
  }
  func.func @transform_2(%arg0: i32) -> (i32, i32, i32) {
    %c0_i32 = arith.constant 0 : i32
    %c0_i32_0 = arith.constant 0 : i32
    %c0_i32_1 = arith.constant 0 : i32
    %c0_i32_2 = arith.constant 0 : i32
    return %c0_i32, %c0_i32_0, %c0_i32_1 : i32, i32, i32
  }
  func.func @transform_3(%arg0: i32) -> (i32, i32, i32) {
    %c0_i32 = arith.constant 0 : i32
    %c0_i32_0 = arith.constant 0 : i32
    %c0_i32_1 = arith.constant 0 : i32
    %c0_i32_2 = arith.constant 0 : i32
    return %c0_i32, %c0_i32_0, %c0_i32_1 : i32, i32, i32
  }
  func.func @transform_4(%arg0: i32) -> (i32, i32, i32) {
    %c0_i32 = arith.constant 0 : i32
    %c0_i32_0 = arith.constant 0 : i32
    %c0_i32_1 = arith.constant 0 : i32
    %c0_i32_2 = arith.constant 0 : i32
    return %c0_i32, %c0_i32_0, %c0_i32_1 : i32, i32, i32
  }
  func.func @transform_5(%arg0: i32) -> (i32, i32, i32) {
    %c0_i32 = arith.constant 0 : i32
    %c0_i32_0 = arith.constant 0 : i32
    %c0_i32_1 = arith.constant 0 : i32
    %c0_i32_2 = arith.constant 0 : i32
    return %c0_i32, %c0_i32_0, %c0_i32_1 : i32, i32, i32
  }
  func.func @transform_6(%arg0: i32) -> (i32, i32, i32) {
    %c0_i32 = arith.constant 0 : i32
    %c0_i32_0 = arith.constant 0 : i32
    %c0_i32_1 = arith.constant 0 : i32
    %c0_i32_2 = arith.constant 0 : i32
    return %c0_i32, %c0_i32_0, %c0_i32_1 : i32, i32, i32
  }
  func.func @transform_7(%arg0: i32) -> (i32, i32) {
    %c0_i32 = arith.constant 0 : i32
    %c0_i32_0 = arith.constant 0 : i32
    return %arg0, %c0_i32 : i32, i32
  }
}

</mosaic_0001>

<llo_original>
// kernel: tpu_custom_call.1
$region0: #{tpu_custom_call.1}
  #allocation0 [shape = 'u32[]', space=smem, size = 0x4, offset = 0x4, fixed_abs, tag = 'smem constant byte address 0x4 - core index']
  #allocation1 [shape = 'u32[144,128]{1,0:T(1,128)}', space=vmem, size = 0x12000, scoped, tag = 'internal scratch']
  %s0 = inlined_call_operand.hbm [shape: f32[2,24], index: 0, kind: input, shape index: {}]
  %s1 = inlined_call_operand.hbm [shape: bf16[4,24,512], index: 1, kind: input, shape index: {}]
  %s2 = inlined_call_operand.hbm [shape: f32[4,1,512], index: 2, kind: input, shape index: {}]
  %s3 = inlined_call_operand.hbm [shape: bf16[4,512,512], index: 3, kind: input, shape index: {}]
  %s4 = inlined_call_operand.hbm [shape: f32[4,1,512], index: 4, kind: input, shape index: {}]
  %s5 = inlined_call_operand.hbm [shape: f32[4,1,512], index: 5, kind: input, shape index: {}]
  %s6 = inlined_call_operand.vmem [shape: f32[4,1,1], index: 6, kind: input, shape index: {}]
  %s7 = inlined_call_operand.hbm [shape: f32[2,4], index: 7, kind: output, shape index: {}]
  %s8 = sld [smem:[#allocation0]]
  $region62: #{tpu_custom_call.1} parent=0
    _
  %s10 = ssub.s32 1, %s8
  %s11 = scalar_select 0, %s10, %s8
  $region1: #{tpu_custom_call.1} parent=0
    #allocation2 [shape = 'u8[1024]{0}', space=vmem, size = 0x400, scoped, tag = 'input window, operand 0, single buffered']
    #allocation3 [shape = 's32[1]{0}', space=sflag, size = 0x4, scoped, tag = 'scoped memory for tpu_custom_call.1']
    #allocation4 [shape = 's32[1]{0}', space=sflag, size = 0x4, scoped, tag = 'scoped memory for tpu_custom_call.1']
    #allocation5 [shape = 'u8[98304]{0}', space=vmem, size = 0x18000, scoped, tag = 'input window, operand 1, single buffered']
    #allocation6 [shape = 's32[1]{0}', space=sflag, size = 0x4, scoped, tag = 'scoped memory for tpu_custom_call.1']
    #allocation7 [shape = 'u8[8192]{0}', space=vmem, size = 0x2000, scoped, tag = 'input window, operand 2, single buffered']
    #allocation8 [shape = 'u8[2097152]{0}', space=vmem, size = 0x200000, scoped, tag = 'input window, operand 3, single buffered']
    #allocation9 [shape = 's32[1]{0}', space=sflag, size = 0x4, scoped, tag = 'scoped memory for tpu_custom_call.1']
    #allocation10 [shape = 'u8[8192]{0}', space=vmem, size = 0x2000, scoped, tag = 'input window, operand 4, single buffered']
    #allocation11 [shape = 'u8[8192]{0}', space=vmem, size = 0x2000, scoped, tag = 'input window, operand 5, single buffered']
    #allocation12 [shape = 's32[1]{0}', space=sflag, size = 0x4, scoped, tag = 'scoped memory for tpu_custom_call.1']
    #allocation13 [shape = 'u8[1024]{0}', space=vmem, size = 0x400, scoped, tag = 'output window, operand 0, single buffered']
    %12 = vsyncpa [#allocation3], 0
    %13 = vsyncpa [#allocation6], 0
    %14 = vsyncpa [#allocation9], 0
    %15 = vsyncpa [#allocation12], 0
    %16 = vsyncpa [#allocation4], 0
    // Predicated region
    $region2: #{tpu_custom_call.1} parent=1 // pred_check
      _
    $region3: #{tpu_custom_call.1} parent=1 // pred_check_branch
      %18 = sbr.rel (0) target = $region5
    $region4: #{tpu_custom_call.1} parent=1 // pred_region
      %s20 = ssub.s32 32, 32
      %21 = vsyncadd [#allocation3], %s20
      %s23 = sshll.u32 [#allocation2], 4
      %s24 = int_to_ptr.vmem [resolvable:$true] %s23
      %26 = dma.hbm_to_vmem [thread:$0]  %s0, 32, %s24, [#allocation3]
    $region5: #{tpu_custom_call.1} parent=1 // pred_fallthru
      _
    // Predicated region
    $region6: #{tpu_custom_call.1} parent=1 // pred_check
      _
    $region7: #{tpu_custom_call.1} parent=1 // pred_check_branch
      %28 = sbr.rel (0) target = $region9
    $region8: #{tpu_custom_call.1} parent=1 // pred_region
      %s30 = ssub.s32 3072, 3072
      %31 = vsyncadd [#allocation6], %s30
      %s32 = sshll.u32 [#allocation5], 4
      %s33 = int_to_ptr.vmem [resolvable:$true] %s32
      %38 = dma.hbm_to_vmem [thread:$0]  %s1, 3072, %s33, [#allocation6], 256, 256, 16
    $region9: #{tpu_custom_call.1} parent=1 // pred_fallthru
      _
    // Predicated region
    $region10: #{tpu_custom_call.1} parent=1 // pred_check
      _
    $region11: #{tpu_custom_call.1} parent=1 // pred_check_branch
      %40 = sbr.rel (0) target = $region13
    $region12: #{tpu_custom_call.1} parent=1 // pred_region
      %s42 = ssub.s32 256, 256
      %43 = vsyncadd [#allocation6], %s42
      %s44 = sshll.u32 [#allocation7], 4
      %s45 = int_to_ptr.vmem [resolvable:$true] %s44
      %50 = dma.hbm_to_vmem [thread:$0]  %s2, 256, %s45, [#allocation6], 64, 64, 4
    $region13: #{tpu_custom_call.1} parent=1 // pred_fallthru
      _
    // Predicated region
    $region14: #{tpu_custom_call.1} parent=1 // pred_check
      _
    $region15: #{tpu_custom_call.1} parent=1 // pred_check_branch
      %52 = sbr.rel (0) target = $region17
    $region16: #{tpu_custom_call.1} parent=1 // pred_region
      %s54 = ssub.s32 65536, 65536
      %55 = vsyncadd [#allocation9], %s54
      %s56 = sshll.u32 [#allocation8], 4
      %s57 = int_to_ptr.vmem [resolvable:$true] %s56
      %62 = dma.hbm_to_vmem [thread:$0]  %s3, 65536, %s57, [#allocation9], 256, 256, 16
    $region17: #{tpu_custom_call.1} parent=1 // pred_fallthru
      _
    // Predicated region
    $region18: #{tpu_custom_call.1} parent=1 // pred_check
      _
    $region19: #{tpu_custom_call.1} parent=1 // pred_check_branch
      %64 = sbr.rel (0) target = $region21
    $region20: #{tpu_custom_call.1} parent=1 // pred_region
      %s66 = ssub.s32 256, 256
      %67 = vsyncadd [#allocation9], %s66
      %s68 = sshll.u32 [#allocation10], 4
      %s69 = int_to_ptr.vmem [resolvable:$true] %s68
      %74 = dma.hbm_to_vmem [thread:$0]  %s4, 256, %s69, [#allocation9], 64, 64, 4
    $region21: #{tpu_custom_call.1} parent=1 // pred_fallthru
      _
    // Predicated region
    $region22: #{tpu_custom_call.1} parent=1 // pred_check
      _
    $region23: #{tpu_custom_call.1} parent=1 // pred_check_branch
      %76 = sbr.rel (0) target = $region25
    $region24: #{tpu_custom_call.1} parent=1 // pred_region
      %s78 = ssub.s32 256, 256
      %79 = vsyncadd [#allocation12], %s78
      %s80 = sshll.u32 [#allocation11], 4
      %s81 = int_to_ptr.vmem [resolvable:$true] %s80
      %86 = dma.hbm_to_vmem [thread:$0]  %s5, 256, %s81, [#allocation12], 64, 64, 4
    $region25: #{tpu_custom_call.1} parent=1 // pred_fallthru
      _
    // Predicated region
    $region26: #{tpu_custom_call.1} parent=1 // pred_check
      _
    $region27: #{tpu_custom_call.1} parent=1 // pred_check_branch
      %88 = sbr.rel (0) target = $region29
    $region28: #{tpu_custom_call.1} parent=1 // pred_region
      _
    $region29: #{tpu_custom_call.1} parent=1 // pred_fallthru
      _
    // Predicated region
    $region30: #{tpu_custom_call.1} parent=1 // pred_check
      _
    $region31: #{tpu_custom_call.1} parent=1 // pred_check_branch
      %90 = sbr.rel (0) target = $region33
    $region32: #{tpu_custom_call.1} parent=1 // pred_region
      %91 = dma.done [#allocation3], 32
    $region33: #{tpu_custom_call.1} parent=1 // pred_fallthru
      _
    // Predicated region
    $region34: #{tpu_custom_call.1} parent=1 // pred_check
      _
    $region35: #{tpu_custom_call.1} parent=1 // pred_check_branch
      %93 = sbr.rel (0) target = $region37
    $region36: #{tpu_custom_call.1} parent=1 // pred_region
      %94 = dma.done [#allocation6], 3072
    $region37: #{tpu_custom_call.1} parent=1 // pred_fallthru
      _
    // Predicated region
    $region38: #{tpu_custom_call.1} parent=1 // pred_check
      _
    $region39: #{tpu_custom_call.1} parent=1 // pred_check_branch
      %96 = sbr.rel (0) target = $region41
    $region40: #{tpu_custom_call.1} parent=1 // pred_region
      %97 = dma.done [#allocation6], 256
    $region41: #{tpu_custom_call.1} parent=1 // pred_fallthru
      _
    // Predicated region
    $region42: #{tpu_custom_call.1} parent=1 // pred_check
      _
    $region43: #{tpu_custom_call.1} parent=1 // pred_check_branch
      %99 = sbr.rel (0) target = $region45
    $region44: #{tpu_custom_call.1} parent=1 // pred_region
      %100 = dma.done [#allocation9], 65536
    $region45: #{tpu_custom_call.1} parent=1 // pred_fallthru
      _
    // Predicated region
    $region46: #{tpu_custom_call.1} parent=1 // pred_check
      _
    $region47: #{tpu_custom_call.1} parent=1 // pred_check_branch
      %102 = sbr.rel (0) target = $region49
    $region48: #{tpu_custom_call.1} parent=1 // pred_region
      %103 = dma.done [#allocation9], 256
    $region49: #{tpu_custom_call.1} parent=1 // pred_fallthru
      _
    // Predicated region
    $region50: #{tpu_custom_call.1} parent=1 // pred_check
      _
    $region51: #{tpu_custom_call.1} parent=1 // pred_check_branch
      %105 = sbr.rel (0) target = $region53
    $region52: #{tpu_custom_call.1} parent=1 // pred_region
      %106 = dma.done [#allocation12], 256
    $region53: #{tpu_custom_call.1} parent=1 // pred_fallthru
      _
    %v108 = vld [vmem:[#allocation2] sm:$0x3]
    %v109 = vpack.c.bf16 %v108, %v108
    %v110 = vld [vmem:[#allocation5] sm:$0xff]
    %v111 = vld [vmem:[#allocation5 + $0x8] sm:$0xff]
    %v112 = vld [vmem:[#allocation5 + $0x10] sm:$0xff]
    %v113 = vld [vmem:[#allocation5 + $0x18] sm:$0xff]
    %v114 = vld [vmem:[#allocation5 + $0x20] sm:$0xff]
    %v115 = vld [vmem:[#allocation5 + $0x28] sm:$0xff]
    %v116 = vld [vmem:[#allocation7] sm:$0xf]
    %v118 = vlaneseq
    %v119 = vshrl.u32 %v118, 7
    %v120 = vsub.s32 0, %v119
    %v121 = vrot.slane %v116, %v120
    %v122 = vlaneseq
    %v123 = vshrl.u32 %v122, 7
    %v124 = vsub.s32 1, %v123
    %v125 = vrot.slane %v116, %v124
    %v126 = vlaneseq
    %v127 = vshrl.u32 %v126, 7
    %v128 = vsub.s32 2, %v127
    %v129 = vrot.slane %v116, %v128
    %v130 = vlaneseq
    %v131 = vshrl.u32 %v130, 7
    %v132 = vsub.s32 3, %v131
    %v133 = vrot.slane %v116, %v132
    %v144 = vunpack.c.l.b16 %v110
    %v145 = vunpack.c.h.b16 %v110
    %v146 = vunpack.c.l.b16 %v111
    %v147 = vunpack.c.h.b16 %v111
    %v148 = vunpack.c.l.b16 %v112
    %v149 = vunpack.c.h.b16 %v112
    %v150 = vunpack.c.l.b16 %v113
    %v151 = vunpack.c.h.b16 %v113
    %v152 = vunpack.c.l.b16 %v114
    %v153 = vunpack.c.h.b16 %v114
    %v154 = vunpack.c.l.b16 %v115
    %v155 = vunpack.c.h.b16 %v115
    %v156 = vpack.c.b16 %v148, %v144
    %v157 = vpack.c.b16 %v149, %v145
    %v158 = vpack.c.b16 %v150, %v146
    %v159 = vpack.c.b16 %v151, %v147
    %v160 = vpack.c.b16 %v152, %v152
    %v161 = vpack.c.b16 %v153, %v153
    %v162 = vpack.c.b16 %v154, %v154
    %v163 = vpack.c.b16 %v155, %v155
    %vm168 = vcmask 195584
    %v170 = vsel %vm168, %v109, 0
    %vm172 = vcmask 1043456
    %v174 = vsel %vm172, %v160, 0
    %v177 = vsel %vm172, %v161, 0
    %v180 = vsel %vm172, %v162, 0
    %v183 = vsel %vm172, %v163, 0
    %185 = vmatprep.subr.bf16.mxu0 0
    %186 = vmatpush1.bf16.msra.mxu0 0
    %187 = vmatprep.subr.bf16.mxu0 0
    %188 = vmatpush1.bf16.msra.mxu0 0
    %189 = vmatprep.subr.bf16.mxu0 0
    %190 = vmatpush1.bf16.msra.mxu0 0
    %191 = vmatprep.subr.bf16.mxu0 0
    %192 = vmatpush1.bf16.msra.mxu0 0
    %193 = vmatprep.subr.bf16.mxu0 0
    %194 = vmatpush1.bf16.msra.mxu0 0
    %195 = vmatprep.subr.bf16.mxu0 0
    %196 = vmatpush1.bf16.msra.mxu0 0
    %197 = vmatprep.subr.bf16.mxu0 %v177
    %198 = vmatpush1.bf16.msra.mxu0 %v174
    %199 = vmatprep.subr.bf16.mxu0 %v157
    %200 = vmatpush1.bf16.msra.mxu0 %v156
    %201 = vmatprep.subr.bf16.mxu0 0
    %202 = vmatpush2.bf16.msra.mxu0 0
    %203 = vmatprep.subr.bf16.mxu0 0
    %204 = vmatpush2.bf16.msra.mxu0 0
    %205 = vmatprep.subr.bf16.mxu0 0
    %206 = vmatpush2.bf16.msra.mxu0 0
    %207 = vmatprep.subr.bf16.mxu0 0
    %208 = vmatpush2.bf16.msra.mxu0 0
    %209 = vmatprep.subr.bf16.mxu0 0
    %210 = vmatpush2.bf16.msra.mxu0 0
    %211 = vmatprep.subr.bf16.mxu0 0
    %212 = vmatpush2.bf16.msra.mxu0 0
    %213 = vmatprep.subr.bf16.mxu0 0
    %214 = vmatpush2.bf16.msra.mxu0 0
    %215 = vmatprep.subr.bf16.mxu0 0
    %216 = vmatpush2.bf16.msra.mxu0 0
    %217 = vmatprep.mubr.bf16.mxu0 0
    %218 = vmatmul.mubr.bf16.gmra.mxu0 %v170
    %v219 = vpop.f32.mrf.mxu0
    %v220 = vadd.f32 %v121, %v219
    %v221 = vpop.f32.mrf.mxu0
    %v222 = vadd.f32 %v125, %v221
    %v223 = vpop.f32.mrf.mxu0
    %v224 = vpop.f32.mrf.mxu0
    %225 = vdwg.mxu0
    %226 = vmatprep.subr.bf16.mxu0 0
    %227 = vmatpush1.bf16.msra.mxu0 0
    %228 = vmatprep.subr.bf16.mxu0 0
    %229 = vmatpush1.bf16.msra.mxu0 0
    %230 = vmatprep.subr.bf16.mxu0 0
    %231 = vmatpush1.bf16.msra.mxu0 0
    %232 = vmatprep.subr.bf16.mxu0 0
    %233 = vmatpush1.bf16.msra.mxu0 0
    %234 = vmatprep.subr.bf16.mxu0 0
    %235 = vmatpush1.bf16.msra.mxu0 0
    %236 = vmatprep.subr.bf16.mxu0 0
    %237 = vmatpush1.bf16.msra.mxu0 0
    %238 = vmatprep.subr.bf16.mxu0 %v183
    %239 = vmatpush1.bf16.msra.mxu0 %v180
    %240 = vmatprep.subr.bf16.mxu0 %v159
    %241 = vmatpush1.bf16.msra.mxu0 %v158
    %242 = vmatprep.subr.bf16.mxu0 0
    %243 = vmatpush2.bf16.msra.mxu0 0
    %244 = vmatprep.subr.bf16.mxu0 0
    %245 = vmatpush2.bf16.msra.mxu0 0
    %246 = vmatprep.subr.bf16.mxu0 0
    %247 = vmatpush2.bf16.msra.mxu0 0
    %248 = vmatprep.subr.bf16.mxu0 0
    %249 = vmatpush2.bf16.msra.mxu0 0
    %250 = vmatprep.subr.bf16.mxu0 0
    %251 = vmatpush2.bf16.msra.mxu0 0
    %252 = vmatprep.subr.bf16.mxu0 0
    %253 = vmatpush2.bf16.msra.mxu0 0
    %254 = vmatprep.subr.bf16.mxu0 0
    %255 = vmatpush2.bf16.msra.mxu0 0
    %256 = vmatprep.subr.bf16.mxu0 0
    %257 = vmatpush2.bf16.msra.mxu0 0
    %258 = vmatprep.mubr.bf16.mxu0 0
    %259 = vmatmul.mubr.bf16.gmra.mxu0 %v170
    %v260 = vpop.f32.mrf.mxu0
    %v261 = vadd.f32 %v129, %v260
    %v262 = vpop.f32.mrf.mxu0
    %v263 = vadd.f32 %v133, %v262
    %v264 = vpop.f32.mrf.mxu0
    %v265 = vpop.f32.mrf.mxu0
    %266 = vdwg.mxu0
    %v267 = vmax.f32 %v220, 0.0
    %v268 = vmax.f32 %v222, 0.0
    %v269 = vmax.f32 %v261, 0.0
    %v270 = vmax.f32 %v263, 0.0
    %v271 = vpack.c.bf16 %v267, %v267
    %v272 = vpack.c.bf16 %v268, %v268
    %v273 = vpack.c.bf16 %v269, %v269
    %v274 = vpack.c.bf16 %v270, %v270
    %v275 = vld [vmem:[#allocation8] sm:$0xff]
    %v276 = vld [vmem:[#allocation8 + $0x8] sm:$0xff]
    %v277 = vld [vmem:[#allocation8 + $0x10] sm:$0xff]
    %v278 = vld [vmem:[#allocation8 + $0x18] sm:$0xff]
    %v279 = vld [vmem:[#allocation8 + $0x20] sm:$0xff]
    %v280 = vld [vmem:[#allocation8 + $0x28] sm:$0xff]
    %v281 = vld [vmem:[#allocation8 + $0x30] sm:$0xff]
    %v282 = vld [vmem:[#allocation8 + $0x38] sm:$0xff]
    %v283 = vld [vmem:[#allocation8 + $0x40] sm:$0xff]
    %v284 = vld [vmem:[#allocation8 + $0x48] sm:$0xff]
    %v285 = vld [vmem:[#allocation8 + $0x50] sm:$0xff]
    %v286 = vld [vmem:[#allocation8 + $0x58] sm:$0xff]
    %v287 = vld [vmem:[#allocation8 + $0x60] sm:$0xff]
    %v288 = vld [vmem:[#allocation8 + $0x68] sm:$0xff]
    %v289 = vld [vmem:[#allocation8 + $0x70] sm:$0xff]
    %v290 = vld [vmem:[#allocation8 + $0x78] sm:$0xff]
    %v291 = vld [vmem:[#allocation8 + $0x80] sm:$0xff]
    %v292 = vld [vmem:[#allocation8 + $0x88] sm:$0xff]
    %v293 = vld [vmem:[#allocation8 + $0x90] sm:$0xff]
    %v294 = vld [vmem:[#allocation8 + $0x98] sm:$0xff]
    %v295 = vld [vmem:[#allocation8 + $0xa0] sm:$0xff]
    %v296 = vld [vmem:[#allocation8 + $0xa8] sm:$0xff]
    %v297 = vld [vmem:[#allocation8 + $0xb0] sm:$0xff]
    %v298 = vld [vmem:[#allocation8 + $0xb8] sm:$0xff]
    %v299 = vld [vmem:[#allocation8 + $0xc0] sm:$0xff]
    %v300 = vld [vmem:[#allocation8 + $0xc8] sm:$0xff]
    %v301 = vld [vmem:[#allocation8 + $0xd0] sm:$0xff]
    %v302 = vld [vmem:[#allocation8 + $0xd8] sm:$0xff]
    %v303 = vld [vmem:[#allocation8 + $0xe0] sm:$0xff]
    %v304 = vld [vmem:[#allocation8 + $0xe8] sm:$0xff]
    %v305 = vld [vmem:[#allocation8 + $0xf0] sm:$0xff]
    %v306 = vld [vmem:[#allocation8 + $0xf8] sm:$0xff]
    %v307 = vld [vmem:[#allocation8 + $0x100] sm:$0xff]
    %v308 = vld [vmem:[#allocation8 + $0x108] sm:$0xff]
    %v309 = vld [vmem:[#allocation8 + $0x110] sm:$0xff]
    %v310 = vld [vmem:[#allocation8 + $0x118] sm:$0xff]
    %v311 = vld [vmem:[#allocation8 + $0x120] sm:$0xff]
    %v312 = vld [vmem:[#allocation8 + $0x128] sm:$0xff]
    %v313 = vld [vmem:[#allocation8 + $0x130] sm:$0xff]
    %v314 = vld [vmem:[#allocation8 + $0x138] sm:$0xff]
    %v315 = vld [vmem:[#allocation8 + $0x140] sm:$0xff]
    %v316 = vld [vmem:[#allocation8 + $0x148] sm:$0xff]
    %v317 = vld [vmem:[#allocation8 + $0x150] sm:$0xff]
    %v318 = vld [vmem:[#allocation8 + $0x158] sm:$0xff]
    %v319 = vld [vmem:[#allocation8 + $0x160] sm:$0xff]
    %v320 = vld [vmem:[#allocation8 + $0x168] sm:$0xff]
    %v321 = vld [vmem:[#allocation8 + $0x170] sm:$0xff]
    %v322 = vld [vmem:[#allocation8 + $0x178] sm:$0xff]
    %v323 = vld [vmem:[#allocation8 + $0x180] sm:$0xff]
    %v324 = vld [vmem:[#allocation8 + $0x188] sm:$0xff]
    %v325 = vld [vmem:[#allocation8 + $0x190] sm:$0xff]
    %v326 = vld [vmem:[#allocation8 + $0x198] sm:$0xff]
    %v327 = vld [vmem:[#allocation8 + $0x1a0] sm:$0xff]
    %v328 = vld [vmem:[#allocation8 + $0x1a8] sm:$0xff]
    %v329 = vld [vmem:[#allocation8 + $0x1b0] sm:$0xff]
    %v330 = vld [vmem:[#allocation8 + $0x1b8] sm:$0xff]
    %v331 = vld [vmem:[#allocation8 + $0x1c0] sm:$0xff]
    %v332 = vld [vmem:[#allocation8 + $0x1c8] sm:$0xff]
    %v333 = vld [vmem:[#allocation8 + $0x1d0] sm:$0xff]
    %v334 = vld [vmem:[#allocation8 + $0x1d8] sm:$0xff]
    %v335 = vld [vmem:[#allocation8 + $0x1e0] sm:$0xff]
    %v336 = vld [vmem:[#allocation8 + $0x1e8] sm:$0xff]
    %v337 = vld [vmem:[#allocation8 + $0x1f0] sm:$0xff]
    %v338 = vld [vmem:[#allocation8 + $0x1f8] sm:$0xff]
    %v339 = vld [vmem:[#allocation8 + $0x200] sm:$0xff]
    %v340 = vld [vmem:[#allocation8 + $0x208] sm:$0xff]
    %v341 = vld [vmem:[#allocation8 + $0x210] sm:$0xff]
    %v342 = vld [vmem:[#allocation8 + $0x218] sm:$0xff]
    %v343 = vld [vmem:[#allocation8 + $0x220] sm:$0xff]
    %v344 = vld [vmem:[#allocation8 + $0x228] sm:$0xff]
    %v345 = vld [vmem:[#allocation8 + $0x230] sm:$0xff]
    %v346 = vld [vmem:[#allocation8 + $0x238] sm:$0xff]
    %v347 = vld [vmem:[#allocation8 + $0x240] sm:$0xff]
    %v348 = vld [vmem:[#allocation8 + $0x248] sm:$0xff]
    %v349 = vld [vmem:[#allocation8 + $0x250] sm:$0xff]
    %v350 = vld [vmem:[#allocation8 + $0x258] sm:$0xff]
    %v351 = vld [vmem:[#allocation8 + $0x260] sm:$0xff]
    %v352 = vld [vmem:[#allocation8 + $0x268] sm:$0xff]
    %v353 = vld [vmem:[#allocation8 + $0x270] sm:$0xff]
    %v354 = vld [vmem:[#allocation8 + $0x278] sm:$0xff]
    %v355 = vld [vmem:[#allocation8 + $0x280] sm:$0xff]
    %v356 = vld [vmem:[#allocation8 + $0x288] sm:$0xff]
    %v357 = vld [vmem:[#allocation8 + $0x290] sm:$0xff]
    %v358 = vld [vmem:[#allocation8 + $0x298] sm:$0xff]
    %v359 = vld [vmem:[#allocation8 + $0x2a0] sm:$0xff]
    %v360 = vld [vmem:[#allocation8 + $0x2a8] sm:$0xff]
    %v361 = vld [vmem:[#allocation8 + $0x2b0] sm:$0xff]
    %v362 = vld [vmem:[#allocation8 + $0x2b8] sm:$0xff]
    %v363 = vld [vmem:[#allocation8 + $0x2c0] sm:$0xff]
    %v364 = vld [vmem:[#allocation8 + $0x2c8] sm:$0xff]
    %v365 = vld [vmem:[#allocation8 + $0x2d0] sm:$0xff]
    %v366 = vld [vmem:[#allocation8 + $0x2d8] sm:$0xff]
    %v367 = vld [vmem:[#allocation8 + $0x2e0] sm:$0xff]
    %v368 = vld [vmem:[#allocation8 + $0x2e8] sm:$0xff]
    %v369 = vld [vmem:[#allocation8 + $0x2f0] sm:$0xff]
    %v370 = vld [vmem:[#allocation8 + $0x2f8] sm:$0xff]
    %v371 = vld [vmem:[#allocation8 + $0x300] sm:$0xff]
    %v372 = vld [vmem:[#allocation8 + $0x308] sm:$0xff]
    %v373 = vld [vmem:[#allocation8 + $0x310] sm:$0xff]
    %v374 = vld [vmem:[#allocation8 + $0x318] sm:$0xff]
    %v375 = vld [vmem:[#allocation8 + $0x320] sm:$0xff]
    %v376 = vld [vmem:[#allocation8 + $0x328] sm:$0xff]
    %v377 = vld [vmem:[#allocation8 + $0x330] sm:$0xff]
    %v378 = vld [vmem:[#allocation8 + $0x338] sm:$0xff]
    %v379 = vld [vmem:[#allocation8 + $0x340] sm:$0xff]
    %v380 = vld [vmem:[#allocation8 + $0x348] sm:$0xff]
    %v381 = vld [vmem:[#allocation8 + $0x350] sm:$0xff]
    %v382 = vld [vmem:[#allocation8 + $0x358] sm:$0xff]
    %v383 = vld [vmem:[#allocation8 + $0x360] sm:$0xff]
    %v384 = vld [vmem:[#allocation8 + $0x368] sm:$0xff]
    %v385 = vld [vmem:[#allocation8 + $0x370] sm:$0xff]
    %v386 = vld [vmem:[#allocation8 + $0x378] sm:$0xff]
    %v387 = vld [vmem:[#allocation8 + $0x380] sm:$0xff]
    %v388 = vld [vmem:[#allocation8 + $0x388] sm:$0xff]
    %v389 = vld [vmem:[#allocation8 + $0x390] sm:$0xff]
    %v390 = vld [vmem:[#allocation8 + $0x398] sm:$0xff]
    %v391 = vld [vmem:[#allocation8 + $0x3a0] sm:$0xff]
    %v392 = vld [vmem:[#allocation8 + $0x3a8] sm:$0xff]
    %v393 = vld [vmem:[#allocation8 + $0x3b0] sm:$0xff]
    %v394 = vld [vmem:[#allocation8 + $0x3b8] sm:$0xff]
    %v395 = vld [vmem:[#allocation8 + $0x3c0] sm:$0xff]
    %v396 = vld [vmem:[#allocation8 + $0x3c8] sm:$0xff]
    %v397 = vld [vmem:[#allocation8 + $0x3d0] sm:$0xff]
    %v398 = vld [vmem:[#allocation8 + $0x3d8] sm:$0xff]
    %v399 = vld [vmem:[#allocation8 + $0x3e0] sm:$0xff]
    %v400 = vld [vmem:[#allocation8 + $0x3e8] sm:$0xff]
    %v401 = vld [vmem:[#allocation8 + $0x3f0] sm:$0xff]
    %v402 = vld [vmem:[#allocation8 + $0x3f8] sm:$0xff]
    %v403 = vld [vmem:[#allocation10] sm:$0xf]
    %v405 = vlaneseq
    %v406 = vshrl.u32 %v405, 7
    %v407 = vsub.s32 0, %v406
    %v408 = vrot.slane %v403, %v407
    %v409 = vlaneseq
    %v410 = vshrl.u32 %v409, 7
    %v411 = vsub.s32 1, %v410
    %v412 = vrot.slane %v403, %v411
    %v413 = vlaneseq
    %v414 = vshrl.u32 %v413, 7
    %v415 = vsub.s32 2, %v414
    %v416 = vrot.slane %v403, %v415
    %v417 = vlaneseq
    %v418 = vshrl.u32 %v417, 7
    %v419 = vsub.s32 3, %v418
    %v420 = vrot.slane %v403, %v419
    %v553 = vunpack.c.l.b16 %v275
    %v554 = vunpack.c.h.b16 %v275
    %v555 = vunpack.c.l.b16 %v276
    %v556 = vunpack.c.h.b16 %v276
    %v557 = vunpack.c.l.b16 %v277
    %v558 = vunpack.c.h.b16 %v277
    %v559 = vunpack.c.l.b16 %v278
    %v560 = vunpack.c.h.b16 %v278
    %v561 = vunpack.c.l.b16 %v279
    %v562 = vunpack.c.h.b16 %v279
    %v563 = vunpack.c.l.b16 %v280
    %v564 = vunpack.c.h.b16 %v280
    %v565 = vunpack.c.l.b16 %v281
    %v566 = vunpack.c.h.b16 %v281
    %v567 = vunpack.c.l.b16 %v282
    %v568 = vunpack.c.h.b16 %v282
    %v569 = vunpack.c.l.b16 %v283
    %v570 = vunpack.c.h.b16 %v283
    %v571 = vunpack.c.l.b16 %v284
    %v572 = vunpack.c.h.b16 %v284
    %v573 = vunpack.c.l.b16 %v285
    %v574 = vunpack.c.h.b16 %v285
    %v575 = vunpack.c.l.b16 %v286
    %v576 = vunpack.c.h.b16 %v286
    %v577 = vunpack.c.l.b16 %v287
    %v578 = vunpack.c.h.b16 %v287
    %v579 = vunpack.c.l.b16 %v288
    %v580 = vunpack.c.h.b16 %v288
    %v581 = vunpack.c.l.b16 %v289
    %v582 = vunpack.c.h.b16 %v289
    %v583 = vunpack.c.l.b16 %v290
    %v584 = vunpack.c.h.b16 %v290
    %v585 = vunpack.c.l.b16 %v291
    %v586 = vunpack.c.h.b16 %v291
    %v587 = vunpack.c.l.b16 %v292
    %v588 = vunpack.c.h.b16 %v292
    %v589 = vunpack.c.l.b16 %v293
    %v590 = vunpack.c.h.b16 %v293
    %v591 = vunpack.c.l.b16 %v294
    %v592 = vunpack.c.h.b16 %v294
    %v593 = vunpack.c.l.b16 %v295
    %v594 = vunpack.c.h.b16 %v295
    %v595 = vunpack.c.l.b16 %v296
    %v596 = vunpack.c.h.b16 %v296
    %v597 = vunpack.c.l.b16 %v297
    %v598 = vunpack.c.h.b16 %v297
    %v599 = vunpack.c.l.b16 %v298
    %v600 = vunpack.c.h.b16 %v298
    %v601 = vunpack.c.l.b16 %v299
    %v602 = vunpack.c.h.b16 %v299
    %v603 = vunpack.c.l.b16 %v300
    %v604 = vunpack.c.h.b16 %v300
    %v605 = vunpack.c.l.b16 %v301
    %v606 = vunpack.c.h.b16 %v301
    %v607 = vunpack.c.l.b16 %v302
    %v608 = vunpack.c.h.b16 %v302
    %v609 = vunpack.c.l.b16 %v303
    %v610 = vunpack.c.h.b16 %v303
    %v611 = vunpack.c.l.b16 %v304
    %v612 = vunpack.c.h.b16 %v304
    %v613 = vunpack.c.l.b16 %v305
    %v614 = vunpack.c.h.b16 %v305
    %v615 = vunpack.c.l.b16 %v306
    %v616 = vunpack.c.h.b16 %v306
    %v617 = vunpack.c.l.b16 %v307
    %v618 = vunpack.c.h.b16 %v307
    %v619 = vunpack.c.l.b16 %v308
    %v620 = vunpack.c.h.b16 %v308
    %v621 = vunpack.c.l.b16 %v309
    %v622 = vunpack.c.h.b16 %v309
    %v623 = vunpack.c.l.b16 %v310
    %v624 = vunpack.c.h.b16 %v310
    %v625 = vunpack.c.l.b16 %v311
    %v626 = vunpack.c.h.b16 %v311
    %v627 = vunpack.c.l.b16 %v312
    %v628 = vunpack.c.h.b16 %v312
    %v629 = vunpack.c.l.b16 %v313
    %v630 = vunpack.c.h.b16 %v313
    %v631 = vunpack.c.l.b16 %v314
    %v632 = vunpack.c.h.b16 %v314
    %v633 = vunpack.c.l.b16 %v315
    %v634 = vunpack.c.h.b16 %v315
    %v635 = vunpack.c.l.b16 %v316
    %v636 = vunpack.c.h.b16 %v316
    %v637 = vunpack.c.l.b16 %v317
    %v638 = vunpack.c.h.b16 %v317
    %v639 = vunpack.c.l.b16 %v318
    %v640 = vunpack.c.h.b16 %v318
    %v641 = vunpack.c.l.b16 %v319
    %v642 = vunpack.c.h.b16 %v319
    %v643 = vunpack.c.l.b16 %v320
    %v644 = vunpack.c.h.b16 %v320
    %v645 = vunpack.c.l.b16 %v321
    %v646 = vunpack.c.h.b16 %v321
    %v647 = vunpack.c.l.b16 %v322
    %v648 = vunpack.c.h.b16 %v322
    %v649 = vunpack.c.l.b16 %v323
    %v650 = vunpack.c.h.b16 %v323
    %v651 = vunpack.c.l.b16 %v324
    %v652 = vunpack.c.h.b16 %v324
    %v653 = vunpack.c.l.b16 %v325
    %v654 = vunpack.c.h.b16 %v325
    %v655 = vunpack.c.l.b16 %v326
    %v656 = vunpack.c.h.b16 %v326
    %v657 = vunpack.c.l.b16 %v327
    %v658 = vunpack.c.h.b16 %v327
    %v659 = vunpack.c.l.b16 %v328
    %v660 = vunpack.c.h.b16 %v328
    %v661 = vunpack.c.l.b16 %v329
    %v662 = vunpack.c.h.b16 %v329
    %v663 = vunpack.c.l.b16 %v330
    %v664 = vunpack.c.h.b16 %v330
    %v665 = vunpack.c.l.b16 %v331
    %v666 = vunpack.c.h.b16 %v331
    %v667 = vunpack.c.l.b16 %v332
    %v668 = vunpack.c.h.b16 %v332
    %v669 = vunpack.c.l.b16 %v333
    %v670 = vunpack.c.h.b16 %v333
    %v671 = vunpack.c.l.b16 %v334
    %v672 = vunpack.c.h.b16 %v334
    %v673 = vunpack.c.l.b16 %v335
    %v674 = vunpack.c.h.b16 %v335
    %v675 = vunpack.c.l.b16 %v336
    %v676 = vunpack.c.h.b16 %v336
    %v677 = vunpack.c.l.b16 %v337
    %v678 = vunpack.c.h.b16 %v337
    %v679 = vunpack.c.l.b16 %v338
    %v680 = vunpack.c.h.b16 %v338
    %v681 = vunpack.c.l.b16 %v339
    %v682 = vunpack.c.h.b16 %v339
    %v683 = vunpack.c.l.b16 %v340
    %v684 = vunpack.c.h.b16 %v340
    %v685 = vunpack.c.l.b16 %v341
    %v686 = vunpack.c.h.b16 %v341
    %v687 = vunpack.c.l.b16 %v342
    %v688 = vunpack.c.h.b16 %v342
    %v689 = vunpack.c.l.b16 %v343
    %v690 = vunpack.c.h.b16 %v343
    %v691 = vunpack.c.l.b16 %v344
    %v692 = vunpack.c.h.b16 %v344
    %v693 = vunpack.c.l.b16 %v345
    %v694 = vunpack.c.h.b16 %v345
    %v695 = vunpack.c.l.b16 %v346
    %v696 = vunpack.c.h.b16 %v346
    %v697 = vunpack.c.l.b16 %v347
    %v698 = vunpack.c.h.b16 %v347
    %v699 = vunpack.c.l.b16 %v348
    %v700 = vunpack.c.h.b16 %v348
    %v701 = vunpack.c.l.b16 %v349
    %v702 = vunpack.c.h.b16 %v349
    %v703 = vunpack.c.l.b16 %v350
    %v704 = vunpack.c.h.b16 %v350
    %v705 = vunpack.c.l.b16 %v351
    %v706 = vunpack.c.h.b16 %v351
    %v707 = vunpack.c.l.b16 %v352
    %v708 = vunpack.c.h.b16 %v352
    %v709 = vunpack.c.l.b16 %v353
    %v710 = vunpack.c.h.b16 %v353
    %v711 = vunpack.c.l.b16 %v354
    %v712 = vunpack.c.h.b16 %v354
    %v713 = vunpack.c.l.b16 %v355
    %v714 = vunpack.c.h.b16 %v355
    %v715 = vunpack.c.l.b16 %v356
    %v716 = vunpack.c.h.b16 %v356
    %v717 = vunpack.c.l.b16 %v357
    %v718 = vunpack.c.h.b16 %v357
    %v719 = vunpack.c.l.b16 %v358
    %v720 = vunpack.c.h.b16 %v358
    %v721 = vunpack.c.l.b16 %v359
    %v722 = vunpack.c.h.b16 %v359
    %v723 = vunpack.c.l.b16 %v360
    %v724 = vunpack.c.h.b16 %v360
    %v725 = vunpack.c.l.b16 %v361
    %v726 = vunpack.c.h.b16 %v361
    %v727 = vunpack.c.l.b16 %v362
    %v728 = vunpack.c.h.b16 %v362
    %v729 = vunpack.c.l.b16 %v363
    %v730 = vunpack.c.h.b16 %v363
    %v731 = vunpack.c.l.b16 %v364
    %v732 = vunpack.c.h.b16 %v364
    %v733 = vunpack.c.l.b16 %v365
    %v734 = vunpack.c.h.b16 %v365
    %v735 = vunpack.c.l.b16 %v366
    %v736 = vunpack.c.h.b16 %v366
    %v737 = vunpack.c.l.b16 %v367
    %v738 = vunpack.c.h.b16 %v367
    %v739 = vunpack.c.l.b16 %v368
    %v740 = vunpack.c.h.b16 %v368
    %v741 = vunpack.c.l.b16 %v369
    %v742 = vunpack.c.h.b16 %v369
    %v743 = vunpack.c.l.b16 %v370
    %v744 = vunpack.c.h.b16 %v370
    %v745 = vunpack.c.l.b16 %v371
    %v746 = vunpack.c.h.b16 %v371
    %v747 = vunpack.c.l.b16 %v372
    %v748 = vunpack.c.h.b16 %v372
    %v749 = vunpack.c.l.b16 %v373
    %v750 = vunpack.c.h.b16 %v373
    %v751 = vunpack.c.l.b16 %v374
    %v752 = vunpack.c.h.b16 %v374
    %v753 = vunpack.c.l.b16 %v375
    %v754 = vunpack.c.h.b16 %v375
    %v755 = vunpack.c.l.b16 %v376
    %v756 = vunpack.c.h.b16 %v376
    %v757 = vunpack.c.l.b16 %v377
    %v758 = vunpack.c.h.b16 %v377
    %v759 = vunpack.c.l.b16 %v378
    %v760 = vunpack.c.h.b16 %v378
    %v761 = vunpack.c.l.b16 %v379
    %v762 = vunpack.c.h.b16 %v379
    %v763 = vunpack.c.l.b16 %v380
    %v764 = vunpack.c.h.b16 %v380
    %v765 = vunpack.c.l.b16 %v381
    %v766 = vunpack.c.h.b16 %v381
    %v767 = vunpack.c.l.b16 %v382
    %v768 = vunpack.c.h.b16 %v382
    %v769 = vunpack.c.l.b16 %v383
    %v770 = vunpack.c.h.b16 %v383
    %v771 = vunpack.c.l.b16 %v384
    %v772 = vunpack.c.h.b16 %v384
    %v773 = vunpack.c.l.b16 %v385
    %v774 = vunpack.c.h.b16 %v385
    %v775 = vunpack.c.l.b16 %v386
    %v776 = vunpack.c.h.b16 %v386
    %v777 = vunpack.c.l.b16 %v387
    %v778 = vunpack.c.h.b16 %v387
    %v779 = vunpack.c.l.b16 %v388
    %v780 = vunpack.c.h.b16 %v388
    %v781 = vunpack.c.l.b16 %v389
    %v782 = vunpack.c.h.b16 %v389
    %v783 = vunpack.c.l.b16 %v390
    %v784 = vunpack.c.h.b16 %v390
    %v785 = vunpack.c.l.b16 %v391
    %v786 = vunpack.c.h.b16 %v391
    %v787 = vunpack.c.l.b16 %v392
    %v788 = vunpack.c.h.b16 %v392
    %v789 = vunpack.c.l.b16 %v393
    %v790 = vunpack.c.h.b16 %v393
    %v791 = vunpack.c.l.b16 %v394
    %v792 = vunpack.c.h.b16 %v394
    %v793 = vunpack.c.l.b16 %v395
    %v794 = vunpack.c.h.b16 %v395
    %v795 = vunpack.c.l.b16 %v396
    %v796 = vunpack.c.h.b16 %v396
    %v797 = vunpack.c.l.b16 %v397
    %v798 = vunpack.c.h.b16 %v397
    %v799 = vunpack.c.l.b16 %v398
    %v800 = vunpack.c.h.b16 %v398
    %v801 = vunpack.c.l.b16 %v399
    %v802 = vunpack.c.h.b16 %v399
    %v803 = vunpack.c.l.b16 %v400
    %v804 = vunpack.c.h.b16 %v400
    %v805 = vunpack.c.l.b16 %v401
    %v806 = vunpack.c.h.b16 %v401
    %v807 = vunpack.c.l.b16 %v402
    %v808 = vunpack.c.h.b16 %v402
    %v809 = vpack.c.b16 %v557, %v553
    %v810 = vpack.c.b16 %v558, %v554
    %v811 = vpack.c.b16 %v559, %v555
    %v812 = vpack.c.b16 %v560, %v556
    %v813 = vpack.c.b16 %v565, %v561
    %v814 = vpack.c.b16 %v566, %v562
    %v815 = vpack.c.b16 %v567, %v563
    %v816 = vpack.c.b16 %v568, %v564
    %v817 = vpack.c.b16 %v573, %v569
    %v818 = vpack.c.b16 %v574, %v570
    %v819 = vpack.c.b16 %v575, %v571
    %v820 = vpack.c.b16 %v576, %v572
    %v821 = vpack.c.b16 %v581, %v577
    %v822 = vpack.c.b16 %v582, %v578
    %v823 = vpack.c.b16 %v583, %v579
    %v824 = vpack.c.b16 %v584, %v580
    %v825 = vpack.c.b16 %v589, %v585
    %v826 = vpack.c.b16 %v590, %v586
    %v827 = vpack.c.b16 %v591, %v587
    %v828 = vpack.c.b16 %v592, %v588
    %v829 = vpack.c.b16 %v597, %v593
    %v830 = vpack.c.b16 %v598, %v594
    %v831 = vpack.c.b16 %v599, %v595
    %v832 = vpack.c.b16 %v600, %v596
    %v833 = vpack.c.b16 %v605, %v601
    %v834 = vpack.c.b16 %v606, %v602
    %v835 = vpack.c.b16 %v607, %v603
    %v836 = vpack.c.b16 %v608, %v604
    %v837 = vpack.c.b16 %v613, %v609
    %v838 = vpack.c.b16 %v614, %v610
    %v839 = vpack.c.b16 %v615, %v611
    %v840 = vpack.c.b16 %v616, %v612
    %v841 = vpack.c.b16 %v621, %v617
    %v842 = vpack.c.b16 %v622, %v618
    %v843 = vpack.c.b16 %v623, %v619
    %v844 = vpack.c.b16 %v624, %v620
    %v845 = vpack.c.b16 %v629, %v625
    %v846 = vpack.c.b16 %v630, %v626
    %v847 = vpack.c.b16 %v631, %v627
    %v848 = vpack.c.b16 %v632, %v628
    %v849 = vpack.c.b16 %v637, %v633
    %v850 = vpack.c.b16 %v638, %v634
    %v851 = vpack.c.b16 %v639, %v635
    %v852 = vpack.c.b16 %v640, %v636
    %v853 = vpack.c.b16 %v645, %v641
    %v854 = vpack.c.b16 %v646, %v642
    %v855 = vpack.c.b16 %v647, %v643
    %v856 = vpack.c.b16 %v648, %v644
    %v857 = vpack.c.b16 %v653, %v649
    %v858 = vpack.c.b16 %v654, %v650
    %v859 = vpack.c.b16 %v655, %v651
    %v860 = vpack.c.b16 %v656, %v652
    %v861 = vpack.c.b16 %v661, %v657
    %v862 = vpack.c.b16 %v662, %v658
    %v863 = vpack.c.b16 %v663, %v659
    %v864 = vpack.c.b16 %v664, %v660
    %v865 = vpack.c.b16 %v669, %v665
    %v866 = vpack.c.b16 %v670, %v666
    %v867 = vpack.c.b16 %v671, %v667
    %v868 = vpack.c.b16 %v672, %v668
    %v869 = vpack.c.b16 %v677, %v673
    %v870 = vpack.c.b16 %v678, %v674
    %v871 = vpack.c.b16 %v679, %v675
    %v872 = vpack.c.b16 %v680, %v676
    %v873 = vpack.c.b16 %v685, %v681
    %v874 = vpack.c.b16 %v686, %v682
    %v875 = vpack.c.b16 %v687, %v683
    %v876 = vpack.c.b16 %v688, %v684
    %v877 = vpack.c.b16 %v693, %v689
    %v878 = vpack.c.b16 %v694, %v690
    %v879 = vpack.c.b16 %v695, %v691
    %v880 = vpack.c.b16 %v696, %v692
    %v881 = vpack.c.b16 %v701, %v697
    %v882 = vpack.c.b16 %v702, %v698
    %v883 = vpack.c.b16 %v703, %v699
    %v884 = vpack.c.b16 %v704, %v700
    %v885 = vpack.c.b16 %v709, %v705
    %v886 = vpack.c.b16 %v710, %v706
    %v887 = vpack.c.b16 %v711, %v707
    %v888 = vpack.c.b16 %v712, %v708
    %v889 = vpack.c.b16 %v717, %v713
    %v890 = vpack.c.b16 %v718, %v714
    %v891 = vpack.c.b16 %v719, %v715
    %v892 = vpack.c.b16 %v720, %v716
    %v893 = vpack.c.b16 %v725, %v721
    %v894 = vpack.c.b16 %v726, %v722
    %v895 = vpack.c.b16 %v727, %v723
    %v896 = vpack.c.b16 %v728, %v724
    %v897 = vpack.c.b16 %v733, %v729
    %v898 = vpack.c.b16 %v734, %v730
    %v899 = vpack.c.b16 %v735, %v731
    %v900 = vpack.c.b16 %v736, %v732
    %v901 = vpack.c.b16 %v741, %v737
    %v902 = vpack.c.b16 %v742, %v738
    %v903 = vpack.c.b16 %v743, %v739
    %v904 = vpack.c.b16 %v744, %v740
    %v905 = vpack.c.b16 %v749, %v745
    %v906 = vpack.c.b16 %v750, %v746
    %v907 = vpack.c.b16 %v751, %v747
    %v908 = vpack.c.b16 %v752, %v748
    %v909 = vpack.c.b16 %v757, %v753
    %v910 = vpack.c.b16 %v758, %v754
    %v911 = vpack.c.b16 %v759, %v755
    %v912 = vpack.c.b16 %v760, %v756
    %v913 = vpack.c.b16 %v765, %v761
    %v914 = vpack.c.b16 %v766, %v762
    %v915 = vpack.c.b16 %v767, %v763
    %v916 = vpack.c.b16 %v768, %v764
    %v917 = vpack.c.b16 %v773, %v769
    %v918 = vpack.c.b16 %v774, %v770
    %v919 = vpack.c.b16 %v775, %v771
    %v920 = vpack.c.b16 %v776, %v772
    %v921 = vpack.c.b16 %v781, %v777
    %v922 = vpack.c.b16 %v782, %v778
    %v923 = vpack.c.b16 %v783, %v779
    %v924 = vpack.c.b16 %v784, %v780
    %v925 = vpack.c.b16 %v789, %v785
    %v926 = vpack.c.b16 %v790, %v786
    %v927 = vpack.c.b16 %v791, %v787
    %v928 = vpack.c.b16 %v792, %v788
    %v929 = vpack.c.b16 %v797, %v793
    %v930 = vpack.c.b16 %v798, %v794
    %v931 = vpack.c.b16 %v799, %v795
    %v932 = vpack.c.b16 %v800, %v796
    %v933 = vpack.c.b16 %v805, %v801
    %v934 = vpack.c.b16 %v806, %v802
    %v935 = vpack.c.b16 %v807, %v803
    %v936 = vpack.c.b16 %v808, %v804
    %1065 = vmatprep.subr.bf16.mxu0 %v838
    %1066 = vmatpush1.bf16.msra.mxu0 %v837
    %1067 = vmatprep.subr.bf16.mxu0 %v834
    %1068 = vmatpush1.bf16.msra.mxu0 %v833
    %1069 = vmatprep.subr.bf16.mxu0 %v830
    %1070 = vmatpush1.bf16.msra.mxu0 %v829
    %1071 = vmatprep.subr.bf16.mxu0 %v826
    %1072 = vmatpush1.bf16.msra.mxu0 %v825
    %1073 = vmatprep.subr.bf16.mxu0 %v822
    %1074 = vmatpush1.bf16.msra.mxu0 %v821
    %1075 = vmatprep.subr.bf16.mxu0 %v818
    %1076 = vmatpush1.bf16.msra.mxu0 %v817
    %1077 = vmatprep.subr.bf16.mxu0 %v814
    %1078 = vmatpush1.bf16.msra.mxu0 %v813
    %1079 = vmatprep.subr.bf16.mxu0 %v810
    %1080 = vmatpush1.bf16.msra.mxu0 %v809
    %1081 = vmatprep.subr.bf16.mxu0 %v870
    %1082 = vmatpush2.bf16.msra.mxu0 %v869
    %1083 = vmatprep.subr.bf16.mxu0 %v866
    %1084 = vmatpush2.bf16.msra.mxu0 %v865
    %1085 = vmatprep.subr.bf16.mxu0 %v862
    %1086 = vmatpush2.bf16.msra.mxu0 %v861
    %1087 = vmatprep.subr.bf16.mxu0 %v858
    %1088 = vmatpush2.bf16.msra.mxu0 %v857
    %1089 = vmatprep.subr.bf16.mxu0 %v854
    %1090 = vmatpush2.bf16.msra.mxu0 %v853
    %1091 = vmatprep.subr.bf16.mxu0 %v850
    %1092 = vmatpush2.bf16.msra.mxu0 %v849
    %1093 = vmatprep.subr.bf16.mxu0 %v846
    %1094 = vmatpush2.bf16.msra.mxu0 %v845
    %1095 = vmatprep.subr.bf16.mxu0 %v842
    %1096 = vmatpush2.bf16.msra.mxu0 %v841
    %1097 = vmatprep.mubr.bf16.mxu0 %v272
    %1098 = vmatmul.mubr.bf16.gmra.mxu0 %v271
    %v1099 = vpop.f32.mrf.mxu0
    %v1100 = vadd.f32 %v408, %v1099
    %v1101 = vpop.f32.mrf.mxu0
    %v1102 = vadd.f32 %v412, %v1101
    %v1103 = vpop.f32.mrf.mxu0
    %v1104 = vpop.f32.mrf.mxu0
    %1105 = vdwg.mxu0
    %1106 = vmatprep.subr.bf16.mxu0 %v902
    %1107 = vmatpush1.bf16.msra.mxu0 %v901
    %1108 = vmatprep.subr.bf16.mxu0 %v898
    %1109 = vmatpush1.bf16.msra.mxu0 %v897
    %1110 = vmatprep.subr.bf16.mxu0 %v894
    %1111 = vmatpush1.bf16.msra.mxu0 %v893
    %1112 = vmatprep.subr.bf16.mxu0 %v890
    %1113 = vmatpush1.bf16.msra.mxu0 %v889
    %1114 = vmatprep.subr.bf16.mxu0 %v886
    %1115 = vmatpush1.bf16.msra.mxu0 %v885
    %1116 = vmatprep.subr.bf16.mxu0 %v882
    %1117 = vmatpush1.bf16.msra.mxu0 %v881
    %1118 = vmatprep.subr.bf16.mxu0 %v878
    %1119 = vmatpush1.bf16.msra.mxu0 %v877
    %1120 = vmatprep.subr.bf16.mxu0 %v874
    %1121 = vmatpush1.bf16.msra.mxu0 %v873
    %1122 = vmatprep.subr.bf16.mxu0 %v934
    %1123 = vmatpush2.bf16.msra.mxu0 %v933
    %1124 = vmatprep.subr.bf16.mxu0 %v930
    %1125 = vmatpush2.bf16.msra.mxu0 %v929
    %1126 = vmatprep.subr.bf16.mxu0 %v926
    %1127 = vmatpush2.bf16.msra.mxu0 %v925
    %1128 = vmatprep.subr.bf16.mxu0 %v922
    %1129 = vmatpush2.bf16.msra.mxu0 %v921
    %1130 = vmatprep.subr.bf16.mxu0 %v918
    %1131 = vmatpush2.bf16.msra.mxu0 %v917
    %1132 = vmatprep.subr.bf16.mxu0 %v914
    %1133 = vmatpush2.bf16.msra.mxu0 %v913
    %1134 = vmatprep.subr.bf16.mxu0 %v910
    %1135 = vmatpush2.bf16.msra.mxu0 %v909
    %1136 = vmatprep.subr.bf16.mxu0 %v906
    %1137 = vmatpush2.bf16.msra.mxu0 %v905
    %1138 = vmatprep.mubr.bf16.mxu0 %v274
    %1139 = vmatmul.mubr.bf16.gmra.mxu0 %v273
    %v1140 = vpop.f32.mrf.mxu0
    %v1141 = vadd.f32 %v1100, %v1140
    %v1142 = vpop.f32.mrf.mxu0
    %v1143 = vadd.f32 %v1102, %v1142
    %v1144 = vpop.f32.mrf.mxu0
    %v1145 = vpop.f32.mrf.mxu0
    %1146 = vdwg.mxu0
    %1147 = vmatprep.subr.bf16.mxu0 %v840
    %1148 = vmatpush1.bf16.msra.mxu0 %v839
    %1149 = vmatprep.subr.bf16.mxu0 %v836
    %1150 = vmatpush1.bf16.msra.mxu0 %v835
    %1151 = vmatprep.subr.bf16.mxu0 %v832
    %1152 = vmatpush1.bf16.msra.mxu0 %v831
    %1153 = vmatprep.subr.bf16.mxu0 %v828
    %1154 = vmatpush1.bf16.msra.mxu0 %v827
    %1155 = vmatprep.subr.bf16.mxu0 %v824
    %1156 = vmatpush1.bf16.msra.mxu0 %v823
    %1157 = vmatprep.subr.bf16.mxu0 %v820
    %1158 = vmatpush1.bf16.msra.mxu0 %v819
    %1159 = vmatprep.subr.bf16.mxu0 %v816
    %1160 = vmatpush1.bf16.msra.mxu0 %v815
    %1161 = vmatprep.subr.bf16.mxu0 %v812
    %1162 = vmatpush1.bf16.msra.mxu0 %v811
    %1163 = vmatprep.subr.bf16.mxu0 %v872
    %1164 = vmatpush2.bf16.msra.mxu0 %v871
    %1165 = vmatprep.subr.bf16.mxu0 %v868
    %1166 = vmatpush2.bf16.msra.mxu0 %v867
    %1167 = vmatprep.subr.bf16.mxu0 %v864
    %1168 = vmatpush2.bf16.msra.mxu0 %v863
    %1169 = vmatprep.subr.bf16.mxu0 %v860
    %1170 = vmatpush2.bf16.msra.mxu0 %v859
    %1171 = vmatprep.subr.bf16.mxu0 %v856
    %1172 = vmatpush2.bf16.msra.mxu0 %v855
    %1173 = vmatprep.subr.bf16.mxu0 %v852
    %1174 = vmatpush2.bf16.msra.mxu0 %v851
    %1175 = vmatprep.subr.bf16.mxu0 %v848
    %1176 = vmatpush2.bf16.msra.mxu0 %v847
    %1177 = vmatprep.subr.bf16.mxu0 %v844
    %1178 = vmatpush2.bf16.msra.mxu0 %v843
    %1179 = vmatprep.mubr.bf16.mxu0 %v272
    %1180 = vmatmul.mubr.bf16.gmra.mxu0 %v271
    %v1181 = vpop.f32.mrf.mxu0
    %v1182 = vadd.f32 %v416, %v1181
    %v1183 = vpop.f32.mrf.mxu0
    %v1184 = vadd.f32 %v420, %v1183
    %v1185 = vpop.f32.mrf.mxu0
    %v1186 = vpop.f32.mrf.mxu0
    %1187 = vdwg.mxu0
    %1188 = vmatprep.subr.bf16.mxu0 %v904
    %1189 = vmatpush1.bf16.msra.mxu0 %v903
    %1190 = vmatprep.subr.bf16.mxu0 %v900
    %1191 = vmatpush1.bf16.msra.mxu0 %v899
    %1192 = vmatprep.subr.bf16.mxu0 %v896
    %1193 = vmatpush1.bf16.msra.mxu0 %v895
    %1194 = vmatprep.subr.bf16.mxu0 %v892
    %1195 = vmatpush1.bf16.msra.mxu0 %v891
    %1196 = vmatprep.subr.bf16.mxu0 %v888
    %1197 = vmatpush1.bf16.msra.mxu0 %v887
    %1198 = vmatprep.subr.bf16.mxu0 %v884
    %1199 = vmatpush1.bf16.msra.mxu0 %v883
    %1200 = vmatprep.subr.bf16.mxu0 %v880
    %1201 = vmatpush1.bf16.msra.mxu0 %v879
    %1202 = vmatprep.subr.bf16.mxu0 %v876
    %1203 = vmatpush1.bf16.msra.mxu0 %v875
    %1204 = vmatprep.subr.bf16.mxu0 %v936
    %1205 = vmatpush2.bf16.msra.mxu0 %v935
    %1206 = vmatprep.subr.bf16.mxu0 %v932
    %1207 = vmatpush2.bf16.msra.mxu0 %v931
    %1208 = vmatprep.subr.bf16.mxu0 %v928
    %1209 = vmatpush2.bf16.msra.mxu0 %v927
    %1210 = vmatprep.subr.bf16.mxu0 %v924
    %1211 = vmatpush2.bf16.msra.mxu0 %v923
    %1212 = vmatprep.subr.bf16.mxu0 %v920
    %1213 = vmatpush2.bf16.msra.mxu0 %v919
    %1214 = vmatprep.subr.bf16.mxu0 %v916
    %1215 = vmatpush2.bf16.msra.mxu0 %v915
    %1216 = vmatprep.subr.bf16.mxu0 %v912
    %1217 = vmatpush2.bf16.msra.mxu0 %v911
    %1218 = vmatprep.subr.bf16.mxu0 %v908
    %1219 = vmatpush2.bf16.msra.mxu0 %v907
    %1220 = vmatprep.mubr.bf16.mxu0 %v274
    %1221 = vmatmul.mubr.bf16.gmra.mxu0 %v273
    %v1222 = vpop.f32.mrf.mxu0
    %v1223 = vadd.f32 %v1182, %v1222
    %v1224 = vpop.f32.mrf.mxu0
    %v1225 = vadd.f32 %v1184, %v1224
    %v1226 = vpop.f32.mrf.mxu0
    %v1227 = vpop.f32.mrf.mxu0
    %1228 = vdwg.mxu0
    %v1229 = vmax.f32 %v1141, 0.0
    %v1230 = vmax.f32 %v1143, 0.0
    %v1231 = vmax.f32 %v1223, 0.0
    %v1232 = vmax.f32 %v1225, 0.0
    %v1233 = vld [vmem:[#allocation11] sm:$0xf]
    %v1235 = vlaneseq
    %v1236 = vshrl.u32 %v1235, 7
    %v1237 = vsub.s32 0, %v1236
    %v1238 = vrot.slane %v1233, %v1237
    %v1239 = vlaneseq
    %v1240 = vshrl.u32 %v1239, 7
    %v1241 = vsub.s32 1, %v1240
    %v1242 = vrot.slane %v1233, %v1241
    %v1243 = vlaneseq
    %v1244 = vshrl.u32 %v1243, 7
    %v1245 = vsub.s32 2, %v1244
    %v1246 = vrot.slane %v1233, %v1245
    %v1247 = vlaneseq
    %v1248 = vshrl.u32 %v1247, 7
    %v1249 = vsub.s32 3, %v1248
    %v1250 = vrot.slane %v1233, %v1249
    %v1255 = vmul.f32 %v1229, %v1238
    %v1256 = vmul.f32 %v1230, %v1242
    %v1257 = vmul.f32 %v1231, %v1246
    %v1258 = vmul.f32 %v1232, %v1250
    %vm1259 = vcmask 1041408
    %v1260 = vsel %vm1259, %v1255, 0.0
    %v1261 = vsel %vm1259, %v1256, 0.0
    %v1262 = vadd.f32 %v1260, %v1261
    %v1263 = vsel %vm1259, %v1257, 0.0
    %v1264 = vadd.f32 %v1262, %v1263
    %v1265 = vsel %vm1259, %v1258, 0.0
    %v1266 = vadd.f32 %v1264, %v1265
    %1267 = vadd.xlane.f32.xlu0 %v1266
    %v1268 = vpop.xlane.xlu0 %1267
    %v1269 = vld [vmem:[%s6] sm:$0x1]
    %v1271 = vlaneseq
    %v1272 = vshrl.u32 %v1271, 7
    %v1273 = vsub.s32 0, %v1272
    %v1274 = vrot.slane %v1269, %v1273
    %v1276 = vadd.f32 %v1268, %v1274
    %v1277 = vmul.f32 %v1276, 0.01
    %v1278 = vtanh.pop %v1277
    %v1279 = vmul.f32 %v1278, 100.0
    %s1280 = scalar_lea.vmem [#allocation5], 48
    %v1281 = vld [vmem:[%s1280] sm:$0xff]
    %v1282 = vld [vmem:[%s1280 + $0x8] sm:$0xff]
    %v1283 = vld [vmem:[%s1280 + $0x10] sm:$0xff]
    %v1284 = vld [vmem:[%s1280 + $0x18] sm:$0xff]
    %v1285 = vld [vmem:[%s1280 + $0x20] sm:$0xff]
    %v1286 = vld [vmem:[%s1280 + $0x28] sm:$0xff]
    %s1287 = scalar_lea.vmem [#allocation7], 4
    %v1288 = vld [vmem:[%s1287] sm:$0xf]
    %v1290 = vlaneseq
    %v1291 = vshrl.u32 %v1290, 7
    %v1292 = vsub.s32 0, %v1291
    %v1293 = vrot.slane %v1288, %v1292
    %v1294 = vlaneseq
    %v1295 = vshrl.u32 %v1294, 7
    %v1296 = vsub.s32 1, %v1295
    %v1297 = vrot.slane %v1288, %v1296
    %v1298 = vlaneseq
    %v1299 = vshrl.u32 %v1298, 7
    %v1300 = vsub.s32 2, %v1299
    %v1301 = vrot.slane %v1288, %v1300
    %v1302 = vlaneseq
    %v1303 = vshrl.u32 %v1302, 7
    %v1304 = vsub.s32 3, %v1303
    %v1305 = vrot.slane %v1288, %v1304
    %v1316 = vunpack.c.l.b16 %v1281
    %v1317 = vunpack.c.h.b16 %v1281
    %v1318 = vunpack.c.l.b16 %v1282
    %v1319 = vunpack.c.h.b16 %v1282
    %v1320 = vunpack.c.l.b16 %v1283
    %v1321 = vunpack.c.h.b16 %v1283
    %v1322 = vunpack.c.l.b16 %v1284
    %v1323 = vunpack.c.h.b16 %v1284
    %v1324 = vunpack.c.l.b16 %v1285
    %v1325 = vunpack.c.h.b16 %v1285
    %v1326 = vunpack.c.l.b16 %v1286
    %v1327 = vunpack.c.h.b16 %v1286
    %v1328 = vpack.c.b16 %v1320, %v1316
    %v1329 = vpack.c.b16 %v1321, %v1317
    %v1330 = vpack.c.b16 %v1322, %v1318
    %v1331 = vpack.c.b16 %v1323, %v1319
    %v1332 = vpack.c.b16 %v1324, %v1324
    %v1333 = vpack.c.b16 %v1325, %v1325
    %v1334 = vpack.c.b16 %v1326, %v1326
    %v1335 = vpack.c.b16 %v1327, %v1327
    %v1341 = vsel %vm172, %v1332, 0
    %v1344 = vsel %vm172, %v1333, 0
    %v1347 = vsel %vm172, %v1334, 0
    %v1350 = vsel %vm172, %v1335, 0
    %1352 = vmatprep.subr.bf16.mxu0 0
    %1353 = vmatpush1.bf16.msra.mxu0 0
    %1354 = vmatprep.subr.bf16.mxu0 0
    %1355 = vmatpush1.bf16.msra.mxu0 0
    %1356 = vmatprep.subr.bf16.mxu0 0
    %1357 = vmatpush1.bf16.msra.mxu0 0
    %1358 = vmatprep.subr.bf16.mxu0 0
    %1359 = vmatpush1.bf16.msra.mxu0 0
    %1360 = vmatprep.subr.bf16.mxu0 0
    %1361 = vmatpush1.bf16.msra.mxu0 0
    %1362 = vmatprep.subr.bf16.mxu0 0
    %1363 = vmatpush1.bf16.msra.mxu0 0
    %1364 = vmatprep.subr.bf16.mxu0 %v1344
    %1365 = vmatpush1.bf16.msra.mxu0 %v1341
    %1366 = vmatprep.subr.bf16.mxu0 %v1329
    %1367 = vmatpush1.bf16.msra.mxu0 %v1328
    %1368 = vmatprep.subr.bf16.mxu0 0
    %1369 = vmatpush2.bf16.msra.mxu0 0
    %1370 = vmatprep.subr.bf16.mxu0 0
    %1371 = vmatpush2.bf16.msra.mxu0 0
    %1372 = vmatprep.subr.bf16.mxu0 0
    %1373 = vmatpush2.bf16.msra.mxu0 0
    %1374 = vmatprep.subr.bf16.mxu0 0
    %1375 = vmatpush2.bf16.msra.mxu0 0
    %1376 = vmatprep.subr.bf16.mxu0 0
    %1377 = vmatpush2.bf16.msra.mxu0 0
    %1378 = vmatprep.subr.bf16.mxu0 0
    %1379 = vmatpush2.bf16.msra.mxu0 0
    %1380 = vmatprep.subr.bf16.mxu0 0
    %1381 = vmatpush2.bf16.msra.mxu0 0
    %1382 = vmatprep.subr.bf16.mxu0 0
    %1383 = vmatpush2.bf16.msra.mxu0 0
    %1384 = vmatprep.mubr.bf16.mxu0 0
    %1385 = vmatmul.mubr.bf16.gmra.mxu0 %v170
    %v1386 = vpop.f32.mrf.mxu0
    %v1387 = vadd.f32 %v1293, %v1386
    %v1388 = vpop.f32.mrf.mxu0
    %v1389 = vadd.f32 %v1297, %v1388
    %v1390 = vpop.f32.mrf.mxu0
    %v1391 = vpop.f32.mrf.mxu0
    %1392 = vdwg.mxu0
    %1393 = vmatprep.subr.bf16.mxu0 0
    %1394 = vmatpush1.bf16.msra.mxu0 0
    %1395 = vmatprep.subr.bf16.mxu0 0
    %1396 = vmatpush1.bf16.msra.mxu0 0
    %1397 = vmatprep.subr.bf16.mxu0 0
    %1398 = vmatpush1.bf16.msra.mxu0 0
    %1399 = vmatprep.subr.bf16.mxu0 0
    %1400 = vmatpush1.bf16.msra.mxu0 0
    %1401 = vmatprep.subr.bf16.mxu0 0
    %1402 = vmatpush1.bf16.msra.mxu0 0
    %1403 = vmatprep.subr.bf16.mxu0 0
    %1404 = vmatpush1.bf16.msra.mxu0 0
    %1405 = vmatprep.subr.bf16.mxu0 %v1350
    %1406 = vmatpush1.bf16.msra.mxu0 %v1347
    %1407 = vmatprep.subr.bf16.mxu0 %v1331
    %1408 = vmatpush1.bf16.msra.mxu0 %v1330
    %1409 = vmatprep.subr.bf16.mxu0 0
    %1410 = vmatpush2.bf16.msra.mxu0 0
    %1411 = vmatprep.subr.bf16.mxu0 0
    %1412 = vmatpush2.bf16.msra.mxu0 0
    %1413 = vmatprep.subr.bf16.mxu0 0
    %1414 = vmatpush2.bf16.msra.mxu0 0
    %1415 = vmatprep.subr.bf16.mxu0 0
    %1416 = vmatpush2.bf16.msra.mxu0 0
    %1417 = vmatprep.subr.bf16.mxu0 0
    %1418 = vmatpush2.bf16.msra.mxu0 0
    %1419 = vmatprep.subr.bf16.mxu0 0
    %1420 = vmatpush2.bf16.msra.mxu0 0
    %1421 = vmatprep.subr.bf16.mxu0 0
    %1422 = vmatpush2.bf16.msra.mxu0 0
    %1423 = vmatprep.subr.bf16.mxu0 0
    %1424 = vmatpush2.bf16.msra.mxu0 0
    %1425 = vmatprep.mubr.bf16.mxu0 0
    %1426 = vmatmul.mubr.bf16.gmra.mxu0 %v170
    %v1427 = vpop.f32.mrf.mxu0
    %v1428 = vadd.f32 %v1301, %v1427
    %v1429 = vpop.f32.mrf.mxu0
    %v1430 = vadd.f32 %v1305, %v1429
    %v1431 = vpop.f32.mrf.mxu0
    %v1432 = vpop.f32.mrf.mxu0
    %1433 = vdwg.mxu0
    %v1434 = vmax.f32 %v1387, 0.0
    %v1435 = vmax.f32 %v1389, 0.0
    %v1436 = vmax.f32 %v1428, 0.0
    %v1437 = vmax.f32 %v1430, 0.0
    %v1438 = vpack.c.bf16 %v1434, %v1434
    %v1439 = vpack.c.bf16 %v1435, %v1435
    %v1440 = vpack.c.bf16 %v1436, %v1436
    %v1441 = vpack.c.bf16 %v1437, %v1437
    %s1442 = scalar_lea.vmem [#allocation8], 1024
    %v1443 = vld [vmem:[%s1442] sm:$0xff]
    %v1444 = vld [vmem:[%s1442 + $0x8] sm:$0xff]
    %v1445 = vld [vmem:[%s1442 + $0x10] sm:$0xff]
    %v1446 = vld [vmem:[%s1442 + $0x18] sm:$0xff]
    %v1447 = vld [vmem:[%s1442 + $0x20] sm:$0xff]
    %v1448 = vld [vmem:[%s1442 + $0x28] sm:$0xff]
    %v1449 = vld [vmem:[%s1442 + $0x30] sm:$0xff]
    %v1450 = vld [vmem:[%s1442 + $0x38] sm:$0xff]
    %v1451 = vld [vmem:[%s1442 + $0x40] sm:$0xff]
    %v1452 = vld [vmem:[%s1442 + $0x48] sm:$0xff]
    %v1453 = vld [vmem:[%s1442 + $0x50] sm:$0xff]
    %v1454 = vld [vmem:[%s1442 + $0x58] sm:$0xff]
    %v1455 = vld [vmem:[%s1442 + $0x60] sm:$0xff]
    %v1456 = vld [vmem:[%s1442 + $0x68] sm:$0xff]
    %v1457 = vld [vmem:[%s1442 + $0x70] sm:$0xff]
    %v1458 = vld [vmem:[%s1442 + $0x78] sm:$0xff]
    %v1459 = vld [vmem:[%s1442 + $0x80] sm:$0xff]
    %v1460 = vld [vmem:[%s1442 + $0x88] sm:$0xff]
    %v1461 = vld [vmem:[%s1442 + $0x90] sm:$0xff]
    %v1462 = vld [vmem:[%s1442 + $0x98] sm:$0xff]
    %v1463 = vld [vmem:[%s1442 + $0xa0] sm:$0xff]
    %v1464 = vld [vmem:[%s1442 + $0xa8] sm:$0xff]
    %v1465 = vld [vmem:[%s1442 + $0xb0] sm:$0xff]
    %v1466 = vld [vmem:[%s1442 + $0xb8] sm:$0xff]
    %v1467 = vld [vmem:[%s1442 + $0xc0] sm:$0xff]
    %v1468 = vld [vmem:[%s1442 + $0xc8] sm:$0xff]
    %v1469 = vld [vmem:[%s1442 + $0xd0] sm:$0xff]
    %v1470 = vld [vmem:[%s1442 + $0xd8] sm:$0xff]
    %v1471 = vld [vmem:[%s1442 + $0xe0] sm:$0xff]
    %v1472 = vld [vmem:[%s1442 + $0xe8] sm:$0xff]
    %v1473 = vld [vmem:[%s1442 + $0xf0] sm:$0xff]
    %v1474 = vld [vmem:[%s1442 + $0xf8] sm:$0xff]
    %v1475 = vld [vmem:[%s1442 + $0x100] sm:$0xff]
    %v1476 = vld [vmem:[%s1442 + $0x108] sm:$0xff]
    %v1477 = vld [vmem:[%s1442 + $0x110] sm:$0xff]
    %v1478 = vld [vmem:[%s1442 + $0x118] sm:$0xff]
    %v1479 = vld [vmem:[%s1442 + $0x120] sm:$0xff]
    %v1480 = vld [vmem:[%s1442 + $0x128] sm:$0xff]
    %v1481 = vld [vmem:[%s1442 + $0x130] sm:$0xff]
    %v1482 = vld [vmem:[%s1442 + $0x138] sm:$0xff]
    %v1483 = vld [vmem:[%s1442 + $0x140] sm:$0xff]
    %v1484 = vld [vmem:[%s1442 + $0x148] sm:$0xff]
    %v1485 = vld [vmem:[%s1442 + $0x150] sm:$0xff]
    %v1486 = vld [vmem:[%s1442 + $0x158] sm:$0xff]
    %v1487 = vld [vmem:[%s1442 + $0x160] sm:$0xff]
    %v1488 = vld [vmem:[%s1442 + $0x168] sm:$0xff]
    %v1489 = vld [vmem:[%s1442 + $0x170] sm:$0xff]
    %v1490 = vld [vmem:[%s1442 + $0x178] sm:$0xff]
    %v1491 = vld [vmem:[%s1442 + $0x180] sm:$0xff]
    %v1492 = vld [vmem:[%s1442 + $0x188] sm:$0xff]
    %v1493 = vld [vmem:[%s1442 + $0x190] sm:$0xff]
    %v1494 = vld [vmem:[%s1442 + $0x198] sm:$0xff]
    %v1495 = vld [vmem:[%s1442 + $0x1a0] sm:$0xff]
    %v1496 = vld [vmem:[%s1442 + $0x1a8] sm:$0xff]
    %v1497 = vld [vmem:[%s1442 + $0x1b0] sm:$0xff]
    %v1498 = vld [vmem:[%s1442 + $0x1b8] sm:$0xff]
    %v1499 = vld [vmem:[%s1442 + $0x1c0] sm:$0xff]
    %v1500 = vld [vmem:[%s1442 + $0x1c8] sm:$0xff]
    %v1501 = vld [vmem:[%s1442 + $0x1d0] sm:$0xff]
    %v1502 = vld [vmem:[%s1442 + $0x1d8] sm:$0xff]
    %v1503 = vld [vmem:[%s1442 + $0x1e0] sm:$0xff]
    %v1504 = vld [vmem:[%s1442 + $0x1e8] sm:$0xff]
    %v1505 = vld [vmem:[%s1442 + $0x1f0] sm:$0xff]
    %v1506 = vld [vmem:[%s1442 + $0x1f8] sm:$0xff]
    %v1507 = vld [vmem:[%s1442 + $0x200] sm:$0xff]
    %v1508 = vld [vmem:[%s1442 + $0x208] sm:$0xff]
    %v1509 = vld [vmem:[%s1442 + $0x210] sm:$0xff]
    %v1510 = vld [vmem:[%s1442 + $0x218] sm:$0xff]
    %v1511 = vld [vmem:[%s1442 + $0x220] sm:$0xff]
    %v1512 = vld [vmem:[%s1442 + $0x228] sm:$0xff]
    %v1513 = vld [vmem:[%s1442 + $0x230] sm:$0xff]
    %v1514 = vld [vmem:[%s1442 + $0x238] sm:$0xff]
    %v1515 = vld [vmem:[%s1442 + $0x240] sm:$0xff]
    %v1516 = vld [vmem:[%s1442 + $0x248] sm:$0xff]
    %v1517 = vld [vmem:[%s1442 + $0x250] sm:$0xff]
    %v1518 = vld [vmem:[%s1442 + $0x258] sm:$0xff]
    %v1519 = vld [vmem:[%s1442 + $0x260] sm:$0xff]
    %v1520 = vld [vmem:[%s1442 + $0x268] sm:$0xff]
    %v1521 = vld [vmem:[%s1442 + $0x270] sm:$0xff]
    %v1522 = vld [vmem:[%s1442 + $0x278] sm:$0xff]
    %v1523 = vld [vmem:[%s1442 + $0x280] sm:$0xff]
    %v1524 = vld [vmem:[%s1442 + $0x288] sm:$0xff]
    %v1525 = vld [vmem:[%s1442 + $0x290] sm:$0xff]
    %v1526 = vld [vmem:[%s1442 + $0x298] sm:$0xff]
    %v1527 = vld [vmem:[%s1442 + $0x2a0] sm:$0xff]
    %v1528 = vld [vmem:[%s1442 + $0x2a8] sm:$0xff]
    %v1529 = vld [vmem:[%s1442 + $0x2b0] sm:$0xff]
    %v1530 = vld [vmem:[%s1442 + $0x2b8] sm:$0xff]
    %v1531 = vld [vmem:[%s1442 + $0x2c0] sm:$0xff]
    %v1532 = vld [vmem:[%s1442 + $0x2c8] sm:$0xff]
    %v1533 = vld [vmem:[%s1442 + $0x2d0] sm:$0xff]
    %v1534 = vld [vmem:[%s1442 + $0x2d8] sm:$0xff]
    %v1535 = vld [vmem:[%s1442 + $0x2e0] sm:$0xff]
    %v1536 = vld [vmem:[%s1442 + $0x2e8] sm:$0xff]
    %v1537 = vld [vmem:[%s1442 + $0x2f0] sm:$0xff]
    %v1538 = vld [vmem:[%s1442 + $0x2f8] sm:$0xff]
    %v1539 = vld [vmem:[%s1442 + $0x300] sm:$0xff]
    %v1540 = vld [vmem:[%s1442 + $0x308] sm:$0xff]
    %v1541 = vld [vmem:[%s1442 + $0x310] sm:$0xff]
    %v1542 = vld [vmem:[%s1442 + $0x318] sm:$0xff]
    %v1543 = vld [vmem:[%s1442 + $0x320] sm:$0xff]
    %v1544 = vld [vmem:[%s1442 + $0x328] sm:$0xff]
    %v1545 = vld [vmem:[%s1442 + $0x330] sm:$0xff]
    %v1546 = vld [vmem:[%s1442 + $0x338] sm:$0xff]
    %v1547 = vld [vmem:[%s1442 + $0x340] sm:$0xff]
    %v1548 = vld [vmem:[%s1442 + $0x348] sm:$0xff]
    %v1549 = vld [vmem:[%s1442 + $0x350] sm:$0xff]
    %v1550 = vld [vmem:[%s1442 + $0x358] sm:$0xff]
    %v1551 = vld [vmem:[%s1442 + $0x360] sm:$0xff]
    %v1552 = vld [vmem:[%s1442 + $0x368] sm:$0xff]
    %v1553 = vld [vmem:[%s1442 + $0x370] sm:$0xff]
    %v1554 = vld [vmem:[%s1442 + $0x378] sm:$0xff]
    %v1555 = vld [vmem:[%s1442 + $0x380] sm:$0xff]
    %v1556 = vld [vmem:[%s1442 + $0x388] sm:$0xff]
    %v1557 = vld [vmem:[%s1442 + $0x390] sm:$0xff]
    %v1558 = vld [vmem:[%s1442 + $0x398] sm:$0xff]
    %v1559 = vld [vmem:[%s1442 + $0x3a0] sm:$0xff]
    %v1560 = vld [vmem:[%s1442 + $0x3a8] sm:$0xff]
    %v1561 = vld [vmem:[%s1442 + $0x3b0] sm:$0xff]
    %v1562 = vld [vmem:[%s1442 + $0x3b8] sm:$0xff]
    %v1563 = vld [vmem:[%s1442 + $0x3c0] sm:$0xff]
    %v1564 = vld [vmem:[%s1442 + $0x3c8] sm:$0xff]
    %v1565 = vld [vmem:[%s1442 + $0x3d0] sm:$0xff]
    %v1566 = vld [vmem:[%s1442 + $0x3d8] sm:$0xff]
    %v1567 = vld [vmem:[%s1442 + $0x3e0] sm:$0xff]
    %v1568 = vld [vmem:[%s1442 + $0x3e8] sm:$0xff]
    %v1569 = vld [vmem:[%s1442 + $0x3f0] sm:$0xff]
    %v1570 = vld [vmem:[%s1442 + $0x3f8] sm:$0xff]
    %s1571 = scalar_lea.vmem [#allocation10], 4
    %v1572 = vld [vmem:[%s1571] sm:$0xf]
    %v1574 = vlaneseq
    %v1575 = vshrl.u32 %v1574, 7
    %v1576 = vsub.s32 0, %v1575
    %v1577 = vrot.slane %v1572, %v1576
    %v1578 = vlaneseq
    %v1579 = vshrl.u32 %v1578, 7
    %v1580 = vsub.s32 1, %v1579
    %v1581 = vrot.slane %v1572, %v1580
    %v1582 = vlaneseq
    %v1583 = vshrl.u32 %v1582, 7
    %v1584 = vsub.s32 2, %v1583
    %v1585 = vrot.slane %v1572, %v1584
    %v1586 = vlaneseq
    %v1587 = vshrl.u32 %v1586, 7
    %v1588 = vsub.s32 3, %v1587
    %v1589 = vrot.slane %v1572, %v1588
    %v1722 = vunpack.c.l.b16 %v1443
    %v1723 = vunpack.c.h.b16 %v1443
    %v1724 = vunpack.c.l.b16 %v1444
    %v1725 = vunpack.c.h.b16 %v1444
    %v1726 = vunpack.c.l.b16 %v1445
    %v1727 = vunpack.c.h.b16 %v1445
    %v1728 = vunpack.c.l.b16 %v1446
    %v1729 = vunpack.c.h.b16 %v1446
    %v1730 = vunpack.c.l.b16 %v1447
    %v1731 = vunpack.c.h.b16 %v1447
    %v1732 = vunpack.c.l.b16 %v1448
    %v1733 = vunpack.c.h.b16 %v1448
    %v1734 = vunpack.c.l.b16 %v1449
    %v1735 = vunpack.c.h.b16 %v1449
    %v1736 = vunpack.c.l.b16 %v1450
    %v1737 = vunpack.c.h.b16 %v1450
    %v1738 = vunpack.c.l.b16 %v1451
    %v1739 = vunpack.c.h.b16 %v1451
    %v1740 = vunpack.c.l.b16 %v1452
    %v1741 = vunpack.c.h.b16 %v1452
    %v1742 = vunpack.c.l.b16 %v1453
    %v1743 = vunpack.c.h.b16 %v1453
    %v1744 = vunpack.c.l.b16 %v1454
    %v1745 = vunpack.c.h.b16 %v1454
    %v1746 = vunpack.c.l.b16 %v1455
    %v1747 = vunpack.c.h.b16 %v1455
    %v1748 = vunpack.c.l.b16 %v1456
    %v1749 = vunpack.c.h.b16 %v1456
    %v1750 = vunpack.c.l.b16 %v1457
    %v1751 = vunpack.c.h.b16 %v1457
    %v1752 = vunpack.c.l.b16 %v1458
    %v1753 = vunpack.c.h.b16 %v1458
    %v1754 = vunpack.c.l.b16 %v1459
    %v1755 = vunpack.c.h.b16 %v1459
    %v1756 = vunpack.c.l.b16 %v1460
    %v1757 = vunpack.c.h.b16 %v1460
    %v1758 = vunpack.c.l.b16 %v1461
    %v1759 = vunpack.c.h.b16 %v1461
    %v1760 = vunpack.c.l.b16 %v1462
    %v1761 = vunpack.c.h.b16 %v1462
    %v1762 = vunpack.c.l.b16 %v1463
    %v1763 = vunpack.c.h.b16 %v1463
    %v1764 = vunpack.c.l.b16 %v1464
    %v1765 = vunpack.c.h.b16 %v1464
    %v1766 = vunpack.c.l.b16 %v1465
    %v1767 = vunpack.c.h.b16 %v1465
    %v1768 = vunpack.c.l.b16 %v1466
    %v1769 = vunpack.c.h.b16 %v1466
    %v1770 = vunpack.c.l.b16 %v1467
    %v1771 = vunpack.c.h.b16 %v1467
    %v1772 = vunpack.c.l.b16 %v1468
    %v1773 = vunpack.c.h.b16 %v1468
    %v1774 = vunpack.c.l.b16 %v1469
    %v1775 = vunpack.c.h.b16 %v1469
    %v1776 = vunpack.c.l.b16 %v1470
    %v1777 = vunpack.c.h.b16 %v1470
    %v1778 = vunpack.c.l.b16 %v1471
    %v1779 = vunpack.c.h.b16 %v1471
    %v1780 = vunpack.c.l.b16 %v1472
    %v1781 = vunpack.c.h.b16 %v1472
    %v1782 = vunpack.c.l.b16 %v1473
    %v1783 = vunpack.c.h.b16 %v1473
    %v1784 = vunpack.c.l.b16 %v1474
    %v1785 = vunpack.c.h.b16 %v1474
    %v1786 = vunpack.c.l.b16 %v1475
    %v1787 = vunpack.c.h.b16 %v1475
    %v1788 = vunpack.c.l.b16 %v1476
    %v1789 = vunpack.c.h.b16 %v1476
    %v1790 = vunpack.c.l.b16 %v1477
    %v1791 = vunpack.c.h.b16 %v1477
    %v1792 = vunpack.c.l.b16 %v1478
    %v1793 = vunpack.c.h.b16 %v1478
    %v1794 = vunpack.c.l.b16 %v1479
    %v1795 = vunpack.c.h.b16 %v1479
    %v1796 = vunpack.c.l.b16 %v1480
    %v1797 = vunpack.c.h.b16 %v1480
    %v1798 = vunpack.c.l.b16 %v1481
    %v1799 = vunpack.c.h.b16 %v1481
    %v1800 = vunpack.c.l.b16 %v1482
    %v1801 = vunpack.c.h.b16 %v1482
    %v1802 = vunpack.c.l.b16 %v1483
    %v1803 = vunpack.c.h.b16 %v1483
    %v1804 = vunpack.c.l.b16 %v1484
    %v1805 = vunpack.c.h.b16 %v1484
    %v1806 = vunpack.c.l.b16 %v1485
    %v1807 = vunpack.c.h.b16 %v1485
    %v1808 = vunpack.c.l.b16 %v1486
    %v1809 = vunpack.c.h.b16 %v1486
    %v1810 = vunpack.c.l.b16 %v1487
    %v1811 = vunpack.c.h.b16 %v1487
    %v1812 = vunpack.c.l.b16 %v1488
    %v1813 = vunpack.c.h.b16 %v1488
    %v1814 = vunpack.c.l.b16 %v1489
    %v1815 = vunpack.c.h.b16 %v1489
    %v1816 = vunpack.c.l.b16 %v1490
    %v1817 = vunpack.c.h.b16 %v1490
    %v1818 = vunpack.c.l.b16 %v1491
    %v1819 = vunpack.c.h.b16 %v1491
    %v1820 = vunpack.c.l.b16 %v1492
    %v1821 = vunpack.c.h.b16 %v1492
    %v1822 = vunpack.c.l.b16 %v1493
    %v1823 = vunpack.c.h.b16 %v1493
    %v1824 = vunpack.c.l.b16 %v1494
    %v1825 = vunpack.c.h.b16 %v1494
    %v1826 = vunpack.c.l.b16 %v1495
    %v1827 = vunpack.c.h.b16 %v1495
    %v1828 = vunpack.c.l.b16 %v1496
    %v1829 = vunpack.c.h.b16 %v1496
    %v1830 = vunpack.c.l.b16 %v1497
    %v1831 = vunpack.c.h.b16 %v1497
    %v1832 = vunpack.c.l.b16 %v1498
    %v1833 = vunpack.c.h.b16 %v1498
    %v1834 = vunpack.c.l.b16 %v1499
    %v1835 = vunpack.c.h.b16 %v1499
    %v1836 = vunpack.c.l.b16 %v1500
    %v1837 = vunpack.c.h.b16 %v1500
    %v1838 = vunpack.c.l.b16 %v1501
    %v1839 = vunpack.c.h.b16 %v1501
    %v1840 = vunpack.c.l.b16 %v1502
    %v1841 = vunpack.c.h.b16 %v1502
    %v1842 = vunpack.c.l.b16 %v1503
    %v1843 = vunpack.c.h.b16 %v1503
    %v1844 = vunpack.c.l.b16 %v1504
    %v1845 = vunpack.c.h.b16 %v1504
    %v1846 = vunpack.c.l.b16 %v1505
    %v1847 = vunpack.c.h.b16 %v1505
    %v1848 = vunpack.c.l.b16 %v1506
    %v1849 = vunpack.c.h.b16 %v1506
    %v1850 = vunpack.c.l.b16 %v1507
    %v1851 = vunpack.c.h.b16 %v1507
    %v1852 = vunpack.c.l.b16 %v1508
    %v1853 = vunpack.c.h.b16 %v1508
    %v1854 = vunpack.c.l.b16 %v1509
    %v1855 = vunpack.c.h.b16 %v1509
    %v1856 = vunpack.c.l.b16 %v1510
    %v1857 = vunpack.c.h.b16 %v1510
    %v1858 = vunpack.c.l.b16 %v1511
    %v1859 = vunpack.c.h.b16 %v1511
    %v1860 = vunpack.c.l.b16 %v1512
    %v1861 = vunpack.c.h.b16 %v1512
    %v1862 = vunpack.c.l.b16 %v1513
    %v1863 = vunpack.c.h.b16 %v1513
    %v1864 = vunpack.c.l.b16 %v1514
    %v1865 = vunpack.c.h.b16 %v1514
    %v1866 = vunpack.c.l.b16 %v1515
    %v1867 = vunpack.c.h.b16 %v1515
    %v1868 = vunpack.c.l.b16 %v1516
    %v1869 = vunpack.c.h.b16 %v1516
    %v1870 = vunpack.c.l.b16 %v1517
    %v1871 = vunpack.c.h.b16 %v1517
    %v1872 = vunpack.c.l.b16 %v1518
    %v1873 = vunpack.c.h.b16 %v1518
    %v1874 = vunpack.c.l.b16 %v1519
    %v1875 = vunpack.c.h.b16 %v1519
    %v1876 = vunpack.c.l.b16 %v1520
    %v1877 = vunpack.c.h.b16 %v1520
    %v1878 = vunpack.c.l.b16 %v1521
    %v1879 = vunpack.c.h.b16 %v1521
    %v1880 = vunpack.c.l.b16 %v1522
    %v1881 = vunpack.c.h.b16 %v1522
    %v1882 = vunpack.c.l.b16 %v1523
    %v1883 = vunpack.c.h.b16 %v1523
    %v1884 = vunpack.c.l.b16 %v1524
    %v1885 = vunpack.c.h.b16 %v1524
    %v1886 = vunpack.c.l.b16 %v1525
    %v1887 = vunpack.c.h.b16 %v1525
    %v1888 = vunpack.c.l.b16 %v1526
    %v1889 = vunpack.c.h.b16 %v1526
    %v1890 = vunpack.c.l.b16 %v1527
    %v1891 = vunpack.c.h.b16 %v1527
    %v1892 = vunpack.c.l.b16 %v1528
    %v1893 = vunpack.c.h.b16 %v1528
    %v1894 = vunpack.c.l.b16 %v1529
    %v1895 = vunpack.c.h.b16 %v1529
    %v1896 = vunpack.c.l.b16 %v1530
    %v1897 = vunpack.c.h.b16 %v1530
    %v1898 = vunpack.c.l.b16 %v1531
    %v1899 = vunpack.c.h.b16 %v1531
    %v1900 = vunpack.c.l.b16 %v1532
    %v1901 = vunpack.c.h.b16 %v1532
    %v1902 = vunpack.c.l.b16 %v1533
    %v1903 = vunpack.c.h.b16 %v1533
    %v1904 = vunpack.c.l.b16 %v1534
    %v1905 = vunpack.c.h.b16 %v1534
    %v1906 = vunpack.c.l.b16 %v1535
    %v1907 = vunpack.c.h.b16 %v1535
    %v1908 = vunpack.c.l.b16 %v1536
    %v1909 = vunpack.c.h.b16 %v1536
    %v1910 = vunpack.c.l.b16 %v1537
    %v1911 = vunpack.c.h.b16 %v1537
    %v1912 = vunpack.c.l.b16 %v1538
    %v1913 = vunpack.c.h.b16 %v1538
    %v1914 = vunpack.c.l.b16 %v1539
    %v1915 = vunpack.c.h.b16 %v1539
    %v1916 = vunpack.c.l.b16 %v1540
    %v1917 = vunpack.c.h.b16 %v1540
    %v1918 = vunpack.c.l.b16 %v1541
    %v1919 = vunpack.c.h.b16 %v1541
    %v1920 = vunpack.c.l.b16 %v1542
    %v1921 = vunpack.c.h.b16 %v1542
    %v1922 = vunpack.c.l.b16 %v1543
    %v1923 = vunpack.c.h.b16 %v1543
    %v1924 = vunpack.c.l.b16 %v1544
    %v1925 = vunpack.c.h.b16 %v1544
    %v1926 = vunpack.c.l.b16 %v1545
    %v1927 = vunpack.c.h.b16 %v1545
    %v1928 = vunpack.c.l.b16 %v1546
    %v1929 = vunpack.c.h.b16 %v1546
    %v1930 = vunpack.c.l.b16 %v1547
    %v1931 = vunpack.c.h.b16 %v1547
    %v1932 = vunpack.c.l.b16 %v1548
    %v1933 = vunpack.c.h.b16 %v1548
    %v1934 = vunpack.c.l.b16 %v1549
    %v1935 = vunpack.c.h.b16 %v1549
    %v1936 = vunpack.c.l.b16 %v1550
    %v1937 = vunpack.c.h.b16 %v1550
    %v1938 = vunpack.c.l.b16 %v1551
    %v1939 = vunpack.c.h.b16 %v1551
    %v1940 = vunpack.c.l.b16 %v1552
    %v1941 = vunpack.c.h.b16 %v1552
    %v1942 = vunpack.c.l.b16 %v1553
    %v1943 = vunpack.c.h.b16 %v1553
    %v1944 = vunpack.c.l.b16 %v1554
    %v1945 = vunpack.c.h.b16 %v1554
    %v1946 = vunpack.c.l.b16 %v1555
    %v1947 = vunpack.c.h.b16 %v1555
    %v1948 = vunpack.c.l.b16 %v1556
    %v1949 = vunpack.c.h.b16 %v1556
    %v1950 = vunpack.c.l.b16 %v1557
    %v1951 = vunpack.c.h.b16 %v1557
    %v1952 = vunpack.c.l.b16 %v1558
    %v1953 = vunpack.c.h.b16 %v1558
    %v1954 = vunpack.c.l.b16 %v1559
    %v1955 = vunpack.c.h.b16 %v1559
    %v1956 = vunpack.c.l.b16 %v1560
    %v1957 = vunpack.c.h.b16 %v1560
    %v1958 = vunpack.c.l.b16 %v1561
    %v1959 = vunpack.c.h.b16 %v1561
    %v1960 = vunpack.c.l.b16 %v1562
    %v1961 = vunpack.c.h.b16 %v1562
    %v1962 = vunpack.c.l.b16 %v1563
    %v1963 = vunpack.c.h.b16 %v1563
    %v1964 = vunpack.c.l.b16 %v1564
    %v1965 = vunpack.c.h.b16 %v1564
    %v1966 = vunpack.c.l.b16 %v1565
    %v1967 = vunpack.c.h.b16 %v1565
    %v1968 = vunpack.c.l.b16 %v1566
    %v1969 = vunpack.c.h.b16 %v1566
    %v1970 = vunpack.c.l.b16 %v1567
    %v1971 = vunpack.c.h.b16 %v1567
    %v1972 = vunpack.c.l.b16 %v1568
    %v1973 = vunpack.c.h.b16 %v1568
    %v1974 = vunpack.c.l.b16 %v1569
    %v1975 = vunpack.c.h.b16 %v1569
    %v1976 = vunpack.c.l.b16 %v1570
    %v1977 = vunpack.c.h.b16 %v1570
    %v1978 = vpack.c.b16 %v1726, %v1722
    %v1979 = vpack.c.b16 %v1727, %v1723
    %v1980 = vpack.c.b16 %v1728, %v1724
    %v1981 = vpack.c.b16 %v1729, %v1725
    %v1982 = vpack.c.b16 %v1734, %v1730
    %v1983 = vpack.c.b16 %v1735, %v1731
    %v1984 = vpack.c.b16 %v1736, %v1732
    %v1985 = vpack.c.b16 %v1737, %v1733
    %v1986 = vpack.c.b16 %v1742, %v1738
    %v1987 = vpack.c.b16 %v1743, %v1739
    %v1988 = vpack.c.b16 %v1744, %v1740
    %v1989 = vpack.c.b16 %v1745, %v1741
    %v1990 = vpack.c.b16 %v1750, %v1746
    %v1991 = vpack.c.b16 %v1751, %v1747
    %v1992 = vpack.c.b16 %v1752, %v1748
    %v1993 = vpack.c.b16 %v1753, %v1749
    %v1994 = vpack.c.b16 %v1758, %v1754
    %v1995 = vpack.c.b16 %v1759, %v1755
    %v1996 = vpack.c.b16 %v1760, %v1756
    %v1997 = vpack.c.b16 %v1761, %v1757
    %v1998 = vpack.c.b16 %v1766, %v1762
    %v1999 = vpack.c.b16 %v1767, %v1763
    %v2000 = vpack.c.b16 %v1768, %v1764
    %v2001 = vpack.c.b16 %v1769, %v1765
    %v2002 = vpack.c.b16 %v1774, %v1770
    %v2003 = vpack.c.b16 %v1775, %v1771
    %v2004 = vpack.c.b16 %v1776, %v1772
    %v2005 = vpack.c.b16 %v1777, %v1773
    %v2006 = vpack.c.b16 %v1782, %v1778
    %v2007 = vpack.c.b16 %v1783, %v1779
    %v2008 = vpack.c.b16 %v1784, %v1780
    %v2009 = vpack.c.b16 %v1785, %v1781
    %v2010 = vpack.c.b16 %v1790, %v1786
    %v2011 = vpack.c.b16 %v1791, %v1787
    %v2012 = vpack.c.b16 %v1792, %v1788
    %v2013 = vpack.c.b16 %v1793, %v1789
    %v2014 = vpack.c.b16 %v1798, %v1794
    %v2015 = vpack.c.b16 %v1799, %v1795
    %v2016 = vpack.c.b16 %v1800, %v1796
    %v2017 = vpack.c.b16 %v1801, %v1797
    %v2018 = vpack.c.b16 %v1806, %v1802
    %v2019 = vpack.c.b16 %v1807, %v1803
    %v2020 = vpack.c.b16 %v1808, %v1804
    %v2021 = vpack.c.b16 %v1809, %v1805
    %v2022 = vpack.c.b16 %v1814, %v1810
    %v2023 = vpack.c.b16 %v1815, %v1811
    %v2024 = vpack.c.b16 %v1816, %v1812
    %v2025 = vpack.c.b16 %v1817, %v1813
    %v2026 = vpack.c.b16 %v1822, %v1818
    %v2027 = vpack.c.b16 %v1823, %v1819
    %v2028 = vpack.c.b16 %v1824, %v1820
    %v2029 = vpack.c.b16 %v1825, %v1821
    %v2030 = vpack.c.b16 %v1830, %v1826
    %v2031 = vpack.c.b16 %v1831, %v1827
    %v2032 = vpack.c.b16 %v1832, %v1828
    %v2033 = vpack.c.b16 %v1833, %v1829
    %v2034 = vpack.c.b16 %v1838, %v1834
    %v2035 = vpack.c.b16 %v1839, %v1835
    %v2036 = vpack.c.b16 %v1840, %v1836
    %v2037 = vpack.c.b16 %v1841, %v1837
    %v2038 = vpack.c.b16 %v1846, %v1842
    %v2039 = vpack.c.b16 %v1847, %v1843
    %v2040 = vpack.c.b16 %v1848, %v1844
    %v2041 = vpack.c.b16 %v1849, %v1845
    %v2042 = vpack.c.b16 %v1854, %v1850
    %v2043 = vpack.c.b16 %v1855, %v1851
    %v2044 = vpack.c.b16 %v1856, %v1852
    %v2045 = vpack.c.b16 %v1857, %v1853
    %v2046 = vpack.c.b16 %v1862, %v1858
    %v2047 = vpack.c.b16 %v1863, %v1859
    %v2048 = vpack.c.b16 %v1864, %v1860
    %v2049 = vpack.c.b16 %v1865, %v1861
    %v2050 = vpack.c.b16 %v1870, %v1866
    %v2051 = vpack.c.b16 %v1871, %v1867
    %v2052 = vpack.c.b16 %v1872, %v1868
    %v2053 = vpack.c.b16 %v1873, %v1869
    %v2054 = vpack.c.b16 %v1878, %v1874
    %v2055 = vpack.c.b16 %v1879, %v1875
    %v2056 = vpack.c.b16 %v1880, %v1876
    %v2057 = vpack.c.b16 %v1881, %v1877
    %v2058 = vpack.c.b16 %v1886, %v1882
    %v2059 = vpack.c.b16 %v1887, %v1883
    %v2060 = vpack.c.b16 %v1888, %v1884
    %v2061 = vpack.c.b16 %v1889, %v1885
    %v2062 = vpack.c.b16 %v1894, %v1890
    %v2063 = vpack.c.b16 %v1895, %v1891
    %v2064 = vpack.c.b16 %v1896, %v1892
    %v2065 = vpack.c.b16 %v1897, %v1893
    %v2066 = vpack.c.b16 %v1902, %v1898
    %v2067 = vpack.c.b16 %v1903, %v1899
    %v2068 = vpack.c.b16 %v1904, %v1900
    %v2069 = vpack.c.b16 %v1905, %v1901
    %v2070 = vpack.c.b16 %v1910, %v1906
    %v2071 = vpack.c.b16 %v1911, %v1907
    %v2072 = vpack.c.b16 %v1912, %v1908
    %v2073 = vpack.c.b16 %v1913, %v1909
    %v2074 = vpack.c.b16 %v1918, %v1914
    %v2075 = vpack.c.b16 %v1919, %v1915
    %v2076 = vpack.c.b16 %v1920, %v1916
    %v2077 = vpack.c.b16 %v1921, %v1917
    %v2078 = vpack.c.b16 %v1926, %v1922
    %v2079 = vpack.c.b16 %v1927, %v1923
    %v2080 = vpack.c.b16 %v1928, %v1924
    %v2081 = vpack.c.b16 %v1929, %v1925
    %v2082 = vpack.c.b16 %v1934, %v1930
    %v2083 = vpack.c.b16 %v1935, %v1931
    %v2084 = vpack.c.b16 %v1936, %v1932
    %v2085 = vpack.c.b16 %v1937, %v1933
    %v2086 = vpack.c.b16 %v1942, %v1938
    %v2087 = vpack.c.b16 %v1943, %v1939
    %v2088 = vpack.c.b16 %v1944, %v1940
    %v2089 = vpack.c.b16 %v1945, %v1941
    %v2090 = vpack.c.b16 %v1950, %v1946
    %v2091 = vpack.c.b16 %v1951, %v1947
    %v2092 = vpack.c.b16 %v1952, %v1948
    %v2093 = vpack.c.b16 %v1953, %v1949
    %v2094 = vpack.c.b16 %v1958, %v1954
    %v2095 = vpack.c.b16 %v1959, %v1955
    %v2096 = vpack.c.b16 %v1960, %v1956
    %v2097 = vpack.c.b16 %v1961, %v1957
    %v2098 = vpack.c.b16 %v1966, %v1962
    %v2099 = vpack.c.b16 %v1967, %v1963
    %v2100 = vpack.c.b16 %v1968, %v1964
    %v2101 = vpack.c.b16 %v1969, %v1965
    %v2102 = vpack.c.b16 %v1974, %v1970
    %v2103 = vpack.c.b16 %v1975, %v1971
    %v2104 = vpack.c.b16 %v1976, %v1972
    %v2105 = vpack.c.b16 %v1977, %v1973
    %2234 = vmatprep.subr.bf16.mxu0 %v2007
    %2235 = vmatpush1.bf16.msra.mxu0 %v2006
    %2236 = vmatprep.subr.bf16.mxu0 %v2003
    %2237 = vmatpush1.bf16.msra.mxu0 %v2002
    %2238 = vmatprep.subr.bf16.mxu0 %v1999
    %2239 = vmatpush1.bf16.msra.mxu0 %v1998
    %2240 = vmatprep.subr.bf16.mxu0 %v1995
    %2241 = vmatpush1.bf16.msra.mxu0 %v1994
    %2242 = vmatprep.subr.bf16.mxu0 %v1991
    %2243 = vmatpush1.bf16.msra.mxu0 %v1990
    %2244 = vmatprep.subr.bf16.mxu0 %v1987
    %2245 = vmatpush1.bf16.msra.mxu0 %v1986
    %2246 = vmatprep.subr.bf16.mxu0 %v1983
    %2247 = vmatpush1.bf16.msra.mxu0 %v1982
    %2248 = vmatprep.subr.bf16.mxu0 %v1979
    %2249 = vmatpush1.bf16.msra.mxu0 %v1978
    %2250 = vmatprep.subr.bf16.mxu0 %v2039
    %2251 = vmatpush2.bf16.msra.mxu0 %v2038
    %2252 = vmatprep.subr.bf16.mxu0 %v2035
    %2253 = vmatpush2.bf16.msra.mxu0 %v2034
    %2254 = vmatprep.subr.bf16.mxu0 %v2031
    %2255 = vmatpush2.bf16.msra.mxu0 %v2030
    %2256 = vmatprep.subr.bf16.mxu0 %v2027
    %2257 = vmatpush2.bf16.msra.mxu0 %v2026
    %2258 = vmatprep.subr.bf16.mxu0 %v2023
    %2259 = vmatpush2.bf16.msra.mxu0 %v2022
    %2260 = vmatprep.subr.bf16.mxu0 %v2019
    %2261 = vmatpush2.bf16.msra.mxu0 %v2018
    %2262 = vmatprep.subr.bf16.mxu0 %v2015
    %2263 = vmatpush2.bf16.msra.mxu0 %v2014
    %2264 = vmatprep.subr.bf16.mxu0 %v2011
    %2265 = vmatpush2.bf16.msra.mxu0 %v2010
    %2266 = vmatprep.mubr.bf16.mxu0 %v1439
    %2267 = vmatmul.mubr.bf16.gmra.mxu0 %v1438
    %v2268 = vpop.f32.mrf.mxu0
    %v2269 = vadd.f32 %v1577, %v2268
    %v2270 = vpop.f32.mrf.mxu0
    %v2271 = vadd.f32 %v1581, %v2270
    %v2272 = vpop.f32.mrf.mxu0
    %v2273 = vpop.f32.mrf.mxu0
    %2274 = vdwg.mxu0
    %2275 = vmatprep.subr.bf16.mxu0 %v2071
    %2276 = vmatpush1.bf16.msra.mxu0 %v2070
    %2277 = vmatprep.subr.bf16.mxu0 %v2067
    %2278 = vmatpush1.bf16.msra.mxu0 %v2066
    %2279 = vmatprep.subr.bf16.mxu0 %v2063
    %2280 = vmatpush1.bf16.msra.mxu0 %v2062
    %2281 = vmatprep.subr.bf16.mxu0 %v2059
    %2282 = vmatpush1.bf16.msra.mxu0 %v2058
    %2283 = vmatprep.subr.bf16.mxu0 %v2055
    %2284 = vmatpush1.bf16.msra.mxu0 %v2054
    %2285 = vmatprep.subr.bf16.mxu0 %v2051
    %2286 = vmatpush1.bf16.msra.mxu0 %v2050
    %2287 = vmatprep.subr.bf16.mxu0 %v2047
    %2288 = vmatpush1.bf16.msra.mxu0 %v2046
    %2289 = vmatprep.subr.bf16.mxu0 %v2043
    %2290 = vmatpush1.bf16.msra.mxu0 %v2042
    %2291 = vmatprep.subr.bf16.mxu0 %v2103
    %2292 = vmatpush2.bf16.msra.mxu0 %v2102
    %2293 = vmatprep.subr.bf16.mxu0 %v2099
    %2294 = vmatpush2.bf16.msra.mxu0 %v2098
    %2295 = vmatprep.subr.bf16.mxu0 %v2095
    %2296 = vmatpush2.bf16.msra.mxu0 %v2094
    %2297 = vmatprep.subr.bf16.mxu0 %v2091
    %2298 = vmatpush2.bf16.msra.mxu0 %v2090
    %2299 = vmatprep.subr.bf16.mxu0 %v2087
    %2300 = vmatpush2.bf16.msra.mxu0 %v2086
    %2301 = vmatprep.subr.bf16.mxu0 %v2083
    %2302 = vmatpush2.bf16.msra.mxu0 %v2082
    %2303 = vmatprep.subr.bf16.mxu0 %v2079
    %2304 = vmatpush2.bf16.msra.mxu0 %v2078
    %2305 = vmatprep.subr.bf16.mxu0 %v2075
    %2306 = vmatpush2.bf16.msra.mxu0 %v2074
    %2307 = vmatprep.mubr.bf16.mxu0 %v1441
    %2308 = vmatmul.mubr.bf16.gmra.mxu0 %v1440
    %v2309 = vpop.f32.mrf.mxu0
    %v2310 = vadd.f32 %v2269, %v2309
    %v2311 = vpop.f32.mrf.mxu0
    %v2312 = vadd.f32 %v2271, %v2311
    %v2313 = vpop.f32.mrf.mxu0
    %v2314 = vpop.f32.mrf.mxu0
    %2315 = vdwg.mxu0
    %2316 = vmatprep.subr.bf16.mxu0 %v2009
    %2317 = vmatpush1.bf16.msra.mxu0 %v2008
    %2318 = vmatprep.subr.bf16.mxu0 %v2005
    %2319 = vmatpush1.bf16.msra.mxu0 %v2004
    %2320 = vmatprep.subr.bf16.mxu0 %v2001
    %2321 = vmatpush1.bf16.msra.mxu0 %v2000
    %2322 = vmatprep.subr.bf16.mxu0 %v1997
    %2323 = vmatpush1.bf16.msra.mxu0 %v1996
    %2324 = vmatprep.subr.bf16.mxu0 %v1993
    %2325 = vmatpush1.bf16.msra.mxu0 %v1992
    %2326 = vmatprep.subr.bf16.mxu0 %v1989
    %2327 = vmatpush1.bf16.msra.mxu0 %v1988
    %2328 = vmatprep.subr.bf16.mxu0 %v1985
    %2329 = vmatpush1.bf16.msra.mxu0 %v1984
    %2330 = vmatprep.subr.bf16.mxu0 %v1981
    %2331 = vmatpush1.bf16.msra.mxu0 %v1980
    %2332 = vmatprep.subr.bf16.mxu0 %v2041
    %2333 = vmatpush2.bf16.msra.mxu0 %v2040
    %2334 = vmatprep.subr.bf16.mxu0 %v2037
    %2335 = vmatpush2.bf16.msra.mxu0 %v2036
    %2336 = vmatprep.subr.bf16.mxu0 %v2033
    %2337 = vmatpush2.bf16.msra.mxu0 %v2032
    %2338 = vmatprep.subr.bf16.mxu0 %v2029
    %2339 = vmatpush2.bf16.msra.mxu0 %v2028
    %2340 = vmatprep.subr.bf16.mxu0 %v2025
    %2341 = vmatpush2.bf16.msra.mxu0 %v2024
    %2342 = vmatprep.subr.bf16.mxu0 %v2021
    %2343 = vmatpush2.bf16.msra.mxu0 %v2020
    %2344 = vmatprep.subr.bf16.mxu0 %v2017
    %2345 = vmatpush2.bf16.msra.mxu0 %v2016
    %2346 = vmatprep.subr.bf16.mxu0 %v2013
    %2347 = vmatpush2.bf16.msra.mxu0 %v2012
    %2348 = vmatprep.mubr.bf16.mxu0 %v1439
    %2349 = vmatmul.mubr.bf16.gmra.mxu0 %v1438
    %v2350 = vpop.f32.mrf.mxu0
    %v2351 = vadd.f32 %v1585, %v2350
    %v2352 = vpop.f32.mrf.mxu0
    %v2353 = vadd.f32 %v1589, %v2352
    %v2354 = vpop.f32.mrf.mxu0
    %v2355 = vpop.f32.mrf.mxu0
    %2356 = vdwg.mxu0
    %2357 = vmatprep.subr.bf16.mxu0 %v2073
    %2358 = vmatpush1.bf16.msra.mxu0 %v2072
    %2359 = vmatprep.subr.bf16.mxu0 %v2069
    %2360 = vmatpush1.bf16.msra.mxu0 %v2068
    %2361 = vmatprep.subr.bf16.mxu0 %v2065
    %2362 = vmatpush1.bf16.msra.mxu0 %v2064
    %2363 = vmatprep.subr.bf16.mxu0 %v2061
    %2364 = vmatpush1.bf16.msra.mxu0 %v2060
    %2365 = vmatprep.subr.bf16.mxu0 %v2057
    %2366 = vmatpush1.bf16.msra.mxu0 %v2056
    %2367 = vmatprep.subr.bf16.mxu0 %v2053
    %2368 = vmatpush1.bf16.msra.mxu0 %v2052
    %2369 = vmatprep.subr.bf16.mxu0 %v2049
    %2370 = vmatpush1.bf16.msra.mxu0 %v2048
    %2371 = vmatprep.subr.bf16.mxu0 %v2045
    %2372 = vmatpush1.bf16.msra.mxu0 %v2044
    %2373 = vmatprep.subr.bf16.mxu0 %v2105
    %2374 = vmatpush2.bf16.msra.mxu0 %v2104
    %2375 = vmatprep.subr.bf16.mxu0 %v2101
    %2376 = vmatpush2.bf16.msra.mxu0 %v2100
    %2377 = vmatprep.subr.bf16.mxu0 %v2097
    %2378 = vmatpush2.bf16.msra.mxu0 %v2096
    %2379 = vmatprep.subr.bf16.mxu0 %v2093
    %2380 = vmatpush2.bf16.msra.mxu0 %v2092
    %2381 = vmatprep.subr.bf16.mxu0 %v2089
    %2382 = vmatpush2.bf16.msra.mxu0 %v2088
    %2383 = vmatprep.subr.bf16.mxu0 %v2085
    %2384 = vmatpush2.bf16.msra.mxu0 %v2084
    %2385 = vmatprep.subr.bf16.mxu0 %v2081
    %2386 = vmatpush2.bf16.msra.mxu0 %v2080
    %2387 = vmatprep.subr.bf16.mxu0 %v2077
    %2388 = vmatpush2.bf16.msra.mxu0 %v2076
    %2389 = vmatprep.mubr.bf16.mxu0 %v1441
    %2390 = vmatmul.mubr.bf16.gmra.mxu0 %v1440
    %v2391 = vpop.f32.mrf.mxu0
    %v2392 = vadd.f32 %v2351, %v2391
    %v2393 = vpop.f32.mrf.mxu0
    %v2394 = vadd.f32 %v2353, %v2393
    %v2395 = vpop.f32.mrf.mxu0
    %v2396 = vpop.f32.mrf.mxu0
    %2397 = vdwg.mxu0
    %v2398 = vmax.f32 %v2310, 0.0
    %v2399 = vmax.f32 %v2312, 0.0
    %v2400 = vmax.f32 %v2392, 0.0
    %v2401 = vmax.f32 %v2394, 0.0
    %s2402 = scalar_lea.vmem [#allocation11], 4
    %v2403 = vld [vmem:[%s2402] sm:$0xf]
    %v2405 = vlaneseq
    %v2406 = vshrl.u32 %v2405, 7
    %v2407 = vsub.s32 0, %v2406
    %v2408 = vrot.slane %v2403, %v2407
    %v2409 = vlaneseq
    %v2410 = vshrl.u32 %v2409, 7
    %v2411 = vsub.s32 1, %v2410
    %v2412 = vrot.slane %v2403, %v2411
    %v2413 = vlaneseq
    %v2414 = vshrl.u32 %v2413, 7
    %v2415 = vsub.s32 2, %v2414
    %v2416 = vrot.slane %v2403, %v2415
    %v2417 = vlaneseq
    %v2418 = vshrl.u32 %v2417, 7
    %v2419 = vsub.s32 3, %v2418
    %v2420 = vrot.slane %v2403, %v2419
    %v2425 = vmul.f32 %v2398, %v2408
    %v2426 = vmul.f32 %v2399, %v2412
    %v2427 = vmul.f32 %v2400, %v2416
    %v2428 = vmul.f32 %v2401, %v2420
    %v2429 = vsel %vm1259, %v2425, 0.0
    %v2430 = vsel %vm1259, %v2426, 0.0
    %v2431 = vadd.f32 %v2429, %v2430
    %v2432 = vsel %vm1259, %v2427, 0.0
    %v2433 = vadd.f32 %v2431, %v2432
    %v2434 = vsel %vm1259, %v2428, 0.0
    %v2435 = vadd.f32 %v2433, %v2434
    %2436 = vadd.xlane.f32.xlu0 %v2435
    %v2437 = vpop.xlane.xlu0 %2436
    %s2438 = scalar_lea.vmem %s6, 1
    %v2439 = vld [vmem:[%s2438] sm:$0x1]
    %v2441 = vlaneseq
    %v2442 = vshrl.u32 %v2441, 7
    %v2443 = vsub.s32 0, %v2442
    %v2444 = vrot.slane %v2439, %v2443
    %v2446 = vadd.f32 %v2437, %v2444
    %v2447 = vmul.f32 %v2446, 0.01
    %v2448 = vtanh.pop %v2447
    %v2449 = vmul.f32 %v2448, 100.0
    %s2450 = scalar_lea.vmem [#allocation5], 96
    %v2451 = vld [vmem:[%s2450] sm:$0xff]
    %v2452 = vld [vmem:[%s2450 + $0x8] sm:$0xff]
    %v2453 = vld [vmem:[%s2450 + $0x10] sm:$0xff]
    %v2454 = vld [vmem:[%s2450 + $0x18] sm:$0xff]
    %v2455 = vld [vmem:[%s2450 + $0x20] sm:$0xff]
    %v2456 = vld [vmem:[%s2450 + $0x28] sm:$0xff]
    %s2457 = scalar_lea.vmem [#allocation7], 8
    %v2458 = vld [vmem:[%s2457] sm:$0xf]
    %v2460 = vlaneseq
    %v2461 = vshrl.u32 %v2460, 7
    %v2462 = vsub.s32 0, %v2461
    %v2463 = vrot.slane %v2458, %v2462
    %v2464 = vlaneseq
    %v2465 = vshrl.u32 %v2464, 7
    %v2466 = vsub.s32 1, %v2465
    %v2467 = vrot.slane %v2458, %v2466
    %v2468 = vlaneseq
    %v2469 = vshrl.u32 %v2468, 7
    %v2470 = vsub.s32 2, %v2469
    %v2471 = vrot.slane %v2458, %v2470
    %v2472 = vlaneseq
    %v2473 = vshrl.u32 %v2472, 7
    %v2474 = vsub.s32 3, %v2473
    %v2475 = vrot.slane %v2458, %v2474
    %v2486 = vunpack.c.l.b16 %v2451
    %v2487 = vunpack.c.h.b16 %v2451
    %v2488 = vunpack.c.l.b16 %v2452
    %v2489 = vunpack.c.h.b16 %v2452
    %v2490 = vunpack.c.l.b16 %v2453
    %v2491 = vunpack.c.h.b16 %v2453
    %v2492 = vunpack.c.l.b16 %v2454
    %v2493 = vunpack.c.h.b16 %v2454
    %v2494 = vunpack.c.l.b16 %v2455
    %v2495 = vunpack.c.h.b16 %v2455
    %v2496 = vunpack.c.l.b16 %v2456
    %v2497 = vunpack.c.h.b16 %v2456
    %v2498 = vpack.c.b16 %v2490, %v2486
    %v2499 = vpack.c.b16 %v2491, %v2487
    %v2500 = vpack.c.b16 %v2492, %v2488
    %v2501 = vpack.c.b16 %v2493, %v2489
    %v2502 = vpack.c.b16 %v2494, %v2494
    %v2503 = vpack.c.b16 %v2495, %v2495
    %v2504 = vpack.c.b16 %v2496, %v2496
    %v2505 = vpack.c.b16 %v2497, %v2497
    %v2511 = vsel %vm172, %v2502, 0
    %v2514 = vsel %vm172, %v2503, 0
    %v2517 = vsel %vm172, %v2504, 0
    %v2520 = vsel %vm172, %v2505, 0
    %2522 = vmatprep.subr.bf16.mxu0 0
    %2523 = vmatpush1.bf16.msra.mxu0 0
    %2524 = vmatprep.subr.bf16.mxu0 0
    %2525 = vmatpush1.bf16.msra.mxu0 0
    %2526 = vmatprep.subr.bf16.mxu0 0
    %2527 = vmatpush1.bf16.msra.mxu0 0
    %2528 = vmatprep.subr.bf16.mxu0 0
    %2529 = vmatpush1.bf16.msra.mxu0 0
    %2530 = vmatprep.subr.bf16.mxu0 0
    %2531 = vmatpush1.bf16.msra.mxu0 0
    %2532 = vmatprep.subr.bf16.mxu0 0
    %2533 = vmatpush1.bf16.msra.mxu0 0
    %2534 = vmatprep.subr.bf16.mxu0 %v2514
    %2535 = vmatpush1.bf16.msra.mxu0 %v2511
    %2536 = vmatprep.subr.bf16.mxu0 %v2499
    %2537 = vmatpush1.bf16.msra.mxu0 %v2498
    %2538 = vmatprep.subr.bf16.mxu0 0
    %2539 = vmatpush2.bf16.msra.mxu0 0
    %2540 = vmatprep.subr.bf16.mxu0 0
    %2541 = vmatpush2.bf16.msra.mxu0 0
    %2542 = vmatprep.subr.bf16.mxu0 0
    %2543 = vmatpush2.bf16.msra.mxu0 0
    %2544 = vmatprep.subr.bf16.mxu0 0
    %2545 = vmatpush2.bf16.msra.mxu0 0
    %2546 = vmatprep.subr.bf16.mxu0 0
    %2547 = vmatpush2.bf16.msra.mxu0 0
    %2548 = vmatprep.subr.bf16.mxu0 0
    %2549 = vmatpush2.bf16.msra.mxu0 0
    %2550 = vmatprep.subr.bf16.mxu0 0
    %2551 = vmatpush2.bf16.msra.mxu0 0
    %2552 = vmatprep.subr.bf16.mxu0 0
    %2553 = vmatpush2.bf16.msra.mxu0 0
    %2554 = vmatprep.mubr.bf16.mxu0 0
    %2555 = vmatmul.mubr.bf16.gmra.mxu0 %v170
    %v2556 = vpop.f32.mrf.mxu0
    %v2557 = vadd.f32 %v2463, %v2556
    %v2558 = vpop.f32.mrf.mxu0
    %v2559 = vadd.f32 %v2467, %v2558
    %v2560 = vpop.f32.mrf.mxu0
    %v2561 = vpop.f32.mrf.mxu0
    %2562 = vdwg.mxu0
    %2563 = vmatprep.subr.bf16.mxu0 0
    %2564 = vmatpush1.bf16.msra.mxu0 0
    %2565 = vmatprep.subr.bf16.mxu0 0
    %2566 = vmatpush1.bf16.msra.mxu0 0
    %2567 = vmatprep.subr.bf16.mxu0 0
    %2568 = vmatpush1.bf16.msra.mxu0 0
    %2569 = vmatprep.subr.bf16.mxu0 0
    %2570 = vmatpush1.bf16.msra.mxu0 0
    %2571 = vmatprep.subr.bf16.mxu0 0
    %2572 = vmatpush1.bf16.msra.mxu0 0
    %2573 = vmatprep.subr.bf16.mxu0 0
    %2574 = vmatpush1.bf16.msra.mxu0 0
    %2575 = vmatprep.subr.bf16.mxu0 %v2520
    %2576 = vmatpush1.bf16.msra.mxu0 %v2517
    %2577 = vmatprep.subr.bf16.mxu0 %v2501
    %2578 = vmatpush1.bf16.msra.mxu0 %v2500
    %2579 = vmatprep.subr.bf16.mxu0 0
    %2580 = vmatpush2.bf16.msra.mxu0 0
    %2581 = vmatprep.subr.bf16.mxu0 0
    %2582 = vmatpush2.bf16.msra.mxu0 0
    %2583 = vmatprep.subr.bf16.mxu0 0
    %2584 = vmatpush2.bf16.msra.mxu0 0
    %2585 = vmatprep.subr.bf16.mxu0 0
    %2586 = vmatpush2.bf16.msra.mxu0 0
    %2587 = vmatprep.subr.bf16.mxu0 0
    %2588 = vmatpush2.bf16.msra.mxu0 0
    %2589 = vmatprep.subr.bf16.mxu0 0
    %2590 = vmatpush2.bf16.msra.mxu0 0
    %2591 = vmatprep.subr.bf16.mxu0 0
    %2592 = vmatpush2.bf16.msra.mxu0 0
    %2593 = vmatprep.subr.bf16.mxu0 0
    %2594 = vmatpush2.bf16.msra.mxu0 0
    %2595 = vmatprep.mubr.bf16.mxu0 0
    %2596 = vmatmul.mubr.bf16.gmra.mxu0 %v170
    %v2597 = vpop.f32.mrf.mxu0
    %v2598 = vadd.f32 %v2471, %v2597
    %v2599 = vpop.f32.mrf.mxu0
    %v2600 = vadd.f32 %v2475, %v2599
    %v2601 = vpop.f32.mrf.mxu0
    %v2602 = vpop.f32.mrf.mxu0
    %2603 = vdwg.mxu0
    %v2604 = vmax.f32 %v2557, 0.0
    %v2605 = vmax.f32 %v2559, 0.0
    %v2606 = vmax.f32 %v2598, 0.0
    %v2607 = vmax.f32 %v2600, 0.0
    %v2608 = vpack.c.bf16 %v2604, %v2604
    %v2609 = vpack.c.bf16 %v2605, %v2605
    %v2610 = vpack.c.bf16 %v2606, %v2606
    %v2611 = vpack.c.bf16 %v2607, %v2607
    %s2612 = scalar_lea.vmem [#allocation8], 2048
    %v2613 = vld [vmem:[%s2612] sm:$0xff]
    %v2614 = vld [vmem:[%s2612 + $0x8] sm:$0xff]
    %v2615 = vld [vmem:[%s2612 + $0x10] sm:$0xff]
    %v2616 = vld [vmem:[%s2612 + $0x18] sm:$0xff]
    %v2617 = vld [vmem:[%s2612 + $0x20] sm:$0xff]
    %v2618 = vld [vmem:[%s2612 + $0x28] sm:$0xff]
    %v2619 = vld [vmem:[%s2612 + $0x30] sm:$0xff]
    %v2620 = vld [vmem:[%s2612 + $0x38] sm:$0xff]
    %v2621 = vld [vmem:[%s2612 + $0x40] sm:$0xff]
    %v2622 = vld [vmem:[%s2612 + $0x48] sm:$0xff]
    %v2623 = vld [vmem:[%s2612 + $0x50] sm:$0xff]
    %v2624 = vld [vmem:[%s2612 + $0x58] sm:$0xff]
    %v2625 = vld [vmem:[%s2612 + $0x60] sm:$0xff]
    %v2626 = vld [vmem:[%s2612 + $0x68] sm:$0xff]
    %v2627 = vld [vmem:[%s2612 + $0x70] sm:$0xff]
    %v2628 = vld [vmem:[%s2612 + $0x78] sm:$0xff]
    %v2629 = vld [vmem:[%s2612 + $0x80] sm:$0xff]
    %v2630 = vld [vmem:[%s2612 + $0x88] sm:$0xff]
    %v2631 = vld [vmem:[%s2612 + $0x90] sm:$0xff]
    %v2632 = vld [vmem:[%s2612 + $0x98] sm:$0xff]
    %v2633 = vld [vmem:[%s2612 + $0xa0] sm:$0xff]
    %v2634 = vld [vmem:[%s2612 + $0xa8] sm:$0xff]
    %v2635 = vld [vmem:[%s2612 + $0xb0] sm:$0xff]
    %v2636 = vld [vmem:[%s2612 + $0xb8] sm:$0xff]
    %v2637 = vld [vmem:[%s2612 + $0xc0] sm:$0xff]
    %v2638 = vld [vmem:[%s2612 + $0xc8] sm:$0xff]
    %v2639 = vld [vmem:[%s2612 + $0xd0] sm:$0xff]
    %v2640 = vld [vmem:[%s2612 + $0xd8] sm:$0xff]
    %v2641 = vld [vmem:[%s2612 + $0xe0] sm:$0xff]
    %v2642 = vld [vmem:[%s2612 + $0xe8] sm:$0xff]
    %v2643 = vld [vmem:[%s2612 + $0xf0] sm:$0xff]
    %v2644 = vld [vmem:[%s2612 + $0xf8] sm:$0xff]
    %v2645 = vld [vmem:[%s2612 + $0x100] sm:$0xff]
    %v2646 = vld [vmem:[%s2612 + $0x108] sm:$0xff]
    %v2647 = vld [vmem:[%s2612 + $0x110] sm:$0xff]
    %v2648 = vld [vmem:[%s2612 + $0x118] sm:$0xff]
    %v2649 = vld [vmem:[%s2612 + $0x120] sm:$0xff]
    %v2650 = vld [vmem:[%s2612 + $0x128] sm:$0xff]
    %v2651 = vld [vmem:[%s2612 + $0x130] sm:$0xff]
    %v2652 = vld [vmem:[%s2612 + $0x138] sm:$0xff]
    %v2653 = vld [vmem:[%s2612 + $0x140] sm:$0xff]
    %v2654 = vld [vmem:[%s2612 + $0x148] sm:$0xff]
    %v2655 = vld [vmem:[%s2612 + $0x150] sm:$0xff]
    %v2656 = vld [vmem:[%s2612 + $0x158] sm:$0xff]
    %v2657 = vld [vmem:[%s2612 + $0x160] sm:$0xff]
    %v2658 = vld [vmem:[%s2612 + $0x168] sm:$0xff]
    %v2659 = vld [vmem:[%s2612 + $0x170] sm:$0xff]
    %v2660 = vld [vmem:[%s2612 + $0x178] sm:$0xff]
    %v2661 = vld [vmem:[%s2612 + $0x180] sm:$0xff]
    %v2662 = vld [vmem:[%s2612 + $0x188] sm:$0xff]
    %v2663 = vld [vmem:[%s2612 + $0x190] sm:$0xff]
    %v2664 = vld [vmem:[%s2612 + $0x198] sm:$0xff]
    %v2665 = vld [vmem:[%s2612 + $0x1a0] sm:$0xff]
    %v2666 = vld [vmem:[%s2612 + $0x1a8] sm:$0xff]
    %v2667 = vld [vmem:[%s2612 + $0x1b0] sm:$0xff]
    %v2668 = vld [vmem:[%s2612 + $0x1b8] sm:$0xff]
    %v2669 = vld [vmem:[%s2612 + $0x1c0] sm:$0xff]
    %v2670 = vld [vmem:[%s2612 + $0x1c8] sm:$0xff]
    %v2671 = vld [vmem:[%s2612 + $0x1d0] sm:$0xff]
    %v2672 = vld [vmem:[%s2612 + $0x1d8] sm:$0xff]
    %v2673 = vld [vmem:[%s2612 + $0x1e0] sm:$0xff]
    %v2674 = vld [vmem:[%s2612 + $0x1e8] sm:$0xff]
    %v2675 = vld [vmem:[%s2612 + $0x1f0] sm:$0xff]
    %v2676 = vld [vmem:[%s2612 + $0x1f8] sm:$0xff]
    %v2677 = vld [vmem:[%s2612 + $0x200] sm:$0xff]
    %v2678 = vld [vmem:[%s2612 + $0x208] sm:$0xff]
    %v2679 = vld [vmem:[%s2612 + $0x210] sm:$0xff]
    %v2680 = vld [vmem:[%s2612 + $0x218] sm:$0xff]
    %v2681 = vld [vmem:[%s2612 + $0x220] sm:$0xff]
    %v2682 = vld [vmem:[%s2612 + $0x228] sm:$0xff]
    %v2683 = vld [vmem:[%s2612 + $0x230] sm:$0xff]
    %v2684 = vld [vmem:[%s2612 + $0x238] sm:$0xff]
    %v2685 = vld [vmem:[%s2612 + $0x240] sm:$0xff]
    %v2686 = vld [vmem:[%s2612 + $0x248] sm:$0xff]
    %v2687 = vld [vmem:[%s2612 + $0x250] sm:$0xff]
    %v2688 = vld [vmem:[%s2612 + $0x258] sm:$0xff]
    %v2689 = vld [vmem:[%s2612 + $0x260] sm:$0xff]
    %v2690 = vld [vmem:[%s2612 + $0x268] sm:$0xff]
    %v2691 = vld [vmem:[%s2612 + $0x270] sm:$0xff]
    %v2692 = vld [vmem:[%s2612 + $0x278] sm:$0xff]
    %v2693 = vld [vmem:[%s2612 + $0x280] sm:$0xff]
    %v2694 = vld [vmem:[%s2612 + $0x288] sm:$0xff]
    %v2695 = vld [vmem:[%s2612 + $0x290] sm:$0xff]
    %v2696 = vld [vmem:[%s2612 + $0x298] sm:$0xff]
    %v2697 = vld [vmem:[%s2612 + $0x2a0] sm:$0xff]
    %v2698 = vld [vmem:[%s2612 + $0x2a8] sm:$0xff]
    %v2699 = vld [vmem:[%s2612 + $0x2b0] sm:$0xff]
    %v2700 = vld [vmem:[%s2612 + $0x2b8] sm:$0xff]
    %v2701 = vld [vmem:[%s2612 + $0x2c0] sm:$0xff]
    %v2702 = vld [vmem:[%s2612 + $0x2c8] sm:$0xff]
    %v2703 = vld [vmem:[%s2612 + $0x2d0] sm:$0xff]
    %v2704 = vld [vmem:[%s2612 + $0x2d8] sm:$0xff]
    %v2705 = vld [vmem:[%s2612 + $0x2e0] sm:$0xff]
    %v2706 = vld [vmem:[%s2612 + $0x2e8] sm:$0xff]
    %v2707 = vld [vmem:[%s2612 + $0x2f0] sm:$0xff]
    %v2708 = vld [vmem:[%s2612 + $0x2f8] sm:$0xff]
    %v2709 = vld [vmem:[%s2612 + $0x300] sm:$0xff]
    %v2710 = vld [vmem:[%s2612 + $0x308] sm:$0xff]
    %v2711 = vld [vmem:[%s2612 + $0x310] sm:$0xff]
    %v2712 = vld [vmem:[%s2612 + $0x318] sm:$0xff]
    %v2713 = vld [vmem:[%s2612 + $0x320] sm:$0xff]
    %v2714 = vld [vmem:[%s2612 + $0x328] sm:$0xff]
    %v2715 = vld [vmem:[%s2612 + $0x330] sm:$0xff]
    %v2716 = vld [vmem:[%s2612 + $0x338] sm:$0xff]
    %v2717 = vld [vmem:[%s2612 + $0x340] sm:$0xff]
    %v2718 = vld [vmem:[%s2612 + $0x348] sm:$0xff]
    %v2719 = vld [vmem:[%s2612 + $0x350] sm:$0xff]
    %v2720 = vld [vmem:[%s2612 + $0x358] sm:$0xff]
    %v2721 = vld [vmem:[%s2612 + $0x360] sm:$0xff]
    %v2722 = vld [vmem:[%s2612 + $0x368] sm:$0xff]
    %v2723 = vld [vmem:[%s2612 + $0x370] sm:$0xff]
    %v2724 = vld [vmem:[%s2612 + $0x378] sm:$0xff]
    %v2725 = vld [vmem:[%s2612 + $0x380] sm:$0xff]
    %v2726 = vld [vmem:[%s2612 + $0x388] sm:$0xff]
    %v2727 = vld [vmem:[%s2612 + $0x390] sm:$0xff]
    %v2728 = vld [vmem:[%s2612 + $0x398] sm:$0xff]
    %v2729 = vld [vmem:[%s2612 + $0x3a0] sm:$0xff]
    %v2730 = vld [vmem:[%s2612 + $0x3a8] sm:$0xff]
    %v2731 = vld [vmem:[%s2612 + $0x3b0] sm:$0xff]
    %v2732 = vld [vmem:[%s2612 + $0x3b8] sm:$0xff]
    %v2733 = vld [vmem:[%s2612 + $0x3c0] sm:$0xff]
    %v2734 = vld [vmem:[%s2612 + $0x3c8] sm:$0xff]
    %v2735 = vld [vmem:[%s2612 + $0x3d0] sm:$0xff]
    %v2736 = vld [vmem:[%s2612 + $0x3d8] sm:$0xff]
    %v2737 = vld [vmem:[%s2612 + $0x3e0] sm:$0xff]
    %v2738 = vld [vmem:[%s2612 + $0x3e8] sm:$0xff]
    %v2739 = vld [vmem:[%s2612 + $0x3f0] sm:$0xff]
    %v2740 = vld [vmem:[%s2612 + $0x3f8] sm:$0xff]
    %s2741 = scalar_lea.vmem [#allocation10], 8
    %v2742 = vld [vmem:[%s2741] sm:$0xf]
    %v2744 = vlaneseq
    %v2745 = vshrl.u32 %v2744, 7
    %v2746 = vsub.s32 0, %v2745
    %v2747 = vrot.slane %v2742, %v2746
    %v2748 = vlaneseq
    %v2749 = vshrl.u32 %v2748, 7
    %v2750 = vsub.s32 1, %v2749
    %v2751 = vrot.slane %v2742, %v2750
    %v2752 = vlaneseq
    %v2753 = vshrl.u32 %v2752, 7
    %v2754 = vsub.s32 2, %v2753
    %v2755 = vrot.slane %v2742, %v2754
    %v2756 = vlaneseq
    %v2757 = vshrl.u32 %v2756, 7
    %v2758 = vsub.s32 3, %v2757
    %v2759 = vrot.slane %v2742, %v2758
    %v2892 = vunpack.c.l.b16 %v2613
    %v2893 = vunpack.c.h.b16 %v2613
    %v2894 = vunpack.c.l.b16 %v2614
    %v2895 = vunpack.c.h.b16 %v2614
    %v2896 = vunpack.c.l.b16 %v2615
    %v2897 = vunpack.c.h.b16 %v2615
    %v2898 = vunpack.c.l.b16 %v2616
    %v2899 = vunpack.c.h.b16 %v2616
    %v2900 = vunpack.c.l.b16 %v2617
    %v2901 = vunpack.c.h.b16 %v2617
    %v2902 = vunpack.c.l.b16 %v2618
    %v2903 = vunpack.c.h.b16 %v2618
    %v2904 = vunpack.c.l.b16 %v2619
    %v2905 = vunpack.c.h.b16 %v2619
    %v2906 = vunpack.c.l.b16 %v2620
    %v2907 = vunpack.c.h.b16 %v2620
    %v2908 = vunpack.c.l.b16 %v2621
    %v2909 = vunpack.c.h.b16 %v2621
    %v2910 = vunpack.c.l.b16 %v2622
    %v2911 = vunpack.c.h.b16 %v2622
    %v2912 = vunpack.c.l.b16 %v2623
    %v2913 = vunpack.c.h.b16 %v2623
    %v2914 = vunpack.c.l.b16 %v2624
    %v2915 = vunpack.c.h.b16 %v2624
    %v2916 = vunpack.c.l.b16 %v2625
    %v2917 = vunpack.c.h.b16 %v2625
    %v2918 = vunpack.c.l.b16 %v2626
    %v2919 = vunpack.c.h.b16 %v2626
    %v2920 = vunpack.c.l.b16 %v2627
    %v2921 = vunpack.c.h.b16 %v2627
    %v2922 = vunpack.c.l.b16 %v2628
    %v2923 = vunpack.c.h.b16 %v2628
    %v2924 = vunpack.c.l.b16 %v2629
    %v2925 = vunpack.c.h.b16 %v2629
    %v2926 = vunpack.c.l.b16 %v2630
    %v2927 = vunpack.c.h.b16 %v2630
    %v2928 = vunpack.c.l.b16 %v2631
    %v2929 = vunpack.c.h.b16 %v2631
    %v2930 = vunpack.c.l.b16 %v2632
    %v2931 = vunpack.c.h.b16 %v2632
    %v2932 = vunpack.c.l.b16 %v2633
    %v2933 = vunpack.c.h.b16 %v2633
    %v2934 = vunpack.c.l.b16 %v2634
    %v2935 = vunpack.c.h.b16 %v2634
    %v2936 = vunpack.c.l.b16 %v2635
    %v2937 = vunpack.c.h.b16 %v2635
    %v2938 = vunpack.c.l.b16 %v2636
    %v2939 = vunpack.c.h.b16 %v2636
    %v2940 = vunpack.c.l.b16 %v2637
    %v2941 = vunpack.c.h.b16 %v2637
    %v2942 = vunpack.c.l.b16 %v2638
    %v2943 = vunpack.c.h.b16 %v2638
    %v2944 = vunpack.c.l.b16 %v2639
    %v2945 = vunpack.c.h.b16 %v2639
    %v2946 = vunpack.c.l.b16 %v2640
    %v2947 = vunpack.c.h.b16 %v2640
    %v2948 = vunpack.c.l.b16 %v2641
    %v2949 = vunpack.c.h.b16 %v2641
    %v2950 = vunpack.c.l.b16 %v2642
    %v2951 = vunpack.c.h.b16 %v2642
    %v2952 = vunpack.c.l.b16 %v2643
    %v2953 = vunpack.c.h.b16 %v2643
    %v2954 = vunpack.c.l.b16 %v2644
    %v2955 = vunpack.c.h.b16 %v2644
    %v2956 = vunpack.c.l.b16 %v2645
    %v2957 = vunpack.c.h.b16 %v2645
    %v2958 = vunpack.c.l.b16 %v2646
    %v2959 = vunpack.c.h.b16 %v2646
    %v2960 = vunpack.c.l.b16 %v2647
    %v2961 = vunpack.c.h.b16 %v2647
    %v2962 = vunpack.c.l.b16 %v2648
    %v2963 = vunpack.c.h.b16 %v2648
    %v2964 = vunpack.c.l.b16 %v2649
    %v2965 = vunpack.c.h.b16 %v2649
    %v2966 = vunpack.c.l.b16 %v2650
    %v2967 = vunpack.c.h.b16 %v2650
    %v2968 = vunpack.c.l.b16 %v2651
    %v2969 = vunpack.c.h.b16 %v2651
    %v2970 = vunpack.c.l.b16 %v2652
    %v2971 = vunpack.c.h.b16 %v2652
    %v2972 = vunpack.c.l.b16 %v2653
    %v2973 = vunpack.c.h.b16 %v2653
    %v2974 = vunpack.c.l.b16 %v2654
    %v2975 = vunpack.c.h.b16 %v2654
    %v2976 = vunpack.c.l.b16 %v2655
    %v2977 = vunpack.c.h.b16 %v2655
    %v2978 = vunpack.c.l.b16 %v2656
    %v2979 = vunpack.c.h.b16 %v2656
    %v2980 = vunpack.c.l.b16 %v2657
    %v2981 = vunpack.c.h.b16 %v2657
    %v2982 = vunpack.c.l.b16 %v2658
    %v2983 = vunpack.c.h.b16 %v2658
    %v2984 = vunpack.c.l.b16 %v2659
    %v2985 = vunpack.c.h.b16 %v2659
    %v2986 = vunpack.c.l.b16 %v2660
    %v2987 = vunpack.c.h.b16 %v2660
    %v2988 = vunpack.c.l.b16 %v2661
    %v2989 = vunpack.c.h.b16 %v2661
    %v2990 = vunpack.c.l.b16 %v2662
    %v2991 = vunpack.c.h.b16 %v2662
    %v2992 = vunpack.c.l.b16 %v2663
    %v2993 = vunpack.c.h.b16 %v2663
    %v2994 = vunpack.c.l.b16 %v2664
    %v2995 = vunpack.c.h.b16 %v2664
    %v2996 = vunpack.c.l.b16 %v2665
    %v2997 = vunpack.c.h.b16 %v2665
    %v2998 = vunpack.c.l.b16 %v2666
    %v2999 = vunpack.c.h.b16 %v2666
    %v3000 = vunpack.c.l.b16 %v2667
    %v3001 = vunpack.c.h.b16 %v2667
    %v3002 = vunpack.c.l.b16 %v2668
    %v3003 = vunpack.c.h.b16 %v2668
    %v3004 = vunpack.c.l.b16 %v2669
    %v3005 = vunpack.c.h.b16 %v2669
    %v3006 = vunpack.c.l.b16 %v2670
    %v3007 = vunpack.c.h.b16 %v2670
    %v3008 = vunpack.c.l.b16 %v2671
    %v3009 = vunpack.c.h.b16 %v2671
    %v3010 = vunpack.c.l.b16 %v2672
    %v3011 = vunpack.c.h.b16 %v2672
    %v3012 = vunpack.c.l.b16 %v2673
    %v3013 = vunpack.c.h.b16 %v2673
    %v3014 = vunpack.c.l.b16 %v2674
    %v3015 = vunpack.c.h.b16 %v2674
    %v3016 = vunpack.c.l.b16 %v2675
    %v3017 = vunpack.c.h.b16 %v2675
    %v3018 = vunpack.c.l.b16 %v2676
    %v3019 = vunpack.c.h.b16 %v2676
    %v3020 = vunpack.c.l.b16 %v2677
    %v3021 = vunpack.c.h.b16 %v2677
    %v3022 = vunpack.c.l.b16 %v2678
    %v3023 = vunpack.c.h.b16 %v2678
    %v3024 = vunpack.c.l.b16 %v2679
    %v3025 = vunpack.c.h.b16 %v2679
    %v3026 = vunpack.c.l.b16 %v2680
    %v3027 = vunpack.c.h.b16 %v2680
    %v3028 = vunpack.c.l.b16 %v2681
    %v3029 = vunpack.c.h.b16 %v2681
    %v3030 = vunpack.c.l.b16 %v2682
    %v3031 = vunpack.c.h.b16 %v2682
    %v3032 = vunpack.c.l.b16 %v2683
    %v3033 = vunpack.c.h.b16 %v2683
    %v3034 = vunpack.c.l.b16 %v2684
    %v3035 = vunpack.c.h.b16 %v2684
    %v3036 = vunpack.c.l.b16 %v2685
    %v3037 = vunpack.c.h.b16 %v2685
    %v3038 = vunpack.c.l.b16 %v2686
    %v3039 = vunpack.c.h.b16 %v2686
    %v3040 = vunpack.c.l.b16 %v2687
    %v3041 = vunpack.c.h.b16 %v2687
    %v3042 = vunpack.c.l.b16 %v2688
    %v3043 = vunpack.c.h.b16 %v2688
    %v3044 = vunpack.c.l.b16 %v2689
    %v3045 = vunpack.c.h.b16 %v2689
    %v3046 = vunpack.c.l.b16 %v2690
    %v3047 = vunpack.c.h.b16 %v2690
    %v3048 = vunpack.c.l.b16 %v2691
    %v3049 = vunpack.c.h.b16 %v2691
    %v3050 = vunpack.c.l.b16 %v2692
    %v3051 = vunpack.c.h.b16 %v2692
    %v3052 = vunpack.c.l.b16 %v2693
    %v3053 = vunpack.c.h.b16 %v2693
    %v3054 = vunpack.c.l.b16 %v2694
    %v3055 = vunpack.c.h.b16 %v2694
    %v3056 = vunpack.c.l.b16 %v2695
    %v3057 = vunpack.c.h.b16 %v2695
    %v3058 = vunpack.c.l.b16 %v2696
    %v3059 = vunpack.c.h.b16 %v2696
    %v3060 = vunpack.c.l.b16 %v2697
    %v3061 = vunpack.c.h.b16 %v2697
    %v3062 = vunpack.c.l.b16 %v2698
    %v3063 = vunpack.c.h.b16 %v2698
    %v3064 = vunpack.c.l.b16 %v2699
    %v3065 = vunpack.c.h.b16 %v2699
    %v3066 = vunpack.c.l.b16 %v2700
    %v3067 = vunpack.c.h.b16 %v2700
    %v3068 = vunpack.c.l.b16 %v2701
    %v3069 = vunpack.c.h.b16 %v2701
    %v3070 = vunpack.c.l.b16 %v2702
    %v3071 = vunpack.c.h.b16 %v2702
    %v3072 = vunpack.c.l.b16 %v2703
    %v3073 = vunpack.c.h.b16 %v2703
    %v3074 = vunpack.c.l.b16 %v2704
    %v3075 = vunpack.c.h.b16 %v2704
    %v3076 = vunpack.c.l.b16 %v2705
    %v3077 = vunpack.c.h.b16 %v2705
    %v3078 = vunpack.c.l.b16 %v2706
    %v3079 = vunpack.c.h.b16 %v2706
    %v3080 = vunpack.c.l.b16 %v2707
    %v3081 = vunpack.c.h.b16 %v2707
    %v3082 = vunpack.c.l.b16 %v2708
    %v3083 = vunpack.c.h.b16 %v2708
    %v3084 = vunpack.c.l.b16 %v2709
    %v3085 = vunpack.c.h.b16 %v2709
    %v3086 = vunpack.c.l.b16 %v2710
    %v3087 = vunpack.c.h.b16 %v2710
    %v3088 = vunpack.c.l.b16 %v2711
    %v3089 = vunpack.c.h.b16 %v2711
    %v3090 = vunpack.c.l.b16 %v2712
    %v3091 = vunpack.c.h.b16 %v2712
    %v3092 = vunpack.c.l.b16 %v2713
    %v3093 = vunpack.c.h.b16 %v2713
    %v3094 = vunpack.c.l.b16 %v2714
    %v3095 = vunpack.c.h.b16 %v2714
    %v3096 = vunpack.c.l.b16 %v2715
    %v3097 = vunpack.c.h.b16 %v2715
    %v3098 = vunpack.c.l.b16 %v2716
    %v3099 = vunpack.c.h.b16 %v2716
    %v3100 = vunpack.c.l.b16 %v2717
    %v3101 = vunpack.c.h.b16 %v2717
    %v3102 = vunpack.c.l.b16 %v2718
    %v3103 = vunpack.c.h.b16 %v2718
    %v3104 = vunpack.c.l.b16 %v2719
    %v3105 = vunpack.c.h.b16 %v2719
    %v3106 = vunpack.c.l.b16 %v2720
    %v3107 = vunpack.c.h.b16 %v2720
    %v3108 = vunpack.c.l.b16 %v2721
    %v3109 = vunpack.c.h.b16 %v2721
    %v3110 = vunpack.c.l.b16 %v2722
    %v3111 = vunpack.c.h.b16 %v2722
    %v3112 = vunpack.c.l.b16 %v2723
    %v3113 = vunpack.c.h.b16 %v2723
    %v3114 = vunpack.c.l.b16 %v2724
    %v3115 = vunpack.c.h.b16 %v2724
    %v3116 = vunpack.c.l.b16 %v2725
    %v3117 = vunpack.c.h.b16 %v2725
    %v3118 = vunpack.c.l.b16 %v2726
    %v3119 = vunpack.c.h.b16 %v2726
    %v3120 = vunpack.c.l.b16 %v2727
    %v3121 = vunpack.c.h.b16 %v2727
    %v3122 = vunpack.c.l.b16 %v2728
    %v3123 = vunpack.c.h.b16 %v2728
    %v3124 = vunpack.c.l.b16 %v2729
    %v3125 = vunpack.c.h.b16 %v2729
    %v3126 = vunpack.c.l.b16 %v2730
    %v3127 = vunpack.c.h.b16 %v2730
    %v3128 = vunpack.c.l.b16 %v2731
    %v3129 = vunpack.c.h.b16 %v2731
    %v3130 = vunpack.c.l.b16 %v2732
    %v3131 = vunpack.c.h.b16 %v2732
    %v3132 = vunpack.c.l.b16 %v2733
    %v3133 = vunpack.c.h.b16 %v2733
    %v3134 = vunpack.c.l.b16 %v2734
    %v3135 = vunpack.c.h.b16 %v2734
    %v3136 = vunpack.c.l.b16 %v2735
    %v3137 = vunpack.c.h.b16 %v2735
    %v3138 = vunpack.c.l.b16 %v2736
    %v3139 = vunpack.c.h.b16 %v2736
    %v3140 = vunpack.c.l.b16 %v2737
    %v3141 = vunpack.c.h.b16 %v2737
    %v3142 = vunpack.c.l.b16 %v2738
    %v3143 = vunpack.c.h.b16 %v2738
    %v3144 = vunpack.c.l.b16 %v2739
    %v3145 = vunpack.c.h.b16 %v2739
    %v3146 = vunpack.c.l.b16 %v2740
    %v3147 = vunpack.c.h.b16 %v2740
    %v3148 = vpack.c.b16 %v2896, %v2892
    %v3149 = vpack.c.b16 %v2897, %v2893
    %v3150 = vpack.c.b16 %v2898, %v2894
    %v3151 = vpack.c.b16 %v2899, %v2895
    %v3152 = vpack.c.b16 %v2904, %v2900
    %v3153 = vpack.c.b16 %v2905, %v2901
    %v3154 = vpack.c.b16 %v2906, %v2902
    %v3155 = vpack.c.b16 %v2907, %v2903
    %v3156 = vpack.c.b16 %v2912, %v2908
    %v3157 = vpack.c.b16 %v2913, %v2909
    %v3158 = vpack.c.b16 %v2914, %v2910
    %v3159 = vpack.c.b16 %v2915, %v2911
    %v3160 = vpack.c.b16 %v2920, %v2916
    %v3161 = vpack.c.b16 %v2921, %v2917
    %v3162 = vpack.c.b16 %v2922, %v2918
    %v3163 = vpack.c.b16 %v2923, %v2919
    %v3164 = vpack.c.b16 %v2928, %v2924
    %v3165 = vpack.c.b16 %v2929, %v2925
    %v3166 = vpack.c.b16 %v2930, %v2926
    %v3167 = vpack.c.b16 %v2931, %v2927
    %v3168 = vpack.c.b16 %v2936, %v2932
    %v3169 = vpack.c.b16 %v2937, %v2933
    %v3170 = vpack.c.b16 %v2938, %v2934
    %v3171 = vpack.c.b16 %v2939, %v2935
    %v3172 = vpack.c.b16 %v2944, %v2940
    %v3173 = vpack.c.b16 %v2945, %v2941
    %v3174 = vpack.c.b16 %v2946, %v2942
    %v3175 = vpack.c.b16 %v2947, %v2943
    %v3176 = vpack.c.b16 %v2952, %v2948
    %v3177 = vpack.c.b16 %v2953, %v2949
    %v3178 = vpack.c.b16 %v2954, %v2950
    %v3179 = vpack.c.b16 %v2955, %v2951
    %v3180 = vpack.c.b16 %v2960, %v2956
    %v3181 = vpack.c.b16 %v2961, %v2957
    %v3182 = vpack.c.b16 %v2962, %v2958
    %v3183 = vpack.c.b16 %v2963, %v2959
    %v3184 = vpack.c.b16 %v2968, %v2964
    %v3185 = vpack.c.b16 %v2969, %v2965
    %v3186 = vpack.c.b16 %v2970, %v2966
    %v3187 = vpack.c.b16 %v2971, %v2967
    %v3188 = vpack.c.b16 %v2976, %v2972
    %v3189 = vpack.c.b16 %v2977, %v2973
    %v3190 = vpack.c.b16 %v2978, %v2974
    %v3191 = vpack.c.b16 %v2979, %v2975
    %v3192 = vpack.c.b16 %v2984, %v2980
    %v3193 = vpack.c.b16 %v2985, %v2981
    %v3194 = vpack.c.b16 %v2986, %v2982
    %v3195 = vpack.c.b16 %v2987, %v2983
    %v3196 = vpack.c.b16 %v2992, %v2988
    %v3197 = vpack.c.b16 %v2993, %v2989
    %v3198 = vpack.c.b16 %v2994, %v2990
    %v3199 = vpack.c.b16 %v2995, %v2991
    %v3200 = vpack.c.b16 %v3000, %v2996
    %v3201 = vpack.c.b16 %v3001, %v2997
    %v3202 = vpack.c.b16 %v3002, %v2998
    %v3203 = vpack.c.b16 %v3003, %v2999
    %v3204 = vpack.c.b16 %v3008, %v3004
    %v3205 = vpack.c.b16 %v3009, %v3005
    %v3206 = vpack.c.b16 %v3010, %v3006
    %v3207 = vpack.c.b16 %v3011, %v3007
    %v3208 = vpack.c.b16 %v3016, %v3012
    %v3209 = vpack.c.b16 %v3017, %v3013
    %v3210 = vpack.c.b16 %v3018, %v3014
    %v3211 = vpack.c.b16 %v3019, %v3015
    %v3212 = vpack.c.b16 %v3024, %v3020
    %v3213 = vpack.c.b16 %v3025, %v3021
    %v3214 = vpack.c.b16 %v3026, %v3022
    %v3215 = vpack.c.b16 %v3027, %v3023
    %v3216 = vpack.c.b16 %v3032, %v3028
    %v3217 = vpack.c.b16 %v3033, %v3029
    %v3218 = vpack.c.b16 %v3034, %v3030
    %v3219 = vpack.c.b16 %v3035, %v3031
    %v3220 = vpack.c.b16 %v3040, %v3036
    %v3221 = vpack.c.b16 %v3041, %v3037
    %v3222 = vpack.c.b16 %v3042, %v3038
    %v3223 = vpack.c.b16 %v3043, %v3039
    %v3224 = vpack.c.b16 %v3048, %v3044
    %v3225 = vpack.c.b16 %v3049, %v3045
    %v3226 = vpack.c.b16 %v3050, %v3046
    %v3227 = vpack.c.b16 %v3051, %v3047
    %v3228 = vpack.c.b16 %v3056, %v3052
    %v3229 = vpack.c.b16 %v3057, %v3053
    %v3230 = vpack.c.b16 %v3058, %v3054
    %v3231 = vpack.c.b16 %v3059, %v3055
    %v3232 = vpack.c.b16 %v3064, %v3060
    %v3233 = vpack.c.b16 %v3065, %v3061
    %v3234 = vpack.c.b16 %v3066, %v3062
    %v3235 = vpack.c.b16 %v3067, %v3063
    %v3236 = vpack.c.b16 %v3072, %v3068
    %v3237 = vpack.c.b16 %v3073, %v3069
    %v3238 = vpack.c.b16 %v3074, %v3070
    %v3239 = vpack.c.b16 %v3075, %v3071
    %v3240 = vpack.c.b16 %v3080, %v3076
    %v3241 = vpack.c.b16 %v3081, %v3077
    %v3242 = vpack.c.b16 %v3082, %v3078
    %v3243 = vpack.c.b16 %v3083, %v3079
    %v3244 = vpack.c.b16 %v3088, %v3084
    %v3245 = vpack.c.b16 %v3089, %v3085
    %v3246 = vpack.c.b16 %v3090, %v3086
    %v3247 = vpack.c.b16 %v3091, %v3087
    %v3248 = vpack.c.b16 %v3096, %v3092
    %v3249 = vpack.c.b16 %v3097, %v3093
    %v3250 = vpack.c.b16 %v3098, %v3094
    %v3251 = vpack.c.b16 %v3099, %v3095
    %v3252 = vpack.c.b16 %v3104, %v3100
    %v3253 = vpack.c.b16 %v3105, %v3101
    %v3254 = vpack.c.b16 %v3106, %v3102
    %v3255 = vpack.c.b16 %v3107, %v3103
    %v3256 = vpack.c.b16 %v3112, %v3108
    %v3257 = vpack.c.b16 %v3113, %v3109
    %v3258 = vpack.c.b16 %v3114, %v3110
    %v3259 = vpack.c.b16 %v3115, %v3111
    %v3260 = vpack.c.b16 %v3120, %v3116
    %v3261 = vpack.c.b16 %v3121, %v3117
    %v3262 = vpack.c.b16 %v3122, %v3118
    %v3263 = vpack.c.b16 %v3123, %v3119
    %v3264 = vpack.c.b16 %v3128, %v3124
    %v3265 = vpack.c.b16 %v3129, %v3125
    %v3266 = vpack.c.b16 %v3130, %v3126
    %v3267 = vpack.c.b16 %v3131, %v3127
    %v3268 = vpack.c.b16 %v3136, %v3132
    %v3269 = vpack.c.b16 %v3137, %v3133
    %v3270 = vpack.c.b16 %v3138, %v3134
    %v3271 = vpack.c.b16 %v3139, %v3135
    %v3272 = vpack.c.b16 %v3144, %v3140
    %v3273 = vpack.c.b16 %v3145, %v3141
    %v3274 = vpack.c.b16 %v3146, %v3142
    %v3275 = vpack.c.b16 %v3147, %v3143
    %3404 = vmatprep.subr.bf16.mxu0 %v3177
    %3405 = vmatpush1.bf16.msra.mxu0 %v3176
    %3406 = vmatprep.subr.bf16.mxu0 %v3173
    %3407 = vmatpush1.bf16.msra.mxu0 %v3172
    %3408 = vmatprep.subr.bf16.mxu0 %v3169
    %3409 = vmatpush1.bf16.msra.mxu0 %v3168
    %3410 = vmatprep.subr.bf16.mxu0 %v3165
    %3411 = vmatpush1.bf16.msra.mxu0 %v3164
    %3412 = vmatprep.subr.bf16.mxu0 %v3161
    %3413 = vmatpush1.bf16.msra.mxu0 %v3160
    %3414 = vmatprep.subr.bf16.mxu0 %v3157
    %3415 = vmatpush1.bf16.msra.mxu0 %v3156
    %3416 = vmatprep.subr.bf16.mxu0 %v3153
    %3417 = vmatpush1.bf16.msra.mxu0 %v3152
    %3418 = vmatprep.subr.bf16.mxu0 %v3149
    %3419 = vmatpush1.bf16.msra.mxu0 %v3148
    %3420 = vmatprep.subr.bf16.mxu0 %v3209
    %3421 = vmatpush2.bf16.msra.mxu0 %v3208
    %3422 = vmatprep.subr.bf16.mxu0 %v3205
    %3423 = vmatpush2.bf16.msra.mxu0 %v3204
    %3424 = vmatprep.subr.bf16.mxu0 %v3201
    %3425 = vmatpush2.bf16.msra.mxu0 %v3200
    %3426 = vmatprep.subr.bf16.mxu0 %v3197
    %3427 = vmatpush2.bf16.msra.mxu0 %v3196
    %3428 = vmatprep.subr.bf16.mxu0 %v3193
    %3429 = vmatpush2.bf16.msra.mxu0 %v3192
    %3430 = vmatprep.subr.bf16.mxu0 %v3189
    %3431 = vmatpush2.bf16.msra.mxu0 %v3188
    %3432 = vmatprep.subr.bf16.mxu0 %v3185
    %3433 = vmatpush2.bf16.msra.mxu0 %v3184
    %3434 = vmatprep.subr.bf16.mxu0 %v3181
    %3435 = vmatpush2.bf16.msra.mxu0 %v3180
    %3436 = vmatprep.mubr.bf16.mxu0 %v2609
    %3437 = vmatmul.mubr.bf16.gmra.mxu0 %v2608
    %v3438 = vpop.f32.mrf.mxu0
    %v3439 = vadd.f32 %v2747, %v3438
    %v3440 = vpop.f32.mrf.mxu0
    %v3441 = vadd.f32 %v2751, %v3440
    %v3442 = vpop.f32.mrf.mxu0
    %v3443 = vpop.f32.mrf.mxu0
    %3444 = vdwg.mxu0
    %3445 = vmatprep.subr.bf16.mxu0 %v3241
    %3446 = vmatpush1.bf16.msra.mxu0 %v3240
    %3447 = vmatprep.subr.bf16.mxu0 %v3237
    %3448 = vmatpush1.bf16.msra.mxu0 %v3236
    %3449 = vmatprep.subr.bf16.mxu0 %v3233
    %3450 = vmatpush1.bf16.msra.mxu0 %v3232
    %3451 = vmatprep.subr.bf16.mxu0 %v3229
    %3452 = vmatpush1.bf16.msra.mxu0 %v3228
    %3453 = vmatprep.subr.bf16.mxu0 %v3225
    %3454 = vmatpush1.bf16.msra.mxu0 %v3224
    %3455 = vmatprep.subr.bf16.mxu0 %v3221
    %3456 = vmatpush1.bf16.msra.mxu0 %v3220
    %3457 = vmatprep.subr.bf16.mxu0 %v3217
    %3458 = vmatpush1.bf16.msra.mxu0 %v3216
    %3459 = vmatprep.subr.bf16.mxu0 %v3213
    %3460 = vmatpush1.bf16.msra.mxu0 %v3212
    %3461 = vmatprep.subr.bf16.mxu0 %v3273
    %3462 = vmatpush2.bf16.msra.mxu0 %v3272
    %3463 = vmatprep.subr.bf16.mxu0 %v3269
    %3464 = vmatpush2.bf16.msra.mxu0 %v3268
    %3465 = vmatprep.subr.bf16.mxu0 %v3265
    %3466 = vmatpush2.bf16.msra.mxu0 %v3264
    %3467 = vmatprep.subr.bf16.mxu0 %v3261
    %3468 = vmatpush2.bf16.msra.mxu0 %v3260
    %3469 = vmatprep.subr.bf16.mxu0 %v3257
    %3470 = vmatpush2.bf16.msra.mxu0 %v3256
    %3471 = vmatprep.subr.bf16.mxu0 %v3253
    %3472 = vmatpush2.bf16.msra.mxu0 %v3252
    %3473 = vmatprep.subr.bf16.mxu0 %v3249
    %3474 = vmatpush2.bf16.msra.mxu0 %v3248
    %3475 = vmatprep.subr.bf16.mxu0 %v3245
    %3476 = vmatpush2.bf16.msra.mxu0 %v3244
    %3477 = vmatprep.mubr.bf16.mxu0 %v2611
    %3478 = vmatmul.mubr.bf16.gmra.mxu0 %v2610
    %v3479 = vpop.f32.mrf.mxu0
    %v3480 = vadd.f32 %v3439, %v3479
    %v3481 = vpop.f32.mrf.mxu0
    %v3482 = vadd.f32 %v3441, %v3481
    %v3483 = vpop.f32.mrf.mxu0
    %v3484 = vpop.f32.mrf.mxu0
    %3485 = vdwg.mxu0
    %3486 = vmatprep.subr.bf16.mxu0 %v3179
    %3487 = vmatpush1.bf16.msra.mxu0 %v3178
    %3488 = vmatprep.subr.bf16.mxu0 %v3175
    %3489 = vmatpush1.bf16.msra.mxu0 %v3174
    %3490 = vmatprep.subr.bf16.mxu0 %v3171
    %3491 = vmatpush1.bf16.msra.mxu0 %v3170
    %3492 = vmatprep.subr.bf16.mxu0 %v3167
    %3493 = vmatpush1.bf16.msra.mxu0 %v3166
    %3494 = vmatprep.subr.bf16.mxu0 %v3163
    %3495 = vmatpush1.bf16.msra.mxu0 %v3162
    %3496 = vmatprep.subr.bf16.mxu0 %v3159
    %3497 = vmatpush1.bf16.msra.mxu0 %v3158
    %3498 = vmatprep.subr.bf16.mxu0 %v3155
    %3499 = vmatpush1.bf16.msra.mxu0 %v3154
    %3500 = vmatprep.subr.bf16.mxu0 %v3151
    %3501 = vmatpush1.bf16.msra.mxu0 %v3150
    %3502 = vmatprep.subr.bf16.mxu0 %v3211
    %3503 = vmatpush2.bf16.msra.mxu0 %v3210
    %3504 = vmatprep.subr.bf16.mxu0 %v3207
    %3505 = vmatpush2.bf16.msra.mxu0 %v3206
    %3506 = vmatprep.subr.bf16.mxu0 %v3203
    %3507 = vmatpush2.bf16.msra.mxu0 %v3202
    %3508 = vmatprep.subr.bf16.mxu0 %v3199
    %3509 = vmatpush2.bf16.msra.mxu0 %v3198
    %3510 = vmatprep.subr.bf16.mxu0 %v3195
    %3511 = vmatpush2.bf16.msra.mxu0 %v3194
    %3512 = vmatprep.subr.bf16.mxu0 %v3191
    %3513 = vmatpush2.bf16.msra.mxu0 %v3190
    %3514 = vmatprep.subr.bf16.mxu0 %v3187
    %3515 = vmatpush2.bf16.msra.mxu0 %v3186
    %3516 = vmatprep.subr.bf16.mxu0 %v3183
    %3517 = vmatpush2.bf16.msra.mxu0 %v3182
    %3518 = vmatprep.mubr.bf16.mxu0 %v2609
    %3519 = vmatmul.mubr.bf16.gmra.mxu0 %v2608
    %v3520 = vpop.f32.mrf.mxu0
    %v3521 = vadd.f32 %v2755, %v3520
    %v3522 = vpop.f32.mrf.mxu0
    %v3523 = vadd.f32 %v2759, %v3522
    %v3524 = vpop.f32.mrf.mxu0
    %v3525 = vpop.f32.mrf.mxu0
    %3526 = vdwg.mxu0
    %3527 = vmatprep.subr.bf16.mxu0 %v3243
    %3528 = vmatpush1.bf16.msra.mxu0 %v3242
    %3529 = vmatprep.subr.bf16.mxu0 %v3239
    %3530 = vmatpush1.bf16.msra.mxu0 %v3238
    %3531 = vmatprep.subr.bf16.mxu0 %v3235
    %3532 = vmatpush1.bf16.msra.mxu0 %v3234
    %3533 = vmatprep.subr.bf16.mxu0 %v3231
    %3534 = vmatpush1.bf16.msra.mxu0 %v3230
    %3535 = vmatprep.subr.bf16.mxu0 %v3227
    %3536 = vmatpush1.bf16.msra.mxu0 %v3226
    %3537 = vmatprep.subr.bf16.mxu0 %v3223
    %3538 = vmatpush1.bf16.msra.mxu0 %v3222
    %3539 = vmatprep.subr.bf16.mxu0 %v3219
    %3540 = vmatpush1.bf16.msra.mxu0 %v3218
    %3541 = vmatprep.subr.bf16.mxu0 %v3215
    %3542 = vmatpush1.bf16.msra.mxu0 %v3214
    %3543 = vmatprep.subr.bf16.mxu0 %v3275
    %3544 = vmatpush2.bf16.msra.mxu0 %v3274
    %3545 = vmatprep.subr.bf16.mxu0 %v3271
    %3546 = vmatpush2.bf16.msra.mxu0 %v3270
    %3547 = vmatprep.subr.bf16.mxu0 %v3267
    %3548 = vmatpush2.bf16.msra.mxu0 %v3266
    %3549 = vmatprep.subr.bf16.mxu0 %v3263
    %3550 = vmatpush2.bf16.msra.mxu0 %v3262
    %3551 = vmatprep.subr.bf16.mxu0 %v3259
    %3552 = vmatpush2.bf16.msra.mxu0 %v3258
    %3553 = vmatprep.subr.bf16.mxu0 %v3255
    %3554 = vmatpush2.bf16.msra.mxu0 %v3254
    %3555 = vmatprep.subr.bf16.mxu0 %v3251
    %3556 = vmatpush2.bf16.msra.mxu0 %v3250
    %3557 = vmatprep.subr.bf16.mxu0 %v3247
    %3558 = vmatpush2.bf16.msra.mxu0 %v3246
    %3559 = vmatprep.mubr.bf16.mxu0 %v2611
    %3560 = vmatmul.mubr.bf16.gmra.mxu0 %v2610
    %v3561 = vpop.f32.mrf.mxu0
    %v3562 = vadd.f32 %v3521, %v3561
    %v3563 = vpop.f32.mrf.mxu0
    %v3564 = vadd.f32 %v3523, %v3563
    %v3565 = vpop.f32.mrf.mxu0
    %v3566 = vpop.f32.mrf.mxu0
    %3567 = vdwg.mxu0
    %v3568 = vmax.f32 %v3480, 0.0
    %v3569 = vmax.f32 %v3482, 0.0
    %v3570 = vmax.f32 %v3562, 0.0
    %v3571 = vmax.f32 %v3564, 0.0
    %s3572 = scalar_lea.vmem [#allocation11], 8
    %v3573 = vld [vmem:[%s3572] sm:$0xf]
    %v3575 = vlaneseq
    %v3576 = vshrl.u32 %v3575, 7
    %v3577 = vsub.s32 0, %v3576
    %v3578 = vrot.slane %v3573, %v3577
    %v3579 = vlaneseq
    %v3580 = vshrl.u32 %v3579, 7
    %v3581 = vsub.s32 1, %v3580
    %v3582 = vrot.slane %v3573, %v3581
    %v3583 = vlaneseq
    %v3584 = vshrl.u32 %v3583, 7
    %v3585 = vsub.s32 2, %v3584
    %v3586 = vrot.slane %v3573, %v3585
    %v3587 = vlaneseq
    %v3588 = vshrl.u32 %v3587, 7
    %v3589 = vsub.s32 3, %v3588
    %v3590 = vrot.slane %v3573, %v3589
    %v3595 = vmul.f32 %v3568, %v3578
    %v3596 = vmul.f32 %v3569, %v3582
    %v3597 = vmul.f32 %v3570, %v3586
    %v3598 = vmul.f32 %v3571, %v3590
    %v3599 = vsel %vm1259, %v3595, 0.0
    %v3600 = vsel %vm1259, %v3596, 0.0
    %v3601 = vadd.f32 %v3599, %v3600
    %v3602 = vsel %vm1259, %v3597, 0.0
    %v3603 = vadd.f32 %v3601, %v3602
    %v3604 = vsel %vm1259, %v3598, 0.0
    %v3605 = vadd.f32 %v3603, %v3604
    %3606 = vadd.xlane.f32.xlu0 %v3605
    %v3607 = vpop.xlane.xlu0 %3606
    %s3608 = scalar_lea.vmem %s6, 2
    %v3609 = vld [vmem:[%s3608] sm:$0x1]
    %v3611 = vlaneseq
    %v3612 = vshrl.u32 %v3611, 7
    %v3613 = vsub.s32 0, %v3612
    %v3614 = vrot.slane %v3609, %v3613
    %v3616 = vadd.f32 %v3607, %v3614
    %v3617 = vmul.f32 %v3616, 0.01
    %v3618 = vtanh.pop %v3617
    %v3619 = vmul.f32 %v3618, 100.0
    %s3620 = scalar_lea.vmem [#allocation5], 144
    %v3621 = vld [vmem:[%s3620] sm:$0xff]
    %v3622 = vld [vmem:[%s3620 + $0x8] sm:$0xff]
    %v3623 = vld [vmem:[%s3620 + $0x10] sm:$0xff]
    %v3624 = vld [vmem:[%s3620 + $0x18] sm:$0xff]
    %v3625 = vld [vmem:[%s3620 + $0x20] sm:$0xff]
    %v3626 = vld [vmem:[%s3620 + $0x28] sm:$0xff]
    %s3627 = scalar_lea.vmem [#allocation7], 12
    %v3628 = vld [vmem:[%s3627] sm:$0xf]
    %v3630 = vlaneseq
    %v3631 = vshrl.u32 %v3630, 7
    %v3632 = vsub.s32 0, %v3631
    %v3633 = vrot.slane %v3628, %v3632
    %v3634 = vlaneseq
    %v3635 = vshrl.u32 %v3634, 7
    %v3636 = vsub.s32 1, %v3635
    %v3637 = vrot.slane %v3628, %v3636
    %v3638 = vlaneseq
    %v3639 = vshrl.u32 %v3638, 7
    %v3640 = vsub.s32 2, %v3639
    %v3641 = vrot.slane %v3628, %v3640
    %v3642 = vlaneseq
    %v3643 = vshrl.u32 %v3642, 7
    %v3644 = vsub.s32 3, %v3643
    %v3645 = vrot.slane %v3628, %v3644
    %v3656 = vunpack.c.l.b16 %v3621
    %v3657 = vunpack.c.h.b16 %v3621
    %v3658 = vunpack.c.l.b16 %v3622
    %v3659 = vunpack.c.h.b16 %v3622
    %v3660 = vunpack.c.l.b16 %v3623
    %v3661 = vunpack.c.h.b16 %v3623
    %v3662 = vunpack.c.l.b16 %v3624
    %v3663 = vunpack.c.h.b16 %v3624
    %v3664 = vunpack.c.l.b16 %v3625
    %v3665 = vunpack.c.h.b16 %v3625
    %v3666 = vunpack.c.l.b16 %v3626
    %v3667 = vunpack.c.h.b16 %v3626
    %v3668 = vpack.c.b16 %v3660, %v3656
    %v3669 = vpack.c.b16 %v3661, %v3657
    %v3670 = vpack.c.b16 %v3662, %v3658
    %v3671 = vpack.c.b16 %v3663, %v3659
    %v3672 = vpack.c.b16 %v3664, %v3664
    %v3673 = vpack.c.b16 %v3665, %v3665
    %v3674 = vpack.c.b16 %v3666, %v3666
    %v3675 = vpack.c.b16 %v3667, %v3667
    %v3681 = vsel %vm172, %v3672, 0
    %v3684 = vsel %vm172, %v3673, 0
    %v3687 = vsel %vm172, %v3674, 0
    %v3690 = vsel %vm172, %v3675, 0
    %3692 = vmatprep.subr.bf16.mxu0 0
    %3693 = vmatpush1.bf16.msra.mxu0 0
    %3694 = vmatprep.subr.bf16.mxu0 0
    %3695 = vmatpush1.bf16.msra.mxu0 0
    %3696 = vmatprep.subr.bf16.mxu0 0
    %3697 = vmatpush1.bf16.msra.mxu0 0
    %3698 = vmatprep.subr.bf16.mxu0 0
    %3699 = vmatpush1.bf16.msra.mxu0 0
    %3700 = vmatprep.subr.bf16.mxu0 0
    %3701 = vmatpush1.bf16.msra.mxu0 0
    %3702 = vmatprep.subr.bf16.mxu0 0
    %3703 = vmatpush1.bf16.msra.mxu0 0
    %3704 = vmatprep.subr.bf16.mxu0 %v3684
    %3705 = vmatpush1.bf16.msra.mxu0 %v3681
    %3706 = vmatprep.subr.bf16.mxu0 %v3669
    %3707 = vmatpush1.bf16.msra.mxu0 %v3668
    %3708 = vmatprep.subr.bf16.mxu0 0
    %3709 = vmatpush2.bf16.msra.mxu0 0
    %3710 = vmatprep.subr.bf16.mxu0 0
    %3711 = vmatpush2.bf16.msra.mxu0 0
    %3712 = vmatprep.subr.bf16.mxu0 0
    %3713 = vmatpush2.bf16.msra.mxu0 0
    %3714 = vmatprep.subr.bf16.mxu0 0
    %3715 = vmatpush2.bf16.msra.mxu0 0
    %3716 = vmatprep.subr.bf16.mxu0 0
    %3717 = vmatpush2.bf16.msra.mxu0 0
    %3718 = vmatprep.subr.bf16.mxu0 0
    %3719 = vmatpush2.bf16.msra.mxu0 0
    %3720 = vmatprep.subr.bf16.mxu0 0
    %3721 = vmatpush2.bf16.msra.mxu0 0
    %3722 = vmatprep.subr.bf16.mxu0 0
    %3723 = vmatpush2.bf16.msra.mxu0 0
    %3724 = vmatprep.mubr.bf16.mxu0 0
    %3725 = vmatmul.mubr.bf16.gmra.mxu0 %v170
    %v3726 = vpop.f32.mrf.mxu0
    %v3727 = vadd.f32 %v3633, %v3726
    %v3728 = vpop.f32.mrf.mxu0
    %v3729 = vadd.f32 %v3637, %v3728
    %v3730 = vpop.f32.mrf.mxu0
    %v3731 = vpop.f32.mrf.mxu0
    %3732 = vdwg.mxu0
    %3733 = vmatprep.subr.bf16.mxu0 0
    %3734 = vmatpush1.bf16.msra.mxu0 0
    %3735 = vmatprep.subr.bf16.mxu0 0
    %3736 = vmatpush1.bf16.msra.mxu0 0
    %3737 = vmatprep.subr.bf16.mxu0 0
    %3738 = vmatpush1.bf16.msra.mxu0 0
    %3739 = vmatprep.subr.bf16.mxu0 0
    %3740 = vmatpush1.bf16.msra.mxu0 0
    %3741 = vmatprep.subr.bf16.mxu0 0
    %3742 = vmatpush1.bf16.msra.mxu0 0
    %3743 = vmatprep.subr.bf16.mxu0 0
    %3744 = vmatpush1.bf16.msra.mxu0 0
    %3745 = vmatprep.subr.bf16.mxu0 %v3690
    %3746 = vmatpush1.bf16.msra.mxu0 %v3687
    %3747 = vmatprep.subr.bf16.mxu0 %v3671
    %3748 = vmatpush1.bf16.msra.mxu0 %v3670
    %3749 = vmatprep.subr.bf16.mxu0 0
    %3750 = vmatpush2.bf16.msra.mxu0 0
    %3751 = vmatprep.subr.bf16.mxu0 0
    %3752 = vmatpush2.bf16.msra.mxu0 0
    %3753 = vmatprep.subr.bf16.mxu0 0
    %3754 = vmatpush2.bf16.msra.mxu0 0
    %3755 = vmatprep.subr.bf16.mxu0 0
    %3756 = vmatpush2.bf16.msra.mxu0 0
    %3757 = vmatprep.subr.bf16.mxu0 0
    %3758 = vmatpush2.bf16.msra.mxu0 0
    %3759 = vmatprep.subr.bf16.mxu0 0
    %3760 = vmatpush2.bf16.msra.mxu0 0
    %3761 = vmatprep.subr.bf16.mxu0 0
    %3762 = vmatpush2.bf16.msra.mxu0 0
    %3763 = vmatprep.subr.bf16.mxu0 0
    %3764 = vmatpush2.bf16.msra.mxu0 0
    %3765 = vmatprep.mubr.bf16.mxu0 0
    %3766 = vmatmul.mubr.bf16.gmra.mxu0 %v170
    %v3767 = vpop.f32.mrf.mxu0
    %v3768 = vadd.f32 %v3641, %v3767
    %v3769 = vpop.f32.mrf.mxu0
    %v3770 = vadd.f32 %v3645, %v3769
    %v3771 = vpop.f32.mrf.mxu0
    %v3772 = vpop.f32.mrf.mxu0
    %3773 = vdwg.mxu0
    %v3774 = vmax.f32 %v3727, 0.0
    %v3775 = vmax.f32 %v3729, 0.0
    %v3776 = vmax.f32 %v3768, 0.0
    %v3777 = vmax.f32 %v3770, 0.0
    %v3778 = vpack.c.bf16 %v3774, %v3774
    %v3779 = vpack.c.bf16 %v3775, %v3775
    %v3780 = vpack.c.bf16 %v3776, %v3776
    %v3781 = vpack.c.bf16 %v3777, %v3777
    %s3782 = scalar_lea.vmem [#allocation8], 3072
    %v3783 = vld [vmem:[%s3782] sm:$0xff]
    %v3784 = vld [vmem:[%s3782 + $0x8] sm:$0xff]
    %v3785 = vld [vmem:[%s3782 + $0x10] sm:$0xff]
    %v3786 = vld [vmem:[%s3782 + $0x18] sm:$0xff]
    %v3787 = vld [vmem:[%s3782 + $0x20] sm:$0xff]
    %v3788 = vld [vmem:[%s3782 + $0x28] sm:$0xff]
    %v3789 = vld [vmem:[%s3782 + $0x30] sm:$0xff]
    %v3790 = vld [vmem:[%s3782 + $0x38] sm:$0xff]
    %v3791 = vld [vmem:[%s3782 + $0x40] sm:$0xff]
    %v3792 = vld [vmem:[%s3782 + $0x48] sm:$0xff]
    %v3793 = vld [vmem:[%s3782 + $0x50] sm:$0xff]
    %v3794 = vld [vmem:[%s3782 + $0x58] sm:$0xff]
    %v3795 = vld [vmem:[%s3782 + $0x60] sm:$0xff]
    %v3796 = vld [vmem:[%s3782 + $0x68] sm:$0xff]
    %v3797 = vld [vmem:[%s3782 + $0x70] sm:$0xff]
    %v3798 = vld [vmem:[%s3782 + $0x78] sm:$0xff]
    %v3799 = vld [vmem:[%s3782 + $0x80] sm:$0xff]
    %v3800 = vld [vmem:[%s3782 + $0x88] sm:$0xff]
    %v3801 = vld [vmem:[%s3782 + $0x90] sm:$0xff]
    %v3802 = vld [vmem:[%s3782 + $0x98] sm:$0xff]
    %v3803 = vld [vmem:[%s3782 + $0xa0] sm:$0xff]
    %v3804 = vld [vmem:[%s3782 + $0xa8] sm:$0xff]
    %v3805 = vld [vmem:[%s3782 + $0xb0] sm:$0xff]
    %v3806 = vld [vmem:[%s3782 + $0xb8] sm:$0xff]
    %v3807 = vld [vmem:[%s3782 + $0xc0] sm:$0xff]
    %v3808 = vld [vmem:[%s3782 + $0xc8] sm:$0xff]
    %v3809 = vld [vmem:[%s3782 + $0xd0] sm:$0xff]
    %v3810 = vld [vmem:[%s3782 + $0xd8] sm:$0xff]
    %v3811 = vld [vmem:[%s3782 + $0xe0] sm:$0xff]
    %v3812 = vld [vmem:[%s3782 + $0xe8] sm:$0xff]
    %v3813 = vld [vmem:[%s3782 + $0xf0] sm:$0xff]
    %v3814 = vld [vmem:[%s3782 + $0xf8] sm:$0xff]
    %v3815 = vld [vmem:[%s3782 + $0x100] sm:$0xff]
    %v3816 = vld [vmem:[%s3782 + $0x108] sm:$0xff]
    %v3817 = vld [vmem:[%s3782 + $0x110] sm:$0xff]
    %v3818 = vld [vmem:[%s3782 + $0x118] sm:$0xff]
    %v3819 = vld [vmem:[%s3782 + $0x120] sm:$0xff]
    %v3820 = vld [vmem:[%s3782 + $0x128] sm:$0xff]
    %v3821 = vld [vmem:[%s3782 + $0x130] sm:$0xff]
    %v3822 = vld [vmem:[%s3782 + $0x138] sm:$0xff]
    %v3823 = vld [vmem:[%s3782 + $0x140] sm:$0xff]
    %v3824 = vld [vmem:[%s3782 + $0x148] sm:$0xff]
    %v3825 = vld [vmem:[%s3782 + $0x150] sm:$0xff]
    %v3826 = vld [vmem:[%s3782 + $0x158] sm:$0xff]
    %v3827 = vld [vmem:[%s3782 + $0x160] sm:$0xff]
    %v3828 = vld [vmem:[%s3782 + $0x168] sm:$0xff]
    %v3829 = vld [vmem:[%s3782 + $0x170] sm:$0xff]
    %v3830 = vld [vmem:[%s3782 + $0x178] sm:$0xff]
    %v3831 = vld [vmem:[%s3782 + $0x180] sm:$0xff]
    %v3832 = vld [vmem:[%s3782 + $0x188] sm:$0xff]
    %v3833 = vld [vmem:[%s3782 + $0x190] sm:$0xff]
    %v3834 = vld [vmem:[%s3782 + $0x198] sm:$0xff]
    %v3835 = vld [vmem:[%s3782 + $0x1a0] sm:$0xff]
    %v3836 = vld [vmem:[%s3782 + $0x1a8] sm:$0xff]
    %v3837 = vld [vmem:[%s3782 + $0x1b0] sm:$0xff]
    %v3838 = vld [vmem:[%s3782 + $0x1b8] sm:$0xff]
    %v3839 = vld [vmem:[%s3782 + $0x1c0] sm:$0xff]
    %v3840 = vld [vmem:[%s3782 + $0x1c8] sm:$0xff]
    %v3841 = vld [vmem:[%s3782 + $0x1d0] sm:$0xff]
    %v3842 = vld [vmem:[%s3782 + $0x1d8] sm:$0xff]
    %v3843 = vld [vmem:[%s3782 + $0x1e0] sm:$0xff]
    %v3844 = vld [vmem:[%s3782 + $0x1e8] sm:$0xff]
    %v3845 = vld [vmem:[%s3782 + $0x1f0] sm:$0xff]
    %v3846 = vld [vmem:[%s3782 + $0x1f8] sm:$0xff]
    %v3847 = vld [vmem:[%s3782 + $0x200] sm:$0xff]
    %v3848 = vld [vmem:[%s3782 + $0x208] sm:$0xff]
    %v3849 = vld [vmem:[%s3782 + $0x210] sm:$0xff]
    %v3850 = vld [vmem:[%s3782 + $0x218] sm:$0xff]
    %v3851 = vld [vmem:[%s3782 + $0x220] sm:$0xff]
    %v3852 = vld [vmem:[%s3782 + $0x228] sm:$0xff]
    %v3853 = vld [vmem:[%s3782 + $0x230] sm:$0xff]
    %v3854 = vld [vmem:[%s3782 + $0x238] sm:$0xff]
    %v3855 = vld [vmem:[%s3782 + $0x240] sm:$0xff]
    %v3856 = vld [vmem:[%s3782 + $0x248] sm:$0xff]
    %v3857 = vld [vmem:[%s3782 + $0x250] sm:$0xff]
    %v3858 = vld [vmem:[%s3782 + $0x258] sm:$0xff]
    %v3859 = vld [vmem:[%s3782 + $0x260] sm:$0xff]
    %v3860 = vld [vmem:[%s3782 + $0x268] sm:$0xff]
    %v3861 = vld [vmem:[%s3782 + $0x270] sm:$0xff]
    %v3862 = vld [vmem:[%s3782 + $0x278] sm:$0xff]
    %v3863 = vld [vmem:[%s3782 + $0x280] sm:$0xff]
    %v3864 = vld [vmem:[%s3782 + $0x288] sm:$0xff]
    %v3865 = vld [vmem:[%s3782 + $0x290] sm:$0xff]
    %v3866 = vld [vmem:[%s3782 + $0x298] sm:$0xff]
    %v3867 = vld [vmem:[%s3782 + $0x2a0] sm:$0xff]
    %v3868 = vld [vmem:[%s3782 + $0x2a8] sm:$0xff]
    %v3869 = vld [vmem:[%s3782 + $0x2b0] sm:$0xff]
    %v3870 = vld [vmem:[%s3782 + $0x2b8] sm:$0xff]
    %v3871 = vld [vmem:[%s3782 + $0x2c0] sm:$0xff]
    %v3872 = vld [vmem:[%s3782 + $0x2c8] sm:$0xff]
    %v3873 = vld [vmem:[%s3782 + $0x2d0] sm:$0xff]
    %v3874 = vld [vmem:[%s3782 + $0x2d8] sm:$0xff]
    %v3875 = vld [vmem:[%s3782 + $0x2e0] sm:$0xff]
    %v3876 = vld [vmem:[%s3782 + $0x2e8] sm:$0xff]
    %v3877 = vld [vmem:[%s3782 + $0x2f0] sm:$0xff]
    %v3878 = vld [vmem:[%s3782 + $0x2f8] sm:$0xff]
    %v3879 = vld [vmem:[%s3782 + $0x300] sm:$0xff]
    %v3880 = vld [vmem:[%s3782 + $0x308] sm:$0xff]
    %v3881 = vld [vmem:[%s3782 + $0x310] sm:$0xff]
    %v3882 = vld [vmem:[%s3782 + $0x318] sm:$0xff]
    %v3883 = vld [vmem:[%s3782 + $0x320] sm:$0xff]
    %v3884 = vld [vmem:[%s3782 + $0x328] sm:$0xff]
    %v3885 = vld [vmem:[%s3782 + $0x330] sm:$0xff]
    %v3886 = vld [vmem:[%s3782 + $0x338] sm:$0xff]
    %v3887 = vld [vmem:[%s3782 + $0x340] sm:$0xff]
    %v3888 = vld [vmem:[%s3782 + $0x348] sm:$0xff]
    %v3889 = vld [vmem:[%s3782 + $0x350] sm:$0xff]
    %v3890 = vld [vmem:[%s3782 + $0x358] sm:$0xff]
    %v3891 = vld [vmem:[%s3782 + $0x360] sm:$0xff]
    %v3892 = vld [vmem:[%s3782 + $0x368] sm:$0xff]
    %v3893 = vld [vmem:[%s3782 + $0x370] sm:$0xff]
    %v3894 = vld [vmem:[%s3782 + $0x378] sm:$0xff]
    %v3895 = vld [vmem:[%s3782 + $0x380] sm:$0xff]
    %v3896 = vld [vmem:[%s3782 + $0x388] sm:$0xff]
    %v3897 = vld [vmem:[%s3782 + $0x390] sm:$0xff]
    %v3898 = vld [vmem:[%s3782 + $0x398] sm:$0xff]
    %v3899 = vld [vmem:[%s3782 + $0x3a0] sm:$0xff]
    %v3900 = vld [vmem:[%s3782 + $0x3a8] sm:$0xff]
    %v3901 = vld [vmem:[%s3782 + $0x3b0] sm:$0xff]
    %v3902 = vld [vmem:[%s3782 + $0x3b8] sm:$0xff]
    %v3903 = vld [vmem:[%s3782 + $0x3c0] sm:$0xff]
    %v3904 = vld [vmem:[%s3782 + $0x3c8] sm:$0xff]
    %v3905 = vld [vmem:[%s3782 + $0x3d0] sm:$0xff]
    %v3906 = vld [vmem:[%s3782 + $0x3d8] sm:$0xff]
    %v3907 = vld [vmem:[%s3782 + $0x3e0] sm:$0xff]
    %v3908 = vld [vmem:[%s3782 + $0x3e8] sm:$0xff]
    %v3909 = vld [vmem:[%s3782 + $0x3f0] sm:$0xff]
    %v3910 = vld [vmem:[%s3782 + $0x3f8] sm:$0xff]
    %s3911 = scalar_lea.vmem [#allocation10], 12
    %v3912 = vld [vmem:[%s3911] sm:$0xf]
    %v3914 = vlaneseq
    %v3915 = vshrl.u32 %v3914, 7
    %v3916 = vsub.s32 0, %v3915
    %v3917 = vrot.slane %v3912, %v3916
    %v3918 = vlaneseq
    %v3919 = vshrl.u32 %v3918, 7
    %v3920 = vsub.s32 1, %v3919
    %v3921 = vrot.slane %v3912, %v3920
    %v3922 = vlaneseq
    %v3923 = vshrl.u32 %v3922, 7
    %v3924 = vsub.s32 2, %v3923
    %v3925 = vrot.slane %v3912, %v3924
    %v3926 = vlaneseq
    %v3927 = vshrl.u32 %v3926, 7
    %v3928 = vsub.s32 3, %v3927
    %v3929 = vrot.slane %v3912, %v3928
    %v4062 = vunpack.c.l.b16 %v3783
    %v4063 = vunpack.c.h.b16 %v3783
    %v4064 = vunpack.c.l.b16 %v3784
    %v4065 = vunpack.c.h.b16 %v3784
    %v4066 = vunpack.c.l.b16 %v3785
    %v4067 = vunpack.c.h.b16 %v3785
    %v4068 = vunpack.c.l.b16 %v3786
    %v4069 = vunpack.c.h.b16 %v3786
    %v4070 = vunpack.c.l.b16 %v3787
    %v4071 = vunpack.c.h.b16 %v3787
    %v4072 = vunpack.c.l.b16 %v3788
    %v4073 = vunpack.c.h.b16 %v3788
    %v4074 = vunpack.c.l.b16 %v3789
    %v4075 = vunpack.c.h.b16 %v3789
    %v4076 = vunpack.c.l.b16 %v3790
    %v4077 = vunpack.c.h.b16 %v3790
    %v4078 = vunpack.c.l.b16 %v3791
    %v4079 = vunpack.c.h.b16 %v3791
    %v4080 = vunpack.c.l.b16 %v3792
    %v4081 = vunpack.c.h.b16 %v3792
    %v4082 = vunpack.c.l.b16 %v3793
    %v4083 = vunpack.c.h.b16 %v3793
    %v4084 = vunpack.c.l.b16 %v3794
    %v4085 = vunpack.c.h.b16 %v3794
    %v4086 = vunpack.c.l.b16 %v3795
    %v4087 = vunpack.c.h.b16 %v3795
    %v4088 = vunpack.c.l.b16 %v3796
    %v4089 = vunpack.c.h.b16 %v3796
    %v4090 = vunpack.c.l.b16 %v3797
    %v4091 = vunpack.c.h.b16 %v3797
    %v4092 = vunpack.c.l.b16 %v3798
    %v4093 = vunpack.c.h.b16 %v3798
    %v4094 = vunpack.c.l.b16 %v3799
    %v4095 = vunpack.c.h.b16 %v3799
    %v4096 = vunpack.c.l.b16 %v3800
    %v4097 = vunpack.c.h.b16 %v3800
    %v4098 = vunpack.c.l.b16 %v3801
    %v4099 = vunpack.c.h.b16 %v3801
    %v4100 = vunpack.c.l.b16 %v3802
    %v4101 = vunpack.c.h.b16 %v3802
    %v4102 = vunpack.c.l.b16 %v3803
    %v4103 = vunpack.c.h.b16 %v3803
    %v4104 = vunpack.c.l.b16 %v3804
    %v4105 = vunpack.c.h.b16 %v3804
    %v4106 = vunpack.c.l.b16 %v3805
    %v4107 = vunpack.c.h.b16 %v3805
    %v4108 = vunpack.c.l.b16 %v3806
    %v4109 = vunpack.c.h.b16 %v3806
    %v4110 = vunpack.c.l.b16 %v3807
    %v4111 = vunpack.c.h.b16 %v3807
    %v4112 = vunpack.c.l.b16 %v3808
    %v4113 = vunpack.c.h.b16 %v3808
    %v4114 = vunpack.c.l.b16 %v3809
    %v4115 = vunpack.c.h.b16 %v3809
    %v4116 = vunpack.c.l.b16 %v3810
    %v4117 = vunpack.c.h.b16 %v3810
    %v4118 = vunpack.c.l.b16 %v3811
    %v4119 = vunpack.c.h.b16 %v3811
    %v4120 = vunpack.c.l.b16 %v3812
    %v4121 = vunpack.c.h.b16 %v3812
    %v4122 = vunpack.c.l.b16 %v3813
    %v4123 = vunpack.c.h.b16 %v3813
    %v4124 = vunpack.c.l.b16 %v3814
    %v4125 = vunpack.c.h.b16 %v3814
    %v4126 = vunpack.c.l.b16 %v3815
    %v4127 = vunpack.c.h.b16 %v3815
    %v4128 = vunpack.c.l.b16 %v3816
    %v4129 = vunpack.c.h.b16 %v3816
    %v4130 = vunpack.c.l.b16 %v3817
    %v4131 = vunpack.c.h.b16 %v3817
    %v4132 = vunpack.c.l.b16 %v3818
    %v4133 = vunpack.c.h.b16 %v3818
    %v4134 = vunpack.c.l.b16 %v3819
    %v4135 = vunpack.c.h.b16 %v3819
    %v4136 = vunpack.c.l.b16 %v3820
    %v4137 = vunpack.c.h.b16 %v3820
    %v4138 = vunpack.c.l.b16 %v3821
    %v4139 = vunpack.c.h.b16 %v3821
    %v4140 = vunpack.c.l.b16 %v3822
    %v4141 = vunpack.c.h.b16 %v3822
    %v4142 = vunpack.c.l.b16 %v3823
    %v4143 = vunpack.c.h.b16 %v3823
    %v4144 = vunpack.c.l.b16 %v3824
    %v4145 = vunpack.c.h.b16 %v3824
    %v4146 = vunpack.c.l.b16 %v3825
    %v4147 = vunpack.c.h.b16 %v3825
    %v4148 = vunpack.c.l.b16 %v3826
    %v4149 = vunpack.c.h.b16 %v3826
    %v4150 = vunpack.c.l.b16 %v3827
    %v4151 = vunpack.c.h.b16 %v3827
    %v4152 = vunpack.c.l.b16 %v3828
    %v4153 = vunpack.c.h.b16 %v3828
    %v4154 = vunpack.c.l.b16 %v3829
    %v4155 = vunpack.c.h.b16 %v3829
    %v4156 = vunpack.c.l.b16 %v3830
    %v4157 = vunpack.c.h.b16 %v3830
    %v4158 = vunpack.c.l.b16 %v3831
    %v4159 = vunpack.c.h.b16 %v3831
    %v4160 = vunpack.c.l.b16 %v3832
    %v4161 = vunpack.c.h.b16 %v3832
    %v4162 = vunpack.c.l.b16 %v3833
    %v4163 = vunpack.c.h.b16 %v3833
    %v4164 = vunpack.c.l.b16 %v3834
    %v4165 = vunpack.c.h.b16 %v3834
    %v4166 = vunpack.c.l.b16 %v3835
    %v4167 = vunpack.c.h.b16 %v3835
    %v4168 = vunpack.c.l.b16 %v3836
    %v4169 = vunpack.c.h.b16 %v3836
    %v4170 = vunpack.c.l.b16 %v3837
    %v4171 = vunpack.c.h.b16 %v3837
    %v4172 = vunpack.c.l.b16 %v3838
    %v4173 = vunpack.c.h.b16 %v3838
    %v4174 = vunpack.c.l.b16 %v3839
    %v4175 = vunpack.c.h.b16 %v3839
    %v4176 = vunpack.c.l.b16 %v3840
    %v4177 = vunpack.c.h.b16 %v3840
    %v4178 = vunpack.c.l.b16 %v3841
    %v4179 = vunpack.c.h.b16 %v3841
    %v4180 = vunpack.c.l.b16 %v3842
    %v4181 = vunpack.c.h.b16 %v3842
    %v4182 = vunpack.c.l.b16 %v3843
    %v4183 = vunpack.c.h.b16 %v3843
    %v4184 = vunpack.c.l.b16 %v3844
    %v4185 = vunpack.c.h.b16 %v3844
    %v4186 = vunpack.c.l.b16 %v3845
    %v4187 = vunpack.c.h.b16 %v3845
    %v4188 = vunpack.c.l.b16 %v3846
    %v4189 = vunpack.c.h.b16 %v3846
    %v4190 = vunpack.c.l.b16 %v3847
    %v4191 = vunpack.c.h.b16 %v3847
    %v4192 = vunpack.c.l.b16 %v3848
    %v4193 = vunpack.c.h.b16 %v3848
    %v4194 = vunpack.c.l.b16 %v3849
    %v4195 = vunpack.c.h.b16 %v3849
    %v4196 = vunpack.c.l.b16 %v3850
    %v4197 = vunpack.c.h.b16 %v3850
    %v4198 = vunpack.c.l.b16 %v3851
    %v4199 = vunpack.c.h.b16 %v3851
    %v4200 = vunpack.c.l.b16 %v3852
    %v4201 = vunpack.c.h.b16 %v3852
    %v4202 = vunpack.c.l.b16 %v3853
    %v4203 = vunpack.c.h.b16 %v3853
    %v4204 = vunpack.c.l.b16 %v3854
    %v4205 = vunpack.c.h.b16 %v3854
    %v4206 = vunpack.c.l.b16 %v3855
    %v4207 = vunpack.c.h.b16 %v3855
    %v4208 = vunpack.c.l.b16 %v3856
    %v4209 = vunpack.c.h.b16 %v3856
    %v4210 = vunpack.c.l.b16 %v3857
    %v4211 = vunpack.c.h.b16 %v3857
    %v4212 = vunpack.c.l.b16 %v3858
    %v4213 = vunpack.c.h.b16 %v3858
    %v4214 = vunpack.c.l.b16 %v3859
    %v4215 = vunpack.c.h.b16 %v3859
    %v4216 = vunpack.c.l.b16 %v3860
    %v4217 = vunpack.c.h.b16 %v3860
    %v4218 = vunpack.c.l.b16 %v3861
    %v4219 = vunpack.c.h.b16 %v3861
    %v4220 = vunpack.c.l.b16 %v3862
    %v4221 = vunpack.c.h.b16 %v3862
    %v4222 = vunpack.c.l.b16 %v3863
    %v4223 = vunpack.c.h.b16 %v3863
    %v4224 = vunpack.c.l.b16 %v3864
    %v4225 = vunpack.c.h.b16 %v3864
    %v4226 = vunpack.c.l.b16 %v3865
    %v4227 = vunpack.c.h.b16 %v3865
    %v4228 = vunpack.c.l.b16 %v3866
    %v4229 = vunpack.c.h.b16 %v3866
    %v4230 = vunpack.c.l.b16 %v3867
    %v4231 = vunpack.c.h.b16 %v3867
    %v4232 = vunpack.c.l.b16 %v3868
    %v4233 = vunpack.c.h.b16 %v3868
    %v4234 = vunpack.c.l.b16 %v3869
    %v4235 = vunpack.c.h.b16 %v3869
    %v4236 = vunpack.c.l.b16 %v3870
    %v4237 = vunpack.c.h.b16 %v3870
    %v4238 = vunpack.c.l.b16 %v3871
    %v4239 = vunpack.c.h.b16 %v3871
    %v4240 = vunpack.c.l.b16 %v3872
    %v4241 = vunpack.c.h.b16 %v3872
    %v4242 = vunpack.c.l.b16 %v3873
    %v4243 = vunpack.c.h.b16 %v3873
    %v4244 = vunpack.c.l.b16 %v3874
    %v4245 = vunpack.c.h.b16 %v3874
    %v4246 = vunpack.c.l.b16 %v3875
    %v4247 = vunpack.c.h.b16 %v3875
    %v4248 = vunpack.c.l.b16 %v3876
    %v4249 = vunpack.c.h.b16 %v3876
    %v4250 = vunpack.c.l.b16 %v3877
    %v4251 = vunpack.c.h.b16 %v3877
    %v4252 = vunpack.c.l.b16 %v3878
    %v4253 = vunpack.c.h.b16 %v3878
    %v4254 = vunpack.c.l.b16 %v3879
    %v4255 = vunpack.c.h.b16 %v3879
    %v4256 = vunpack.c.l.b16 %v3880
    %v4257 = vunpack.c.h.b16 %v3880
    %v4258 = vunpack.c.l.b16 %v3881
    %v4259 = vunpack.c.h.b16 %v3881
    %v4260 = vunpack.c.l.b16 %v3882
    %v4261 = vunpack.c.h.b16 %v3882
    %v4262 = vunpack.c.l.b16 %v3883
    %v4263 = vunpack.c.h.b16 %v3883
    %v4264 = vunpack.c.l.b16 %v3884
    %v4265 = vunpack.c.h.b16 %v3884
    %v4266 = vunpack.c.l.b16 %v3885
    %v4267 = vunpack.c.h.b16 %v3885
    %v4268 = vunpack.c.l.b16 %v3886
    %v4269 = vunpack.c.h.b16 %v3886
    %v4270 = vunpack.c.l.b16 %v3887
    %v4271 = vunpack.c.h.b16 %v3887
    %v4272 = vunpack.c.l.b16 %v3888
    %v4273 = vunpack.c.h.b16 %v3888
    %v4274 = vunpack.c.l.b16 %v3889
    %v4275 = vunpack.c.h.b16 %v3889
    %v4276 = vunpack.c.l.b16 %v3890
    %v4277 = vunpack.c.h.b16 %v3890
    %v4278 = vunpack.c.l.b16 %v3891
    %v4279 = vunpack.c.h.b16 %v3891
    %v4280 = vunpack.c.l.b16 %v3892
    %v4281 = vunpack.c.h.b16 %v3892
    %v4282 = vunpack.c.l.b16 %v3893
    %v4283 = vunpack.c.h.b16 %v3893
    %v4284 = vunpack.c.l.b16 %v3894
    %v4285 = vunpack.c.h.b16 %v3894
    %v4286 = vunpack.c.l.b16 %v3895
    %v4287 = vunpack.c.h.b16 %v3895
    %v4288 = vunpack.c.l.b16 %v3896
    %v4289 = vunpack.c.h.b16 %v3896
    %v4290 = vunpack.c.l.b16 %v3897
    %v4291 = vunpack.c.h.b16 %v3897
    %v4292 = vunpack.c.l.b16 %v3898
    %v4293 = vunpack.c.h.b16 %v3898
    %v4294 = vunpack.c.l.b16 %v3899
    %v4295 = vunpack.c.h.b16 %v3899
    %v4296 = vunpack.c.l.b16 %v3900
    %v4297 = vunpack.c.h.b16 %v3900
    %v4298 = vunpack.c.l.b16 %v3901
    %v4299 = vunpack.c.h.b16 %v3901
    %v4300 = vunpack.c.l.b16 %v3902
    %v4301 = vunpack.c.h.b16 %v3902
    %v4302 = vunpack.c.l.b16 %v3903
    %v4303 = vunpack.c.h.b16 %v3903
    %v4304 = vunpack.c.l.b16 %v3904
    %v4305 = vunpack.c.h.b16 %v3904
    %v4306 = vunpack.c.l.b16 %v3905
    %v4307 = vunpack.c.h.b16 %v3905
    %v4308 = vunpack.c.l.b16 %v3906
    %v4309 = vunpack.c.h.b16 %v3906
    %v4310 = vunpack.c.l.b16 %v3907
    %v4311 = vunpack.c.h.b16 %v3907
    %v4312 = vunpack.c.l.b16 %v3908
    %v4313 = vunpack.c.h.b16 %v3908
    %v4314 = vunpack.c.l.b16 %v3909
    %v4315 = vunpack.c.h.b16 %v3909
    %v4316 = vunpack.c.l.b16 %v3910
    %v4317 = vunpack.c.h.b16 %v3910
    %v4318 = vpack.c.b16 %v4066, %v4062
    %v4319 = vpack.c.b16 %v4067, %v4063
    %v4320 = vpack.c.b16 %v4068, %v4064
    %v4321 = vpack.c.b16 %v4069, %v4065
    %v4322 = vpack.c.b16 %v4074, %v4070
    %v4323 = vpack.c.b16 %v4075, %v4071
    %v4324 = vpack.c.b16 %v4076, %v4072
    %v4325 = vpack.c.b16 %v4077, %v4073
    %v4326 = vpack.c.b16 %v4082, %v4078
    %v4327 = vpack.c.b16 %v4083, %v4079
    %v4328 = vpack.c.b16 %v4084, %v4080
    %v4329 = vpack.c.b16 %v4085, %v4081
    %v4330 = vpack.c.b16 %v4090, %v4086
    %v4331 = vpack.c.b16 %v4091, %v4087
    %v4332 = vpack.c.b16 %v4092, %v4088
    %v4333 = vpack.c.b16 %v4093, %v4089
    %v4334 = vpack.c.b16 %v4098, %v4094
    %v4335 = vpack.c.b16 %v4099, %v4095
    %v4336 = vpack.c.b16 %v4100, %v4096
    %v4337 = vpack.c.b16 %v4101, %v4097
    %v4338 = vpack.c.b16 %v4106, %v4102
    %v4339 = vpack.c.b16 %v4107, %v4103
    %v4340 = vpack.c.b16 %v4108, %v4104
    %v4341 = vpack.c.b16 %v4109, %v4105
    %v4342 = vpack.c.b16 %v4114, %v4110
    %v4343 = vpack.c.b16 %v4115, %v4111
    %v4344 = vpack.c.b16 %v4116, %v4112
    %v4345 = vpack.c.b16 %v4117, %v4113
    %v4346 = vpack.c.b16 %v4122, %v4118
    %v4347 = vpack.c.b16 %v4123, %v4119
    %v4348 = vpack.c.b16 %v4124, %v4120
    %v4349 = vpack.c.b16 %v4125, %v4121
    %v4350 = vpack.c.b16 %v4130, %v4126
    %v4351 = vpack.c.b16 %v4131, %v4127
    %v4352 = vpack.c.b16 %v4132, %v4128
    %v4353 = vpack.c.b16 %v4133, %v4129
    %v4354 = vpack.c.b16 %v4138, %v4134
    %v4355 = vpack.c.b16 %v4139, %v4135
    %v4356 = vpack.c.b16 %v4140, %v4136
    %v4357 = vpack.c.b16 %v4141, %v4137
    %v4358 = vpack.c.b16 %v4146, %v4142
    %v4359 = vpack.c.b16 %v4147, %v4143
    %v4360 = vpack.c.b16 %v4148, %v4144
    %v4361 = vpack.c.b16 %v4149, %v4145
    %v4362 = vpack.c.b16 %v4154, %v4150
    %v4363 = vpack.c.b16 %v4155, %v4151
    %v4364 = vpack.c.b16 %v4156, %v4152
    %v4365 = vpack.c.b16 %v4157, %v4153
    %v4366 = vpack.c.b16 %v4162, %v4158
    %v4367 = vpack.c.b16 %v4163, %v4159
    %v4368 = vpack.c.b16 %v4164, %v4160
    %v4369 = vpack.c.b16 %v4165, %v4161
    %v4370 = vpack.c.b16 %v4170, %v4166
    %v4371 = vpack.c.b16 %v4171, %v4167
    %v4372 = vpack.c.b16 %v4172, %v4168
    %v4373 = vpack.c.b16 %v4173, %v4169
    %v4374 = vpack.c.b16 %v4178, %v4174
    %v4375 = vpack.c.b16 %v4179, %v4175
    %v4376 = vpack.c.b16 %v4180, %v4176
    %v4377 = vpack.c.b16 %v4181, %v4177
    %v4378 = vpack.c.b16 %v4186, %v4182
    %v4379 = vpack.c.b16 %v4187, %v4183
    %v4380 = vpack.c.b16 %v4188, %v4184
    %v4381 = vpack.c.b16 %v4189, %v4185
    %v4382 = vpack.c.b16 %v4194, %v4190
    %v4383 = vpack.c.b16 %v4195, %v4191
    %v4384 = vpack.c.b16 %v4196, %v4192
    %v4385 = vpack.c.b16 %v4197, %v4193
    %v4386 = vpack.c.b16 %v4202, %v4198
    %v4387 = vpack.c.b16 %v4203, %v4199
    %v4388 = vpack.c.b16 %v4204, %v4200
    %v4389 = vpack.c.b16 %v4205, %v4201
    %v4390 = vpack.c.b16 %v4210, %v4206
    %v4391 = vpack.c.b16 %v4211, %v4207
    %v4392 = vpack.c.b16 %v4212, %v4208
    %v4393 = vpack.c.b16 %v4213, %v4209
    %v4394 = vpack.c.b16 %v4218, %v4214
    %v4395 = vpack.c.b16 %v4219, %v4215
    %v4396 = vpack.c.b16 %v4220, %v4216
    %v4397 = vpack.c.b16 %v4221, %v4217
    %v4398 = vpack.c.b16 %v4226, %v4222
    %v4399 = vpack.c.b16 %v4227, %v4223
    %v4400 = vpack.c.b16 %v4228, %v4224
    %v4401 = vpack.c.b16 %v4229, %v4225
    %v4402 = vpack.c.b16 %v4234, %v4230
    %v4403 = vpack.c.b16 %v4235, %v4231
    %v4404 = vpack.c.b16 %v4236, %v4232
    %v4405 = vpack.c.b16 %v4237, %v4233
    %v4406 = vpack.c.b16 %v4242, %v4238
    %v4407 = vpack.c.b16 %v4243, %v4239
    %v4408 = vpack.c.b16 %v4244, %v4240
    %v4409 = vpack.c.b16 %v4245, %v4241
    %v4410 = vpack.c.b16 %v4250, %v4246
    %v4411 = vpack.c.b16 %v4251, %v4247
    %v4412 = vpack.c.b16 %v4252, %v4248
    %v4413 = vpack.c.b16 %v4253, %v4249
    %v4414 = vpack.c.b16 %v4258, %v4254
    %v4415 = vpack.c.b16 %v4259, %v4255
    %v4416 = vpack.c.b16 %v4260, %v4256
    %v4417 = vpack.c.b16 %v4261, %v4257
    %v4418 = vpack.c.b16 %v4266, %v4262
    %v4419 = vpack.c.b16 %v4267, %v4263
    %v4420 = vpack.c.b16 %v4268, %v4264
    %v4421 = vpack.c.b16 %v4269, %v4265
    %v4422 = vpack.c.b16 %v4274, %v4270
    %v4423 = vpack.c.b16 %v4275, %v4271
    %v4424 = vpack.c.b16 %v4276, %v4272
    %v4425 = vpack.c.b16 %v4277, %v4273
    %v4426 = vpack.c.b16 %v4282, %v4278
    %v4427 = vpack.c.b16 %v4283, %v4279
    %v4428 = vpack.c.b16 %v4284, %v4280
    %v4429 = vpack.c.b16 %v4285, %v4281
    %v4430 = vpack.c.b16 %v4290, %v4286
    %v4431 = vpack.c.b16 %v4291, %v4287
    %v4432 = vpack.c.b16 %v4292, %v4288
    %v4433 = vpack.c.b16 %v4293, %v4289
    %v4434 = vpack.c.b16 %v4298, %v4294
    %v4435 = vpack.c.b16 %v4299, %v4295
    %v4436 = vpack.c.b16 %v4300, %v4296
    %v4437 = vpack.c.b16 %v4301, %v4297
    %v4438 = vpack.c.b16 %v4306, %v4302
    %v4439 = vpack.c.b16 %v4307, %v4303
    %v4440 = vpack.c.b16 %v4308, %v4304
    %v4441 = vpack.c.b16 %v4309, %v4305
    %v4442 = vpack.c.b16 %v4314, %v4310
    %v4443 = vpack.c.b16 %v4315, %v4311
    %v4444 = vpack.c.b16 %v4316, %v4312
    %v4445 = vpack.c.b16 %v4317, %v4313
    %4574 = vmatprep.subr.bf16.mxu0 %v4347
    %4575 = vmatpush1.bf16.msra.mxu0 %v4346
    %4576 = vmatprep.subr.bf16.mxu0 %v4343
    %4577 = vmatpush1.bf16.msra.mxu0 %v4342
    %4578 = vmatprep.subr.bf16.mxu0 %v4339
    %4579 = vmatpush1.bf16.msra.mxu0 %v4338
    %4580 = vmatprep.subr.bf16.mxu0 %v4335
    %4581 = vmatpush1.bf16.msra.mxu0 %v4334
    %4582 = vmatprep.subr.bf16.mxu0 %v4331
    %4583 = vmatpush1.bf16.msra.mxu0 %v4330
    %4584 = vmatprep.subr.bf16.mxu0 %v4327
    %4585 = vmatpush1.bf16.msra.mxu0 %v4326
    %4586 = vmatprep.subr.bf16.mxu0 %v4323
    %4587 = vmatpush1.bf16.msra.mxu0 %v4322
    %4588 = vmatprep.subr.bf16.mxu0 %v4319
    %4589 = vmatpush1.bf16.msra.mxu0 %v4318
    %4590 = vmatprep.subr.bf16.mxu0 %v4379
    %4591 = vmatpush2.bf16.msra.mxu0 %v4378
    %4592 = vmatprep.subr.bf16.mxu0 %v4375
    %4593 = vmatpush2.bf16.msra.mxu0 %v4374
    %4594 = vmatprep.subr.bf16.mxu0 %v4371
    %4595 = vmatpush2.bf16.msra.mxu0 %v4370
    %4596 = vmatprep.subr.bf16.mxu0 %v4367
    %4597 = vmatpush2.bf16.msra.mxu0 %v4366
    %4598 = vmatprep.subr.bf16.mxu0 %v4363
    %4599 = vmatpush2.bf16.msra.mxu0 %v4362
    %4600 = vmatprep.subr.bf16.mxu0 %v4359
    %4601 = vmatpush2.bf16.msra.mxu0 %v4358
    %4602 = vmatprep.subr.bf16.mxu0 %v4355
    %4603 = vmatpush2.bf16.msra.mxu0 %v4354
    %4604 = vmatprep.subr.bf16.mxu0 %v4351
    %4605 = vmatpush2.bf16.msra.mxu0 %v4350
    %4606 = vmatprep.mubr.bf16.mxu0 %v3779
    %4607 = vmatmul.mubr.bf16.gmra.mxu0 %v3778
    %v4608 = vpop.f32.mrf.mxu0
    %v4609 = vadd.f32 %v3917, %v4608
    %v4610 = vpop.f32.mrf.mxu0
    %v4611 = vadd.f32 %v3921, %v4610
    %v4612 = vpop.f32.mrf.mxu0
    %v4613 = vpop.f32.mrf.mxu0
    %4614 = vdwg.mxu0
    %4615 = vmatprep.subr.bf16.mxu0 %v4411
    %4616 = vmatpush1.bf16.msra.mxu0 %v4410
    %4617 = vmatprep.subr.bf16.mxu0 %v4407
    %4618 = vmatpush1.bf16.msra.mxu0 %v4406
    %4619 = vmatprep.subr.bf16.mxu0 %v4403
    %4620 = vmatpush1.bf16.msra.mxu0 %v4402
    %4621 = vmatprep.subr.bf16.mxu0 %v4399
    %4622 = vmatpush1.bf16.msra.mxu0 %v4398
    %4623 = vmatprep.subr.bf16.mxu0 %v4395
    %4624 = vmatpush1.bf16.msra.mxu0 %v4394
    %4625 = vmatprep.subr.bf16.mxu0 %v4391
    %4626 = vmatpush1.bf16.msra.mxu0 %v4390
    %4627 = vmatprep.subr.bf16.mxu0 %v4387
    %4628 = vmatpush1.bf16.msra.mxu0 %v4386
    %4629 = vmatprep.subr.bf16.mxu0 %v4383
    %4630 = vmatpush1.bf16.msra.mxu0 %v4382
    %4631 = vmatprep.subr.bf16.mxu0 %v4443
    %4632 = vmatpush2.bf16.msra.mxu0 %v4442
    %4633 = vmatprep.subr.bf16.mxu0 %v4439
    %4634 = vmatpush2.bf16.msra.mxu0 %v4438
    %4635 = vmatprep.subr.bf16.mxu0 %v4435
    %4636 = vmatpush2.bf16.msra.mxu0 %v4434
    %4637 = vmatprep.subr.bf16.mxu0 %v4431
    %4638 = vmatpush2.bf16.msra.mxu0 %v4430
    %4639 = vmatprep.subr.bf16.mxu0 %v4427
    %4640 = vmatpush2.bf16.msra.mxu0 %v4426
    %4641 = vmatprep.subr.bf16.mxu0 %v4423
    %4642 = vmatpush2.bf16.msra.mxu0 %v4422
    %4643 = vmatprep.subr.bf16.mxu0 %v4419
    %4644 = vmatpush2.bf16.msra.mxu0 %v4418
    %4645 = vmatprep.subr.bf16.mxu0 %v4415
    %4646 = vmatpush2.bf16.msra.mxu0 %v4414
    %4647 = vmatprep.mubr.bf16.mxu0 %v3781
    %4648 = vmatmul.mubr.bf16.gmra.mxu0 %v3780
    %v4649 = vpop.f32.mrf.mxu0
    %v4650 = vadd.f32 %v4609, %v4649
    %v4651 = vpop.f32.mrf.mxu0
    %v4652 = vadd.f32 %v4611, %v4651
    %v4653 = vpop.f32.mrf.mxu0
    %v4654 = vpop.f32.mrf.mxu0
    %4655 = vdwg.mxu0
    %4656 = vmatprep.subr.bf16.mxu0 %v4349
    %4657 = vmatpush1.bf16.msra.mxu0 %v4348
    %4658 = vmatprep.subr.bf16.mxu0 %v4345
    %4659 = vmatpush1.bf16.msra.mxu0 %v4344
    %4660 = vmatprep.subr.bf16.mxu0 %v4341
    %4661 = vmatpush1.bf16.msra.mxu0 %v4340
    %4662 = vmatprep.subr.bf16.mxu0 %v4337
    %4663 = vmatpush1.bf16.msra.mxu0 %v4336
    %4664 = vmatprep.subr.bf16.mxu0 %v4333
    %4665 = vmatpush1.bf16.msra.mxu0 %v4332
    %4666 = vmatprep.subr.bf16.mxu0 %v4329
    %4667 = vmatpush1.bf16.msra.mxu0 %v4328
    %4668 = vmatprep.subr.bf16.mxu0 %v4325
    %4669 = vmatpush1.bf16.msra.mxu0 %v4324
    %4670 = vmatprep.subr.bf16.mxu0 %v4321
    %4671 = vmatpush1.bf16.msra.mxu0 %v4320
    %4672 = vmatprep.subr.bf16.mxu0 %v4381
    %4673 = vmatpush2.bf16.msra.mxu0 %v4380
    %4674 = vmatprep.subr.bf16.mxu0 %v4377
    %4675 = vmatpush2.bf16.msra.mxu0 %v4376
    %4676 = vmatprep.subr.bf16.mxu0 %v4373
    %4677 = vmatpush2.bf16.msra.mxu0 %v4372
    %4678 = vmatprep.subr.bf16.mxu0 %v4369
    %4679 = vmatpush2.bf16.msra.mxu0 %v4368
    %4680 = vmatprep.subr.bf16.mxu0 %v4365
    %4681 = vmatpush2.bf16.msra.mxu0 %v4364
    %4682 = vmatprep.subr.bf16.mxu0 %v4361
    %4683 = vmatpush2.bf16.msra.mxu0 %v4360
    %4684 = vmatprep.subr.bf16.mxu0 %v4357
    %4685 = vmatpush2.bf16.msra.mxu0 %v4356
    %4686 = vmatprep.subr.bf16.mxu0 %v4353
    %4687 = vmatpush2.bf16.msra.mxu0 %v4352
    %4688 = vmatprep.mubr.bf16.mxu0 %v3779
    %4689 = vmatmul.mubr.bf16.gmra.mxu0 %v3778
    %v4690 = vpop.f32.mrf.mxu0
    %v4691 = vadd.f32 %v3925, %v4690
    %v4692 = vpop.f32.mrf.mxu0
    %v4693 = vadd.f32 %v3929, %v4692
    %v4694 = vpop.f32.mrf.mxu0
    %v4695 = vpop.f32.mrf.mxu0
    %4696 = vdwg.mxu0
    %4697 = vmatprep.subr.bf16.mxu0 %v4413
    %4698 = vmatpush1.bf16.msra.mxu0 %v4412
    %4699 = vmatprep.subr.bf16.mxu0 %v4409
    %4700 = vmatpush1.bf16.msra.mxu0 %v4408
    %4701 = vmatprep.subr.bf16.mxu0 %v4405
    %4702 = vmatpush1.bf16.msra.mxu0 %v4404
    %4703 = vmatprep.subr.bf16.mxu0 %v4401
    %4704 = vmatpush1.bf16.msra.mxu0 %v4400
    %4705 = vmatprep.subr.bf16.mxu0 %v4397
    %4706 = vmatpush1.bf16.msra.mxu0 %v4396
    %4707 = vmatprep.subr.bf16.mxu0 %v4393
    %4708 = vmatpush1.bf16.msra.mxu0 %v4392
    %4709 = vmatprep.subr.bf16.mxu0 %v4389
    %4710 = vmatpush1.bf16.msra.mxu0 %v4388
    %4711 = vmatprep.subr.bf16.mxu0 %v4385
    %4712 = vmatpush1.bf16.msra.mxu0 %v4384
    %4713 = vmatprep.subr.bf16.mxu0 %v4445
    %4714 = vmatpush2.bf16.msra.mxu0 %v4444
    %4715 = vmatprep.subr.bf16.mxu0 %v4441
    %4716 = vmatpush2.bf16.msra.mxu0 %v4440
    %4717 = vmatprep.subr.bf16.mxu0 %v4437
    %4718 = vmatpush2.bf16.msra.mxu0 %v4436
    %4719 = vmatprep.subr.bf16.mxu0 %v4433
    %4720 = vmatpush2.bf16.msra.mxu0 %v4432
    %4721 = vmatprep.subr.bf16.mxu0 %v4429
    %4722 = vmatpush2.bf16.msra.mxu0 %v4428
    %4723 = vmatprep.subr.bf16.mxu0 %v4425
    %4724 = vmatpush2.bf16.msra.mxu0 %v4424
    %4725 = vmatprep.subr.bf16.mxu0 %v4421
    %4726 = vmatpush2.bf16.msra.mxu0 %v4420
    %4727 = vmatprep.subr.bf16.mxu0 %v4417
    %4728 = vmatpush2.bf16.msra.mxu0 %v4416
    %4729 = vmatprep.mubr.bf16.mxu0 %v3781
    %4730 = vmatmul.mubr.bf16.gmra.mxu0 %v3780
    %v4731 = vpop.f32.mrf.mxu0
    %v4732 = vadd.f32 %v4691, %v4731
    %v4733 = vpop.f32.mrf.mxu0
    %v4734 = vadd.f32 %v4693, %v4733
    %v4735 = vpop.f32.mrf.mxu0
    %v4736 = vpop.f32.mrf.mxu0
    %4737 = vdwg.mxu0
    %v4738 = vmax.f32 %v4650, 0.0
    %v4739 = vmax.f32 %v4652, 0.0
    %v4740 = vmax.f32 %v4732, 0.0
    %v4741 = vmax.f32 %v4734, 0.0
    %s4742 = scalar_lea.vmem [#allocation11], 12
    %v4743 = vld [vmem:[%s4742] sm:$0xf]
    %v4745 = vlaneseq
    %v4746 = vshrl.u32 %v4745, 7
    %v4747 = vsub.s32 0, %v4746
    %v4748 = vrot.slane %v4743, %v4747
    %v4749 = vlaneseq
    %v4750 = vshrl.u32 %v4749, 7
    %v4751 = vsub.s32 1, %v4750
    %v4752 = vrot.slane %v4743, %v4751
    %v4753 = vlaneseq
    %v4754 = vshrl.u32 %v4753, 7
    %v4755 = vsub.s32 2, %v4754
    %v4756 = vrot.slane %v4743, %v4755
    %v4757 = vlaneseq
    %v4758 = vshrl.u32 %v4757, 7
    %v4759 = vsub.s32 3, %v4758
    %v4760 = vrot.slane %v4743, %v4759
    %v4765 = vmul.f32 %v4738, %v4748
    %v4766 = vmul.f32 %v4739, %v4752
    %v4767 = vmul.f32 %v4740, %v4756
    %v4768 = vmul.f32 %v4741, %v4760
    %v4769 = vsel %vm1259, %v4765, 0.0
    %v4770 = vsel %vm1259, %v4766, 0.0
    %v4771 = vadd.f32 %v4769, %v4770
    %v4772 = vsel %vm1259, %v4767, 0.0
    %v4773 = vadd.f32 %v4771, %v4772
    %v4774 = vsel %vm1259, %v4768, 0.0
    %v4775 = vadd.f32 %v4773, %v4774
    %4776 = vadd.xlane.f32.xlu0 %v4775
    %v4777 = vpop.xlane.xlu0 %4776
    %s4778 = scalar_lea.vmem %s6, 3
    %v4779 = vld [vmem:[%s4778] sm:$0x1]
    %v4781 = vlaneseq
    %v4782 = vshrl.u32 %v4781, 7
    %v4783 = vsub.s32 0, %v4782
    %v4784 = vrot.slane %v4779, %v4783
    %v4786 = vadd.f32 %v4777, %v4784
    %v4787 = vmul.f32 %v4786, 0.01
    %v4788 = vtanh.pop %v4787
    %v4789 = vmul.f32 %v4788, 100.0
    %4791 = vrot.lane.b32.xlu0 %v2449, 1
    %v4792 = vpop.permute.xlu0 %4791
    %4795 = vrot.lane.b32.xlu0 %v3619, 2
    %v4796 = vpop.permute.xlu0 %4795
    %4799 = vrot.lane.b32.xlu0 %v4789, 3
    %v4800 = vpop.permute.xlu0 %4799
    %vm4802 = vcmask 7168
    %v4803 = vsel %vm4802, %v1279, %v4792
    %vm4804 = vcmask 15360
    %v4805 = vsel %vm4804, %v4803, %v4796
    %vm4806 = vcmask 23552
    %v4807 = vsel %vm4806, %v4805, %v4800
    %vm4808 = vcmask 25600
    %4809 = vst.msk [vmem:[#allocation13] sm:$0x3] %vm4808, %v4807
    // Predicated region
    $region54: #{tpu_custom_call.1} parent=1 // pred_check
      _
    $region55: #{tpu_custom_call.1} parent=1 // pred_check_branch
      %4811 = sbr.rel (0) target = $region57
    $region56: #{tpu_custom_call.1} parent=1 // pred_region
      %s4813 = ssub.s32 32, 32
      %4814 = vsyncadd [#allocation4], %s4813
      %s4816 = sshll.u32 [#allocation13], 4
      %s4817 = int_to_ptr.vmem [resolvable:$true] %s4816
      %4819 = dma.vmem_to_hbm [thread:$0]  %s4817, 32, %s7, [#allocation4]
    $region57: #{tpu_custom_call.1} parent=1 // pred_fallthru
      _
    // Predicated region
    $region58: #{tpu_custom_call.1} parent=1 // pred_check
      _
    $region59: #{tpu_custom_call.1} parent=1 // pred_check_branch
      %4821 = sbr.rel (0) target = $region61
    $region60: #{tpu_custom_call.1} parent=1 // pred_region
      %4822 = dma.done [#allocation4], 32
    $region61: #{tpu_custom_call.1} parent=1 // pred_fallthru
      _
    %4823 = vsyncpa [#allocation3], 1
    %4824 = vsyncpa [#allocation6], 1
    %4825 = vsyncpa [#allocation9], 1
    %4826 = vsyncpa [#allocation12], 1
    %4827 = vsyncpa [#allocation4], 1

</llo_original>
